<compile_context>
chip_gen: v6e
topology: v6e:2x2x1
jax: 0.10.0
libtpu: 0.0.40
codegen_flags: <defaults>
</compile_context>

<pallas_src>
import jax
import jax.numpy as jnp
from jax.experimental import pallas as pl
from jax.experimental.pallas import tpu as pltpu

SELU_ALPHA = 1.6732632423543772
SELU_SCALE = 1.0507009873554805

IN_FEATURES = 16 * 49   # 784
HID1 = 47
HID2 = 22
OUT = 10

_HIGHEST = jax.lax.Precision.HIGHEST


def _selu(x):
    # scale * (max(0, x) + min(0, alpha*(exp(x)-1))); exp(min(x,0)) avoids overflow.
    return SELU_SCALE * jnp.where(
        x > 0.0, x, SELU_ALPHA * (jnp.exp(jnp.minimum(x, 0.0)) - 1.0)
    )


# --------------------------------------------------------------------------
# Fused kernel: (folded conv+Linear) -> SELU -> Linear+bias -> SELU -> Linear
#               -> LogSoftmax, one batch tile per grid step.
# --------------------------------------------------------------------------
def _fused_kernel(x_ref, w1t_ref, w3t_ref, b3_ref, w5t_ref, o_ref):
    x = x_ref[...]                                                     # (TB, 784)
    z1 = jnp.dot(x, w1t_ref[...], precision=_HIGHEST,
                 preferred_element_type=jnp.float32)                   # (TB, 47)
    z1 = _selu(z1)
    z2 = jnp.dot(z1, w3t_ref[...], precision=_HIGHEST,
                 preferred_element_type=jnp.float32)                   # (TB, 22)
    z2 = _selu(z2 + b3_ref[...])
    z3 = jnp.dot(z2, w5t_ref[...], precision=_HIGHEST,
                 preferred_element_type=jnp.float32)                   # (TB, 10)
    z = z3 - jnp.max(z3, axis=1, keepdims=True)
    o_ref[...] = z - jnp.log(jnp.sum(jnp.exp(z), axis=1, keepdims=True))


def _round_up(n, m):
    return ((n + m - 1) // m) * m


def _pick_tb(batch):
    if batch < 64:
        # Tiny batch: one full-extent block (block dim == array dim is legal).
        return batch
    # >= 2 grid steps so the "parallel" batch axis can shard across v7x's two
    # TensorCores; cap at 4096 rows so double-buffered x (~25.7 MB) plus
    # intermediates stay well under v7x's 64 MiB physical VMEM.
    return min(4096, _round_up(-(-batch // 2), 8))


def fused_mlp(xf, w1t, w3t, b3, w5t, *, tb=None):
    B = xf.shape[0]
    if tb is None:
        tb = _pick_tb(B)
    grid = (pl.cdiv(B, tb),)

    # Scoped-VMEM budget: double-buffered x tile dominates; add headroom for
    # resident weights, output blocks and kernel temporaries.  Defaults
    # (tb <= 4096 -> 48 MiB) are v7x-safe; an explicit larger tb on v5e/v6e
    # scales the limit up (physical VMEM there is 128 MiB).
    x_block_bytes = 2 * tb * IN_FEATURES * 4
    vmem_bytes = min(max(48 << 20, x_block_bytes + (16 << 20)), 112 << 20)

    return pl.pallas_call(
        _fused_kernel,
        out_shape=jax.ShapeDtypeStruct((B, OUT), jnp.float32),
        grid=grid,
        in_specs=[
            pl.BlockSpec((tb, IN_FEATURES), lambda i: (i, 0)),      # x tile
            pl.BlockSpec((IN_FEATURES, HID1), lambda i: (0, 0)),    # W_eff^T (resident)
            pl.BlockSpec((HID1, HID2), lambda i: (0, 0)),           # W3^T   (resident)
            pl.BlockSpec((1, HID2), lambda i: (0, 0)),              # b3     (resident)
            pl.BlockSpec((HID2, OUT), lambda i: (0, 0)),            # W5^T   (resident)
        ],
        out_specs=pl.BlockSpec((tb, OUT), lambda i: (i, 0)),
        compiler_params=pltpu.CompilerParams(
            dimension_semantics=("parallel",),
            vmem_limit_bytes=vmem_bytes,
        ),
    )(xf, w1t, w3t, b3, w5t)


# --------------------------------------------------------------------------
# Offline fold: Linear(2928->47) . flatten . Conv1d(16->61, k=2)  ==  W_eff(47, 784)
# acting on x.view(B, 16, 49) flattened row-major (index c*49 + l).
# --------------------------------------------------------------------------
def fold_conv_into_linear(w0, w1):
    # w0: (61, 16, 2) Conv1d weight, w1: (47, 2928) Linear f1 weight.
    w1r = w1.reshape(HID1, 61, 48)                                        # (j, o, t)
    a0 = jnp.einsum("jot,oc->jct", w1r, w0[:, :, 0], precision=_HIGHEST)  # tap k=0 -> l = t
    a1 = jnp.einsum("jot,oc->jct", w1r, w0[:, :, 1], precision=_HIGHEST)  # tap k=1 -> l = t+1
    w_eff = (
        jnp.pad(a0, ((0, 0), (0, 0), (0, 1)))
        + jnp.pad(a1, ((0, 0), (0, 0), (1, 0)))
    )                                                                     # (47, 16, 49)
    return w_eff.reshape(HID1, IN_FEATURES)


def prepare_params(p):
    """One-time prep (outside jit): fold conv into f1 and pre-transpose weights."""
    w_eff = fold_conv_into_linear(p["w0"], p["w1"])
    return {
        "w1t": jnp.asarray(w_eff.T),          # (784, 47)
        "w3t": jnp.asarray(p["w3"].T),        # (47, 22)
        "b3": p["b3"].reshape(1, HID2),       # (1, 22)
        "w5t": jnp.asarray(p["w5"].T),        # (22, 10)
    }


def conv1dthenlinear_56_forward(x, prep, tb=None):
    B = x.shape[0]
    xf = x.reshape(B, IN_FEATURES)   # == x.view(B,16,49) flattened row-major (c*49 + l)
    return fused_mlp(xf, prep["w1t"], prep["w3t"], prep["b3"], prep["w5t"], tb=tb)


# --------------------------------------------------------------------------
# Deterministic parameter init (PyTorch-style uniform +/- 1/sqrt(fan_in))
# --------------------------------------------------------------------------
def init_params(key):
    ks = jax.random.split(key, 5)

    def u(k, shape, fan_in):
        bound = 1.0 / float(fan_in) ** 0.5
        return jax.random.uniform(k, shape, jnp.float32, -bound, bound)

    return {
        "w0": u(ks[0], (61, 16, 2), 16 * 2),   # Conv1d weight
        "w1": u(ks[1], (47, 2928), 2928),      # Linear f1 (no bias)
        "w3": u(ks[2], (22, 47), 47),          # Linear f3 weight
        "b3": u(ks[3], (22,), 47),             # Linear f3 bias
        "w5": u(ks[4], (10, 22), 22),          # Linear f5 (no bias)
    }


# --------------------------------------------------------------------------
# Pure-JAX reference (unfused, follows the PyTorch module op-by-op)
# --------------------------------------------------------------------------
def reference_forward(x, p):
    B = x.shape[0]
    xr = x.reshape(B, 16, 49)
    conv = jax.lax.conv_general_dilated(
        xr, p["w0"], window_strides=(1,), padding="VALID",
        dimension_numbers=("NCH", "OIH", "NCH"), precision=_HIGHEST)
    h = conv.reshape(B, 2928)
    z1 = jax.nn.selu(jnp.dot(h, p["w1"].T, precision=_HIGHEST))
    z2 = jax.nn.selu(jnp.dot(z1, p["w3"].T, precision=_HIGHEST) + p["b3"])
    z3 = jnp.dot(z2, p["w5"].T, precision=_HIGHEST)
    return jax.nn.log_softmax(z3, axis=1)


if __name__ == "__main__":
    key = jax.random.PRNGKey(0)
    kx, kp, kx2, kx3 = jax.random.split(key, 4)
    params = init_params(kp)
    prep = prepare_params(params)   # fold + transpose happens once, outside jit

    fwd = jax.jit(conv1dthenlinear_56_forward, static_argnames=("tb",))

    # MNIST-like input; forward requires 16*49 = 784 features per example.
    x = jax.random.normal(kx, (2, 1, 28, 28), jnp.float32)
    out = jax.block_until_ready(fwd(x, prep))
    ref = reference_forward(x, params)
    assert out.shape == (2, 10), out.shape
    assert jnp.allclose(out, ref, atol=1e-3, rtol=1e-3), (out, ref)

    # Ragged batch tiling check: B=13 with TB=8 -> last grid block is partial.
    x2 = jax.random.normal(kx2, (13, 1, 28, 28), jnp.float32)
    out2 = jax.block_until_ready(fwd(x2, prep, tb=8))
    ref2 = reference_forward(x2, params)
    assert out2.shape == (13, 10), out2.shape
    assert jnp.allclose(out2, ref2, atol=1e-3, rtol=1e-3), (out2, ref2)

    # Multi-step grid path (B >= 64 -> >=2 grid steps for v7x megacore).
    x3 = jax.random.normal(kx3, (96, 1, 28, 28), jnp.float32)
    out3 = jax.block_until_ready(fwd(x3, prep))
    ref3 = reference_forward(x3, params)
    assert out3.shape == (96, 10), out3.shape
    assert jnp.allclose(out3, ref3, atol=1e-3, rtol=1e-3), (out3, ref3)

    print("KERNEL_OK")
</pallas_src>

<mosaic_0001>
module attributes {stable_mosaic.version = 11 : i64} {
  func.func @_fused_kernel(%arg0: i32, %arg1: memref<2x784xf32, #tpu.memory_space<vmem>>, %arg2: memref<784x47xf32, #tpu.memory_space<vmem>>, %arg3: memref<47x22xf32, #tpu.memory_space<vmem>>, %arg4: memref<1x22xf32, #tpu.memory_space<vmem>>, %arg5: memref<22x10xf32, #tpu.memory_space<vmem>>, %arg6: memref<2x10xf32, #tpu.memory_space<vmem>>) attributes {dimension_semantics = [#tpu.dimension_semantics<parallel>], iteration_bounds = array<i64: 1>, scalar_prefetch = 0 : i64, scratch_operands = 0 : i64, tpu.core_type = #tpu.core_type<tc>, window_params = [{transform_indices = @transform_0, window_bounds = array<i64: 2, 784>}, {pipeline_mode = #tpu.pipeline_mode<synchronous>, transform_indices = @transform_1, window_bounds = array<i64: 784, 47>}, {pipeline_mode = #tpu.pipeline_mode<synchronous>, transform_indices = @transform_2, window_bounds = array<i64: 47, 22>}, {pipeline_mode = #tpu.pipeline_mode<synchronous>, transform_indices = @transform_3, window_bounds = array<i64: 1, 22>}, {pipeline_mode = #tpu.pipeline_mode<synchronous>, transform_indices = @transform_4, window_bounds = array<i64: 22, 10>}, {transform_indices = @transform_5, window_bounds = array<i64: 2, 10>}]} {
    %c0 = arith.constant 0 : index
    %c0_0 = arith.constant 0 : index
    %0 = vector.load %arg1[%c0, %c0_0] : memref<2x784xf32, #tpu.memory_space<vmem>>, vector<2x784xf32>
    %c0_1 = arith.constant 0 : index
    %c0_2 = arith.constant 0 : index
    %1 = vector.load %arg2[%c0_1, %c0_2] : memref<784x47xf32, #tpu.memory_space<vmem>>, vector<784x47xf32>
    %cst = arith.constant dense<0.000000e+00> : vector<2x47xf32>
    %2 = tpu.matmul %0, %1, %cst {dimension_numbers = #tpu.dot_dimension_numbers<[1], [0], [0], [1], [0, 0, 1, 1], [], []>, precision = #tpu.contract_precision<fp32>} : vector<2x784xf32>, vector<784x47xf32>, vector<2x47xf32> -> vector<2x47xf32>
    %cst_3 = arith.constant 0.000000e+00 : f32
    %3 = vector.broadcast %cst_3 : f32 to vector<2x47xf32>
    %4 = arith.cmpf ogt, %2, %3 : vector<2x47xf32>
    %cst_4 = arith.constant 0.000000e+00 : f32
    %5 = vector.broadcast %cst_4 : f32 to vector<2x47xf32>
    %6 = arith.minimumf %2, %5 : vector<2x47xf32>
    %7 = math.exp %6 : vector<2x47xf32>
    %cst_5 = arith.constant 1.000000e+00 : f32
    %8 = vector.broadcast %cst_5 : f32 to vector<2x47xf32>
    %9 = arith.subf %7, %8 : vector<2x47xf32>
    %cst_6 = arith.constant 1.67326319 : f32
    %10 = vector.broadcast %cst_6 : f32 to vector<2x47xf32>
    %11 = arith.mulf %10, %9 : vector<2x47xf32>
    %12 = arith.select %4, %2, %11 : vector<2x47xi1>, vector<2x47xf32>
    %cst_7 = arith.constant 1.05070102 : f32
    %13 = vector.broadcast %cst_7 : f32 to vector<2x47xf32>
    %14 = arith.mulf %13, %12 : vector<2x47xf32>
    %c0_8 = arith.constant 0 : index
    %c0_9 = arith.constant 0 : index
    %15 = vector.load %arg3[%c0_8, %c0_9] : memref<47x22xf32, #tpu.memory_space<vmem>>, vector<47x22xf32>
    %cst_10 = arith.constant dense<0.000000e+00> : vector<2x22xf32>
    %16 = tpu.matmul %14, %15, %cst_10 {dimension_numbers = #tpu.dot_dimension_numbers<[1], [0], [0], [1], [0, 0, 1, 1], [], []>, precision = #tpu.contract_precision<fp32>} : vector<2x47xf32>, vector<47x22xf32>, vector<2x22xf32> -> vector<2x22xf32>
    %c0_11 = arith.constant 0 : index
    %c0_12 = arith.constant 0 : index
    %17 = vector.load %arg4[%c0_11, %c0_12] : memref<1x22xf32, #tpu.memory_space<vmem>>, vector<1x22xf32>
    %18 = vector.broadcast %17 : vector<1x22xf32> to vector<2x22xf32>
    %19 = arith.addf %16, %18 : vector<2x22xf32>
    %cst_13 = arith.constant 0.000000e+00 : f32
    %20 = vector.broadcast %cst_13 : f32 to vector<2x22xf32>
    %21 = arith.cmpf ogt, %19, %20 : vector<2x22xf32>
    %cst_14 = arith.constant 0.000000e+00 : f32
    %22 = vector.broadcast %cst_14 : f32 to vector<2x22xf32>
    %23 = arith.minimumf %19, %22 : vector<2x22xf32>
    %24 = math.exp %23 : vector<2x22xf32>
    %cst_15 = arith.constant 1.000000e+00 : f32
    %25 = vector.broadcast %cst_15 : f32 to vector<2x22xf32>
    %26 = arith.subf %24, %25 : vector<2x22xf32>
    %cst_16 = arith.constant 1.67326319 : f32
    %27 = vector.broadcast %cst_16 : f32 to vector<2x22xf32>
    %28 = arith.mulf %27, %26 : vector<2x22xf32>
    %29 = arith.select %21, %19, %28 : vector<2x22xi1>, vector<2x22xf32>
    %cst_17 = arith.constant 1.05070102 : f32
    %30 = vector.broadcast %cst_17 : f32 to vector<2x22xf32>
    %31 = arith.mulf %30, %29 : vector<2x22xf32>
    %c0_18 = arith.constant 0 : index
    %c0_19 = arith.constant 0 : index
    %32 = vector.load %arg5[%c0_18, %c0_19] : memref<22x10xf32, #tpu.memory_space<vmem>>, vector<22x10xf32>
    %cst_20 = arith.constant dense<0.000000e+00> : vector<2x10xf32>
    %33 = tpu.matmul %31, %32, %cst_20 {dimension_numbers = #tpu.dot_dimension_numbers<[1], [0], [0], [1], [0, 0, 1, 1], [], []>, precision = #tpu.contract_precision<fp32>} : vector<2x22xf32>, vector<22x10xf32>, vector<2x10xf32> -> vector<2x10xf32>
    %cst_21 = arith.constant dense<0xFF800000> : vector<2xf32>
    %34 = vector.multi_reduction <maximumf>, %33, %cst_21 [1] : vector<2x10xf32> to vector<2xf32>
    %35 = vector.shape_cast %34 : vector<2xf32> to vector<2x1xf32>
    %36 = vector.broadcast %35 : vector<2x1xf32> to vector<2x10xf32>
    %37 = arith.subf %33, %36 : vector<2x10xf32>
    %38 = math.exp %37 : vector<2x10xf32>
    %cst_22 = arith.constant dense<0.000000e+00> : vector<2xf32>
    %39 = vector.multi_reduction <add>, %38, %cst_22 [1] : vector<2x10xf32> to vector<2xf32>
    %40 = vector.shape_cast %39 : vector<2xf32> to vector<2x1xf32>
    %41 = math.log %40 : vector<2x1xf32>
    %42 = vector.broadcast %41 : vector<2x1xf32> to vector<2x10xf32>
    %43 = arith.subf %37, %42 : vector<2x10xf32>
    %c0_23 = arith.constant 0 : index
    %c0_24 = arith.constant 0 : index
    %44 = vector.load %arg6[%c0_23, %c0_24] : memref<2x10xf32, #tpu.memory_space<vmem>>, vector<2x10xf32>
    tpu.vector_store %arg6[%c0_23, %c0_24], %43 {strides = array<i32>} : memref<2x10xf32, #tpu.memory_space<vmem>>, vector<2x10xf32>,
    return
  }
  func.func @transform_0(%arg0: i32) -> (i32, i32) {
    %c0_i32 = arith.constant 0 : i32
    %c0_i32_0 = arith.constant 0 : i32
    return %arg0, %c0_i32 : i32, i32
  }
  func.func @transform_1(%arg0: i32) -> (i32, i32) {
    %c0_i32 = arith.constant 0 : i32
    %c0_i32_0 = arith.constant 0 : i32
    %c0_i32_1 = arith.constant 0 : i32
    return %c0_i32, %c0_i32_0 : i32, i32
  }
  func.func @transform_2(%arg0: i32) -> (i32, i32) {
    %c0_i32 = arith.constant 0 : i32
    %c0_i32_0 = arith.constant 0 : i32
    %c0_i32_1 = arith.constant 0 : i32
    return %c0_i32, %c0_i32_0 : i32, i32
  }
  func.func @transform_3(%arg0: i32) -> (i32, i32) {
    %c0_i32 = arith.constant 0 : i32
    %c0_i32_0 = arith.constant 0 : i32
    %c0_i32_1 = arith.constant 0 : i32
    return %c0_i32, %c0_i32_0 : i32, i32
  }
  func.func @transform_4(%arg0: i32) -> (i32, i32) {
    %c0_i32 = arith.constant 0 : i32
    %c0_i32_0 = arith.constant 0 : i32
    %c0_i32_1 = arith.constant 0 : i32
    return %c0_i32, %c0_i32_0 : i32, i32
  }
  func.func @transform_5(%arg0: i32) -> (i32, i32) {
    %c0_i32 = arith.constant 0 : i32
    %c0_i32_0 = arith.constant 0 : i32
    return %arg0, %c0_i32 : i32, i32
  }
}

</mosaic_0001>

<llo_original>
// kernel: conv1dthenlinear_56_forward.1
$region0: #{conv1dthenlinear_56_forward.1}
  #allocation0 [shape = 'u32[]', space=smem, size = 0x4, offset = 0x4, fixed_abs, tag = 'smem constant byte address 0x4 - core index']
  #allocation1 [shape = 'u32[144,128]{1,0:T(1,128)}', space=vmem, size = 0x12000, scoped, tag = 'internal scratch']
  %s0 = inlined_call_operand.vmem [shape: f32[2,784], index: 0, kind: input, shape index: {}]
  %s1 = inlined_call_operand.vmem [shape: f32[784,47], index: 1, kind: input, shape index: {}]
  %s2 = inlined_call_operand.vmem [shape: f32[47,22], index: 2, kind: input, shape index: {}]
  %s3 = inlined_call_operand.vmem [shape: f32[1,22], index: 3, kind: input, shape index: {}]
  %s4 = inlined_call_operand.vmem [shape: f32[22,10], index: 4, kind: input, shape index: {}]
  %s5 = inlined_call_operand.hbm [shape: f32[2,10], index: 5, kind: output, shape index: {}]
  %s6 = sld [smem:[#allocation0]]
  $region30: #{conv1dthenlinear_56_forward.1} parent=0
    _
  %s8 = ssub.s32 1, %s6
  %s9 = scalar_select 0, %s8, %s6
  $region1: #{conv1dthenlinear_56_forward.1} parent=0
    #allocation2 [shape = 'u8[1024]{0}', space=vmem, size = 0x400, scoped, tag = 'output window, operand 0, single buffered']
    #allocation3 [shape = 's32[1]{0}', space=sflag, size = 0x4, scoped, tag = 'scoped memory for conv1dthenlinear_56_forward.1']
    %10 = vsyncpa [#allocation3], 0
    // Predicated region
    $region2: #{conv1dthenlinear_56_forward.1} parent=1 // pred_check
      _
    $region3: #{conv1dthenlinear_56_forward.1} parent=1 // pred_check_branch
      %12 = sbr.rel (0) target = $region5
    $region4: #{conv1dthenlinear_56_forward.1} parent=1 // pred_region
      _
    $region5: #{conv1dthenlinear_56_forward.1} parent=1 // pred_fallthru
      _
    // Predicated region
    $region6: #{conv1dthenlinear_56_forward.1} parent=1 // pred_check
      _
    $region7: #{conv1dthenlinear_56_forward.1} parent=1 // pred_check_branch
      %14 = sbr.rel (0) target = $region9
    $region8: #{conv1dthenlinear_56_forward.1} parent=1 // pred_region
      _
    $region9: #{conv1dthenlinear_56_forward.1} parent=1 // pred_fallthru
      _
    // Predicated region
    $region10: #{conv1dthenlinear_56_forward.1} parent=1 // pred_check
      _
    $region11: #{conv1dthenlinear_56_forward.1} parent=1 // pred_check_branch
      %16 = sbr.rel (0) target = $region13
    $region12: #{conv1dthenlinear_56_forward.1} parent=1 // pred_region
      _
    $region13: #{conv1dthenlinear_56_forward.1} parent=1 // pred_fallthru
      _
    // Predicated region
    $region14: #{conv1dthenlinear_56_forward.1} parent=1 // pred_check
      _
    $region15: #{conv1dthenlinear_56_forward.1} parent=1 // pred_check_branch
      %18 = sbr.rel (0) target = $region17
    $region16: #{conv1dthenlinear_56_forward.1} parent=1 // pred_region
      _
    $region17: #{conv1dthenlinear_56_forward.1} parent=1 // pred_fallthru
      _
    // Predicated region
    $region18: #{conv1dthenlinear_56_forward.1} parent=1 // pred_check
      _
    $region19: #{conv1dthenlinear_56_forward.1} parent=1 // pred_check_branch
      %20 = sbr.rel (0) target = $region21
    $region20: #{conv1dthenlinear_56_forward.1} parent=1 // pred_region
      _
    $region21: #{conv1dthenlinear_56_forward.1} parent=1 // pred_fallthru
      _
    %v21 = vld [vmem:[%s0] sm:$0xff]
    %v22 = vld [vmem:[%s0 + $0x8] sm:$0x3f]
    %v23 = vld [vmem:[%s1] sm:$0xff]
    %v24 = vld [vmem:[%s1 + $0x8] sm:$0xff]
    %v25 = vld [vmem:[%s1 + $0x10] sm:$0xff]
    %v26 = vld [vmem:[%s1 + $0x18] sm:$0xff]
    %v27 = vld [vmem:[%s1 + $0x20] sm:$0xff]
    %v28 = vld [vmem:[%s1 + $0x28] sm:$0xff]
    %v29 = vld [vmem:[%s1 + $0x30] sm:$0xff]
    %v30 = vld [vmem:[%s1 + $0x38] sm:$0xff]
    %v31 = vld [vmem:[%s1 + $0x40] sm:$0xff]
    %v32 = vld [vmem:[%s1 + $0x48] sm:$0xff]
    %v33 = vld [vmem:[%s1 + $0x50] sm:$0xff]
    %v34 = vld [vmem:[%s1 + $0x58] sm:$0xff]
    %v35 = vld [vmem:[%s1 + $0x60] sm:$0xff]
    %v36 = vld [vmem:[%s1 + $0x68] sm:$0xff]
    %v37 = vld [vmem:[%s1 + $0x70] sm:$0xff]
    %v38 = vld [vmem:[%s1 + $0x78] sm:$0xff]
    %v39 = vld [vmem:[%s1 + $0x80] sm:$0xff]
    %v40 = vld [vmem:[%s1 + $0x88] sm:$0xff]
    %v41 = vld [vmem:[%s1 + $0x90] sm:$0xff]
    %v42 = vld [vmem:[%s1 + $0x98] sm:$0xff]
    %v43 = vld [vmem:[%s1 + $0xa0] sm:$0xff]
    %v44 = vld [vmem:[%s1 + $0xa8] sm:$0xff]
    %v45 = vld [vmem:[%s1 + $0xb0] sm:$0xff]
    %v46 = vld [vmem:[%s1 + $0xb8] sm:$0xff]
    %v47 = vld [vmem:[%s1 + $0xc0] sm:$0xff]
    %v48 = vld [vmem:[%s1 + $0xc8] sm:$0xff]
    %v49 = vld [vmem:[%s1 + $0xd0] sm:$0xff]
    %v50 = vld [vmem:[%s1 + $0xd8] sm:$0xff]
    %v51 = vld [vmem:[%s1 + $0xe0] sm:$0xff]
    %v52 = vld [vmem:[%s1 + $0xe8] sm:$0xff]
    %v53 = vld [vmem:[%s1 + $0xf0] sm:$0xff]
    %v54 = vld [vmem:[%s1 + $0xf8] sm:$0xff]
    %v55 = vld [vmem:[%s1 + $0x100] sm:$0xff]
    %v56 = vld [vmem:[%s1 + $0x108] sm:$0xff]
    %v57 = vld [vmem:[%s1 + $0x110] sm:$0xff]
    %v58 = vld [vmem:[%s1 + $0x118] sm:$0xff]
    %v59 = vld [vmem:[%s1 + $0x120] sm:$0xff]
    %v60 = vld [vmem:[%s1 + $0x128] sm:$0xff]
    %v61 = vld [vmem:[%s1 + $0x130] sm:$0xff]
    %v62 = vld [vmem:[%s1 + $0x138] sm:$0xff]
    %v63 = vld [vmem:[%s1 + $0x140] sm:$0xff]
    %v64 = vld [vmem:[%s1 + $0x148] sm:$0xff]
    %v65 = vld [vmem:[%s1 + $0x150] sm:$0xff]
    %v66 = vld [vmem:[%s1 + $0x158] sm:$0xff]
    %v67 = vld [vmem:[%s1 + $0x160] sm:$0xff]
    %v68 = vld [vmem:[%s1 + $0x168] sm:$0xff]
    %v69 = vld [vmem:[%s1 + $0x170] sm:$0xff]
    %v70 = vld [vmem:[%s1 + $0x178] sm:$0xff]
    %v71 = vld [vmem:[%s1 + $0x180] sm:$0xff]
    %v72 = vld [vmem:[%s1 + $0x188] sm:$0xff]
    %v73 = vld [vmem:[%s1 + $0x190] sm:$0xff]
    %v74 = vld [vmem:[%s1 + $0x198] sm:$0xff]
    %v75 = vld [vmem:[%s1 + $0x1a0] sm:$0xff]
    %v76 = vld [vmem:[%s1 + $0x1a8] sm:$0xff]
    %v77 = vld [vmem:[%s1 + $0x1b0] sm:$0xff]
    %v78 = vld [vmem:[%s1 + $0x1b8] sm:$0xff]
    %v79 = vld [vmem:[%s1 + $0x1c0] sm:$0xff]
    %v80 = vld [vmem:[%s1 + $0x1c8] sm:$0xff]
    %v81 = vld [vmem:[%s1 + $0x1d0] sm:$0xff]
    %v82 = vld [vmem:[%s1 + $0x1d8] sm:$0xff]
    %v83 = vld [vmem:[%s1 + $0x1e0] sm:$0xff]
    %v84 = vld [vmem:[%s1 + $0x1e8] sm:$0xff]
    %v85 = vld [vmem:[%s1 + $0x1f0] sm:$0xff]
    %v86 = vld [vmem:[%s1 + $0x1f8] sm:$0xff]
    %v87 = vld [vmem:[%s1 + $0x200] sm:$0xff]
    %v88 = vld [vmem:[%s1 + $0x208] sm:$0xff]
    %v89 = vld [vmem:[%s1 + $0x210] sm:$0xff]
    %v90 = vld [vmem:[%s1 + $0x218] sm:$0xff]
    %v91 = vld [vmem:[%s1 + $0x220] sm:$0xff]
    %v92 = vld [vmem:[%s1 + $0x228] sm:$0xff]
    %v93 = vld [vmem:[%s1 + $0x230] sm:$0xff]
    %v94 = vld [vmem:[%s1 + $0x238] sm:$0xff]
    %v95 = vld [vmem:[%s1 + $0x240] sm:$0xff]
    %v96 = vld [vmem:[%s1 + $0x248] sm:$0xff]
    %v97 = vld [vmem:[%s1 + $0x250] sm:$0xff]
    %v98 = vld [vmem:[%s1 + $0x258] sm:$0xff]
    %v99 = vld [vmem:[%s1 + $0x260] sm:$0xff]
    %v100 = vld [vmem:[%s1 + $0x268] sm:$0xff]
    %v101 = vld [vmem:[%s1 + $0x270] sm:$0xff]
    %v102 = vld [vmem:[%s1 + $0x278] sm:$0xff]
    %v103 = vld [vmem:[%s1 + $0x280] sm:$0xff]
    %v104 = vld [vmem:[%s1 + $0x288] sm:$0xff]
    %v105 = vld [vmem:[%s1 + $0x290] sm:$0xff]
    %v106 = vld [vmem:[%s1 + $0x298] sm:$0xff]
    %v107 = vld [vmem:[%s1 + $0x2a0] sm:$0xff]
    %v108 = vld [vmem:[%s1 + $0x2a8] sm:$0xff]
    %v109 = vld [vmem:[%s1 + $0x2b0] sm:$0xff]
    %v110 = vld [vmem:[%s1 + $0x2b8] sm:$0xff]
    %v111 = vld [vmem:[%s1 + $0x2c0] sm:$0xff]
    %v112 = vld [vmem:[%s1 + $0x2c8] sm:$0xff]
    %v113 = vld [vmem:[%s1 + $0x2d0] sm:$0xff]
    %v114 = vld [vmem:[%s1 + $0x2d8] sm:$0xff]
    %v115 = vld [vmem:[%s1 + $0x2e0] sm:$0xff]
    %v116 = vld [vmem:[%s1 + $0x2e8] sm:$0xff]
    %v117 = vld [vmem:[%s1 + $0x2f0] sm:$0xff]
    %v118 = vld [vmem:[%s1 + $0x2f8] sm:$0xff]
    %v119 = vld [vmem:[%s1 + $0x300] sm:$0xff]
    %v120 = vld [vmem:[%s1 + $0x308] sm:$0xff]
    %v123 = vcombine.high %v21, %v21
    %v125 = vunpack.c.l.s4 1983009808
    %v126 = vunpack.c.0.s8 %v125
    %v127 = vlaneseq
    %v128 = vshrl.u32 %v127, 7
    %v129 = vsub.s32 %v126, %v128
    %v130 = vrot.slane %v21, %v129
    %v132 = vunpack.c.l.s4 1983009808
    %v133 = vunpack.c.0.s8 %v132
    %v134 = vlaneseq
    %v135 = vshrl.u32 %v134, 7
    %v136 = vsub.s32 %v133, %v135
    %v137 = vrot.slane %v123, %v136
    %v138 = vcombine.high %v130, %v130
    %v139 = vcombine.high %v137, %v137
    %v140 = vcombine.high %v22, %v22
    %v142 = vunpack.c.l.s4 1983009808
    %v143 = vunpack.c.0.s8 %v142
    %v144 = vlaneseq
    %v145 = vshrl.u32 %v144, 7
    %v146 = vsub.s32 %v143, %v145
    %v147 = vrot.slane %v22, %v146
    %v149 = vunpack.c.l.s4 1983009808
    %v150 = vunpack.c.0.s8 %v149
    %v151 = vlaneseq
    %v152 = vshrl.u32 %v151, 7
    %v153 = vsub.s32 %v150, %v152
    %v154 = vrot.slane %v140, %v153
    %v155 = vcombine.high %v147, %v147
    %vm162 = vcmask 130048
    %v163 = vsel %vm162, %v154, 0
    %165 = vmatprep.subr.mxu0 0.0
    %v166 = vand.u32 %v38, 4294901760
    %167 = vmatpush1.msra.mxu0 %v166
    %168 = vmatprep.subr.mxu0 0.0
    %v169 = vand.u32 %v37, 4294901760
    %170 = vmatpush1.msra.mxu0 %v169
    %171 = vmatprep.subr.mxu0 0.0
    %v172 = vand.u32 %v36, 4294901760
    %173 = vmatpush1.msra.mxu0 %v172
    %174 = vmatprep.subr.mxu0 0.0
    %v175 = vand.u32 %v35, 4294901760
    %176 = vmatpush1.msra.mxu0 %v175
    %177 = vmatprep.subr.mxu0 0.0
    %v178 = vand.u32 %v34, 4294901760
    %179 = vmatpush1.msra.mxu0 %v178
    %180 = vmatprep.subr.mxu0 0.0
    %v181 = vand.u32 %v33, 4294901760
    %182 = vmatpush1.msra.mxu0 %v181
    %183 = vmatprep.subr.mxu0 0.0
    %v184 = vand.u32 %v32, 4294901760
    %185 = vmatpush1.msra.mxu0 %v184
    %186 = vmatprep.subr.mxu0 0.0
    %v187 = vand.u32 %v31, 4294901760
    %188 = vmatpush1.msra.mxu0 %v187
    %189 = vmatprep.subr.mxu0 0.0
    %v190 = vand.u32 %v30, 4294901760
    %191 = vmatpush1.msra.mxu0 %v190
    %192 = vmatprep.subr.mxu0 0.0
    %v193 = vand.u32 %v29, 4294901760
    %194 = vmatpush1.msra.mxu0 %v193
    %195 = vmatprep.subr.mxu0 0.0
    %v196 = vand.u32 %v28, 4294901760
    %197 = vmatpush1.msra.mxu0 %v196
    %198 = vmatprep.subr.mxu0 0.0
    %v199 = vand.u32 %v27, 4294901760
    %200 = vmatpush1.msra.mxu0 %v199
    %201 = vmatprep.subr.mxu0 0.0
    %v202 = vand.u32 %v26, 4294901760
    %203 = vmatpush1.msra.mxu0 %v202
    %204 = vmatprep.subr.mxu0 0.0
    %v205 = vand.u32 %v25, 4294901760
    %206 = vmatpush1.msra.mxu0 %v205
    %207 = vmatprep.subr.mxu0 0.0
    %v208 = vand.u32 %v24, 4294901760
    %209 = vmatpush1.msra.mxu0 %v208
    %210 = vmatprep.subr.mxu0 0.0
    %v211 = vand.u32 %v23, 4294901760
    %212 = vmatpush1.msra.mxu0 %v211
    %213 = vmatprep.subr.mxu0 0.0
    %v214 = vand.u32 %v54, 4294901760
    %215 = vmatpush2.msra.mxu0 %v214
    %216 = vmatprep.subr.mxu0 0.0
    %v217 = vand.u32 %v53, 4294901760
    %218 = vmatpush2.msra.mxu0 %v217
    %219 = vmatprep.subr.mxu0 0.0
    %v220 = vand.u32 %v52, 4294901760
    %221 = vmatpush2.msra.mxu0 %v220
    %222 = vmatprep.subr.mxu0 0.0
    %v223 = vand.u32 %v51, 4294901760
    %224 = vmatpush2.msra.mxu0 %v223
    %225 = vmatprep.subr.mxu0 0.0
    %v226 = vand.u32 %v50, 4294901760
    %227 = vmatpush2.msra.mxu0 %v226
    %228 = vmatprep.subr.mxu0 0.0
    %v229 = vand.u32 %v49, 4294901760
    %230 = vmatpush2.msra.mxu0 %v229
    %231 = vmatprep.subr.mxu0 0.0
    %v232 = vand.u32 %v48, 4294901760
    %233 = vmatpush2.msra.mxu0 %v232
    %234 = vmatprep.subr.mxu0 0.0
    %v235 = vand.u32 %v47, 4294901760
    %236 = vmatpush2.msra.mxu0 %v235
    %237 = vmatprep.subr.mxu0 0.0
    %v238 = vand.u32 %v46, 4294901760
    %239 = vmatpush2.msra.mxu0 %v238
    %240 = vmatprep.subr.mxu0 0.0
    %v241 = vand.u32 %v45, 4294901760
    %242 = vmatpush2.msra.mxu0 %v241
    %243 = vmatprep.subr.mxu0 0.0
    %v244 = vand.u32 %v44, 4294901760
    %245 = vmatpush2.msra.mxu0 %v244
    %246 = vmatprep.subr.mxu0 0.0
    %v247 = vand.u32 %v43, 4294901760
    %248 = vmatpush2.msra.mxu0 %v247
    %249 = vmatprep.subr.mxu0 0.0
    %v250 = vand.u32 %v42, 4294901760
    %251 = vmatpush2.msra.mxu0 %v250
    %252 = vmatprep.subr.mxu0 0.0
    %v253 = vand.u32 %v41, 4294901760
    %254 = vmatpush2.msra.mxu0 %v253
    %255 = vmatprep.subr.mxu0 0.0
    %v256 = vand.u32 %v40, 4294901760
    %257 = vmatpush2.msra.mxu0 %v256
    %258 = vmatprep.subr.mxu0 0.0
    %v259 = vand.u32 %v39, 4294901760
    %260 = vmatpush2.msra.mxu0 %v259
    %v261 = vand.u32 %v138, 4294901760
    %v262 = vsub.f32 %v138, %v261
    %v263 = vand.u32 %v262, 4294901760
    %v264 = vsub.f32 %v262, %v263
    %v265 = vand.u32 %v264, 4294901760
    %266 = vmatprep.mubr.f32.mxu0 %v265
    %v267 = vand.u32 %v130, 4294901760
    %v268 = vsub.f32 %v130, %v267
    %v269 = vand.u32 %v268, 4294901760
    %v270 = vsub.f32 %v268, %v269
    %v271 = vand.u32 %v270, 4294901760
    %272 = vmatmul.mubr.f32.gmra.mxu0 %v271
    %v273 = vpop.f32.mrf.mxu0
    %v274 = vadd.f32 0.0, %v273
    %v275 = vpop.f32.mrf.mxu0
    %276 = vdwg.mxu0
    %277 = vmatprep.subr.mxu0 0.0
    %v278 = vand.u32 %v38, 4294901760
    %v279 = vsub.f32 %v38, %v278
    %v280 = vand.u32 %v279, 4294901760
    %v281 = vsub.f32 %v279, %v280
    %v282 = vand.u32 %v281, 4294901760
    %283 = vmatpush1.msra.mxu0 %v282
    %284 = vmatprep.subr.mxu0 0.0
    %v285 = vand.u32 %v37, 4294901760
    %v286 = vsub.f32 %v37, %v285
    %v287 = vand.u32 %v286, 4294901760
    %v288 = vsub.f32 %v286, %v287
    %v289 = vand.u32 %v288, 4294901760
    %290 = vmatpush1.msra.mxu0 %v289
    %291 = vmatprep.subr.mxu0 0.0
    %v292 = vand.u32 %v36, 4294901760
    %v293 = vsub.f32 %v36, %v292
    %v294 = vand.u32 %v293, 4294901760
    %v295 = vsub.f32 %v293, %v294
    %v296 = vand.u32 %v295, 4294901760
    %297 = vmatpush1.msra.mxu0 %v296
    %298 = vmatprep.subr.mxu0 0.0
    %v299 = vand.u32 %v35, 4294901760
    %v300 = vsub.f32 %v35, %v299
    %v301 = vand.u32 %v300, 4294901760
    %v302 = vsub.f32 %v300, %v301
    %v303 = vand.u32 %v302, 4294901760
    %304 = vmatpush1.msra.mxu0 %v303
    %305 = vmatprep.subr.mxu0 0.0
    %v306 = vand.u32 %v34, 4294901760
    %v307 = vsub.f32 %v34, %v306
    %v308 = vand.u32 %v307, 4294901760
    %v309 = vsub.f32 %v307, %v308
    %v310 = vand.u32 %v309, 4294901760
    %311 = vmatpush1.msra.mxu0 %v310
    %312 = vmatprep.subr.mxu0 0.0
    %v313 = vand.u32 %v33, 4294901760
    %v314 = vsub.f32 %v33, %v313
    %v315 = vand.u32 %v314, 4294901760
    %v316 = vsub.f32 %v314, %v315
    %v317 = vand.u32 %v316, 4294901760
    %318 = vmatpush1.msra.mxu0 %v317
    %319 = vmatprep.subr.mxu0 0.0
    %v320 = vand.u32 %v32, 4294901760
    %v321 = vsub.f32 %v32, %v320
    %v322 = vand.u32 %v321, 4294901760
    %v323 = vsub.f32 %v321, %v322
    %v324 = vand.u32 %v323, 4294901760
    %325 = vmatpush1.msra.mxu0 %v324
    %326 = vmatprep.subr.mxu0 0.0
    %v327 = vand.u32 %v31, 4294901760
    %v328 = vsub.f32 %v31, %v327
    %v329 = vand.u32 %v328, 4294901760
    %v330 = vsub.f32 %v328, %v329
    %v331 = vand.u32 %v330, 4294901760
    %332 = vmatpush1.msra.mxu0 %v331
    %333 = vmatprep.subr.mxu0 0.0
    %v334 = vand.u32 %v30, 4294901760
    %v335 = vsub.f32 %v30, %v334
    %v336 = vand.u32 %v335, 4294901760
    %v337 = vsub.f32 %v335, %v336
    %v338 = vand.u32 %v337, 4294901760
    %339 = vmatpush1.msra.mxu0 %v338
    %340 = vmatprep.subr.mxu0 0.0
    %v341 = vand.u32 %v29, 4294901760
    %v342 = vsub.f32 %v29, %v341
    %v343 = vand.u32 %v342, 4294901760
    %v344 = vsub.f32 %v342, %v343
    %v345 = vand.u32 %v344, 4294901760
    %346 = vmatpush1.msra.mxu0 %v345
    %347 = vmatprep.subr.mxu0 0.0
    %v348 = vand.u32 %v28, 4294901760
    %v349 = vsub.f32 %v28, %v348
    %v350 = vand.u32 %v349, 4294901760
    %v351 = vsub.f32 %v349, %v350
    %v352 = vand.u32 %v351, 4294901760
    %353 = vmatpush1.msra.mxu0 %v352
    %354 = vmatprep.subr.mxu0 0.0
    %v355 = vand.u32 %v27, 4294901760
    %v356 = vsub.f32 %v27, %v355
    %v357 = vand.u32 %v356, 4294901760
    %v358 = vsub.f32 %v356, %v357
    %v359 = vand.u32 %v358, 4294901760
    %360 = vmatpush1.msra.mxu0 %v359
    %361 = vmatprep.subr.mxu0 0.0
    %v362 = vand.u32 %v26, 4294901760
    %v363 = vsub.f32 %v26, %v362
    %v364 = vand.u32 %v363, 4294901760
    %v365 = vsub.f32 %v363, %v364
    %v366 = vand.u32 %v365, 4294901760
    %367 = vmatpush1.msra.mxu0 %v366
    %368 = vmatprep.subr.mxu0 0.0
    %v369 = vand.u32 %v25, 4294901760
    %v370 = vsub.f32 %v25, %v369
    %v371 = vand.u32 %v370, 4294901760
    %v372 = vsub.f32 %v370, %v371
    %v373 = vand.u32 %v372, 4294901760
    %374 = vmatpush1.msra.mxu0 %v373
    %375 = vmatprep.subr.mxu0 0.0
    %v376 = vand.u32 %v24, 4294901760
    %v377 = vsub.f32 %v24, %v376
    %v378 = vand.u32 %v377, 4294901760
    %v379 = vsub.f32 %v377, %v378
    %v380 = vand.u32 %v379, 4294901760
    %381 = vmatpush1.msra.mxu0 %v380
    %382 = vmatprep.subr.mxu0 0.0
    %v383 = vand.u32 %v23, 4294901760
    %v384 = vsub.f32 %v23, %v383
    %v385 = vand.u32 %v384, 4294901760
    %v386 = vsub.f32 %v384, %v385
    %v387 = vand.u32 %v386, 4294901760
    %388 = vmatpush1.msra.mxu0 %v387
    %389 = vmatprep.subr.mxu0 0.0
    %v390 = vand.u32 %v54, 4294901760
    %v391 = vsub.f32 %v54, %v390
    %v392 = vand.u32 %v391, 4294901760
    %v393 = vsub.f32 %v391, %v392
    %v394 = vand.u32 %v393, 4294901760
    %395 = vmatpush2.msra.mxu0 %v394
    %396 = vmatprep.subr.mxu0 0.0
    %v397 = vand.u32 %v53, 4294901760
    %v398 = vsub.f32 %v53, %v397
    %v399 = vand.u32 %v398, 4294901760
    %v400 = vsub.f32 %v398, %v399
    %v401 = vand.u32 %v400, 4294901760
    %402 = vmatpush2.msra.mxu0 %v401
    %403 = vmatprep.subr.mxu0 0.0
    %v404 = vand.u32 %v52, 4294901760
    %v405 = vsub.f32 %v52, %v404
    %v406 = vand.u32 %v405, 4294901760
    %v407 = vsub.f32 %v405, %v406
    %v408 = vand.u32 %v407, 4294901760
    %409 = vmatpush2.msra.mxu0 %v408
    %410 = vmatprep.subr.mxu0 0.0
    %v411 = vand.u32 %v51, 4294901760
    %v412 = vsub.f32 %v51, %v411
    %v413 = vand.u32 %v412, 4294901760
    %v414 = vsub.f32 %v412, %v413
    %v415 = vand.u32 %v414, 4294901760
    %416 = vmatpush2.msra.mxu0 %v415
    %417 = vmatprep.subr.mxu0 0.0
    %v418 = vand.u32 %v50, 4294901760
    %v419 = vsub.f32 %v50, %v418
    %v420 = vand.u32 %v419, 4294901760
    %v421 = vsub.f32 %v419, %v420
    %v422 = vand.u32 %v421, 4294901760
    %423 = vmatpush2.msra.mxu0 %v422
    %424 = vmatprep.subr.mxu0 0.0
    %v425 = vand.u32 %v49, 4294901760
    %v426 = vsub.f32 %v49, %v425
    %v427 = vand.u32 %v426, 4294901760
    %v428 = vsub.f32 %v426, %v427
    %v429 = vand.u32 %v428, 4294901760
    %430 = vmatpush2.msra.mxu0 %v429
    %431 = vmatprep.subr.mxu0 0.0
    %v432 = vand.u32 %v48, 4294901760
    %v433 = vsub.f32 %v48, %v432
    %v434 = vand.u32 %v433, 4294901760
    %v435 = vsub.f32 %v433, %v434
    %v436 = vand.u32 %v435, 4294901760
    %437 = vmatpush2.msra.mxu0 %v436
    %438 = vmatprep.subr.mxu0 0.0
    %v439 = vand.u32 %v47, 4294901760
    %v440 = vsub.f32 %v47, %v439
    %v441 = vand.u32 %v440, 4294901760
    %v442 = vsub.f32 %v440, %v441
    %v443 = vand.u32 %v442, 4294901760
    %444 = vmatpush2.msra.mxu0 %v443
    %445 = vmatprep.subr.mxu0 0.0
    %v446 = vand.u32 %v46, 4294901760
    %v447 = vsub.f32 %v46, %v446
    %v448 = vand.u32 %v447, 4294901760
    %v449 = vsub.f32 %v447, %v448
    %v450 = vand.u32 %v449, 4294901760
    %451 = vmatpush2.msra.mxu0 %v450
    %452 = vmatprep.subr.mxu0 0.0
    %v453 = vand.u32 %v45, 4294901760
    %v454 = vsub.f32 %v45, %v453
    %v455 = vand.u32 %v454, 4294901760
    %v456 = vsub.f32 %v454, %v455
    %v457 = vand.u32 %v456, 4294901760
    %458 = vmatpush2.msra.mxu0 %v457
    %459 = vmatprep.subr.mxu0 0.0
    %v460 = vand.u32 %v44, 4294901760
    %v461 = vsub.f32 %v44, %v460
    %v462 = vand.u32 %v461, 4294901760
    %v463 = vsub.f32 %v461, %v462
    %v464 = vand.u32 %v463, 4294901760
    %465 = vmatpush2.msra.mxu0 %v464
    %466 = vmatprep.subr.mxu0 0.0
    %v467 = vand.u32 %v43, 4294901760
    %v468 = vsub.f32 %v43, %v467
    %v469 = vand.u32 %v468, 4294901760
    %v470 = vsub.f32 %v468, %v469
    %v471 = vand.u32 %v470, 4294901760
    %472 = vmatpush2.msra.mxu0 %v471
    %473 = vmatprep.subr.mxu0 0.0
    %v474 = vand.u32 %v42, 4294901760
    %v475 = vsub.f32 %v42, %v474
    %v476 = vand.u32 %v475, 4294901760
    %v477 = vsub.f32 %v475, %v476
    %v478 = vand.u32 %v477, 4294901760
    %479 = vmatpush2.msra.mxu0 %v478
    %480 = vmatprep.subr.mxu0 0.0
    %v481 = vand.u32 %v41, 4294901760
    %v482 = vsub.f32 %v41, %v481
    %v483 = vand.u32 %v482, 4294901760
    %v484 = vsub.f32 %v482, %v483
    %v485 = vand.u32 %v484, 4294901760
    %486 = vmatpush2.msra.mxu0 %v485
    %487 = vmatprep.subr.mxu0 0.0
    %v488 = vand.u32 %v40, 4294901760
    %v489 = vsub.f32 %v40, %v488
    %v490 = vand.u32 %v489, 4294901760
    %v491 = vsub.f32 %v489, %v490
    %v492 = vand.u32 %v491, 4294901760
    %493 = vmatpush2.msra.mxu0 %v492
    %494 = vmatprep.subr.mxu0 0.0
    %v495 = vand.u32 %v39, 4294901760
    %v496 = vsub.f32 %v39, %v495
    %v497 = vand.u32 %v496, 4294901760
    %v498 = vsub.f32 %v496, %v497
    %v499 = vand.u32 %v498, 4294901760
    %500 = vmatpush2.msra.mxu0 %v499
    %v501 = vand.u32 %v138, 4294901760
    %502 = vmatprep.mubr.f32.mxu0 %v501
    %v503 = vand.u32 %v130, 4294901760
    %504 = vmatmul.mubr.f32.gmra.mxu0 %v503
    %v505 = vpop.f32.mrf.mxu0
    %v506 = vadd.f32 %v274, %v505
    %v507 = vpop.f32.mrf.mxu0
    %508 = vdwg.mxu0
    %509 = vmatprep.subr.mxu0 0.0
    %v510 = vand.u32 %v38, 4294901760
    %v511 = vsub.f32 %v38, %v510
    %512 = vmatpush1.msra.mxu0 %v511
    %513 = vmatprep.subr.mxu0 0.0
    %v514 = vand.u32 %v37, 4294901760
    %v515 = vsub.f32 %v37, %v514
    %516 = vmatpush1.msra.mxu0 %v515
    %517 = vmatprep.subr.mxu0 0.0
    %v518 = vand.u32 %v36, 4294901760
    %v519 = vsub.f32 %v36, %v518
    %520 = vmatpush1.msra.mxu0 %v519
    %521 = vmatprep.subr.mxu0 0.0
    %v522 = vand.u32 %v35, 4294901760
    %v523 = vsub.f32 %v35, %v522
    %524 = vmatpush1.msra.mxu0 %v523
    %525 = vmatprep.subr.mxu0 0.0
    %v526 = vand.u32 %v34, 4294901760
    %v527 = vsub.f32 %v34, %v526
    %528 = vmatpush1.msra.mxu0 %v527
    %529 = vmatprep.subr.mxu0 0.0
    %v530 = vand.u32 %v33, 4294901760
    %v531 = vsub.f32 %v33, %v530
    %532 = vmatpush1.msra.mxu0 %v531
    %533 = vmatprep.subr.mxu0 0.0
    %v534 = vand.u32 %v32, 4294901760
    %v535 = vsub.f32 %v32, %v534
    %536 = vmatpush1.msra.mxu0 %v535
    %537 = vmatprep.subr.mxu0 0.0
    %v538 = vand.u32 %v31, 4294901760
    %v539 = vsub.f32 %v31, %v538
    %540 = vmatpush1.msra.mxu0 %v539
    %541 = vmatprep.subr.mxu0 0.0
    %v542 = vand.u32 %v30, 4294901760
    %v543 = vsub.f32 %v30, %v542
    %544 = vmatpush1.msra.mxu0 %v543
    %545 = vmatprep.subr.mxu0 0.0
    %v546 = vand.u32 %v29, 4294901760
    %v547 = vsub.f32 %v29, %v546
    %548 = vmatpush1.msra.mxu0 %v547
    %549 = vmatprep.subr.mxu0 0.0
    %v550 = vand.u32 %v28, 4294901760
    %v551 = vsub.f32 %v28, %v550
    %552 = vmatpush1.msra.mxu0 %v551
    %553 = vmatprep.subr.mxu0 0.0
    %v554 = vand.u32 %v27, 4294901760
    %v555 = vsub.f32 %v27, %v554
    %556 = vmatpush1.msra.mxu0 %v555
    %557 = vmatprep.subr.mxu0 0.0
    %v558 = vand.u32 %v26, 4294901760
    %v559 = vsub.f32 %v26, %v558
    %560 = vmatpush1.msra.mxu0 %v559
    %561 = vmatprep.subr.mxu0 0.0
    %v562 = vand.u32 %v25, 4294901760
    %v563 = vsub.f32 %v25, %v562
    %564 = vmatpush1.msra.mxu0 %v563
    %565 = vmatprep.subr.mxu0 0.0
    %v566 = vand.u32 %v24, 4294901760
    %v567 = vsub.f32 %v24, %v566
    %568 = vmatpush1.msra.mxu0 %v567
    %569 = vmatprep.subr.mxu0 0.0
    %v570 = vand.u32 %v23, 4294901760
    %v571 = vsub.f32 %v23, %v570
    %572 = vmatpush1.msra.mxu0 %v571
    %573 = vmatprep.subr.mxu0 0.0
    %v574 = vand.u32 %v54, 4294901760
    %v575 = vsub.f32 %v54, %v574
    %576 = vmatpush2.msra.mxu0 %v575
    %577 = vmatprep.subr.mxu0 0.0
    %v578 = vand.u32 %v53, 4294901760
    %v579 = vsub.f32 %v53, %v578
    %580 = vmatpush2.msra.mxu0 %v579
    %581 = vmatprep.subr.mxu0 0.0
    %v582 = vand.u32 %v52, 4294901760
    %v583 = vsub.f32 %v52, %v582
    %584 = vmatpush2.msra.mxu0 %v583
    %585 = vmatprep.subr.mxu0 0.0
    %v586 = vand.u32 %v51, 4294901760
    %v587 = vsub.f32 %v51, %v586
    %588 = vmatpush2.msra.mxu0 %v587
    %589 = vmatprep.subr.mxu0 0.0
    %v590 = vand.u32 %v50, 4294901760
    %v591 = vsub.f32 %v50, %v590
    %592 = vmatpush2.msra.mxu0 %v591
    %593 = vmatprep.subr.mxu0 0.0
    %v594 = vand.u32 %v49, 4294901760
    %v595 = vsub.f32 %v49, %v594
    %596 = vmatpush2.msra.mxu0 %v595
    %597 = vmatprep.subr.mxu0 0.0
    %v598 = vand.u32 %v48, 4294901760
    %v599 = vsub.f32 %v48, %v598
    %600 = vmatpush2.msra.mxu0 %v599
    %601 = vmatprep.subr.mxu0 0.0
    %v602 = vand.u32 %v47, 4294901760
    %v603 = vsub.f32 %v47, %v602
    %604 = vmatpush2.msra.mxu0 %v603
    %605 = vmatprep.subr.mxu0 0.0
    %v606 = vand.u32 %v46, 4294901760
    %v607 = vsub.f32 %v46, %v606
    %608 = vmatpush2.msra.mxu0 %v607
    %609 = vmatprep.subr.mxu0 0.0
    %v610 = vand.u32 %v45, 4294901760
    %v611 = vsub.f32 %v45, %v610
    %612 = vmatpush2.msra.mxu0 %v611
    %613 = vmatprep.subr.mxu0 0.0
    %v614 = vand.u32 %v44, 4294901760
    %v615 = vsub.f32 %v44, %v614
    %616 = vmatpush2.msra.mxu0 %v615
    %617 = vmatprep.subr.mxu0 0.0
    %v618 = vand.u32 %v43, 4294901760
    %v619 = vsub.f32 %v43, %v618
    %620 = vmatpush2.msra.mxu0 %v619
    %621 = vmatprep.subr.mxu0 0.0
    %v622 = vand.u32 %v42, 4294901760
    %v623 = vsub.f32 %v42, %v622
    %624 = vmatpush2.msra.mxu0 %v623
    %625 = vmatprep.subr.mxu0 0.0
    %v626 = vand.u32 %v41, 4294901760
    %v627 = vsub.f32 %v41, %v626
    %628 = vmatpush2.msra.mxu0 %v627
    %629 = vmatprep.subr.mxu0 0.0
    %v630 = vand.u32 %v40, 4294901760
    %v631 = vsub.f32 %v40, %v630
    %632 = vmatpush2.msra.mxu0 %v631
    %633 = vmatprep.subr.mxu0 0.0
    %v634 = vand.u32 %v39, 4294901760
    %v635 = vsub.f32 %v39, %v634
    %636 = vmatpush2.msra.mxu0 %v635
    %v637 = vand.u32 %v138, 4294901760
    %v638 = vsub.f32 %v138, %v637
    %639 = vmatprep.mubr.f32.mxu0 %v638
    %v640 = vand.u32 %v130, 4294901760
    %v641 = vsub.f32 %v130, %v640
    %642 = vmatmul.mubr.f32.gmra.mxu0 %v641
    %v643 = vpop.f32.mrf.mxu0
    %v644 = vadd.f32 %v506, %v643
    %v645 = vpop.f32.mrf.mxu0
    %646 = vdwg.mxu0
    %647 = vmatprep.subr.mxu0 0.0
    %v648 = vand.u32 %v38, 4294901760
    %649 = vmatpush1.msra.mxu0 %v648
    %650 = vmatprep.subr.mxu0 0.0
    %v651 = vand.u32 %v37, 4294901760
    %652 = vmatpush1.msra.mxu0 %v651
    %653 = vmatprep.subr.mxu0 0.0
    %v654 = vand.u32 %v36, 4294901760
    %655 = vmatpush1.msra.mxu0 %v654
    %656 = vmatprep.subr.mxu0 0.0
    %v657 = vand.u32 %v35, 4294901760
    %658 = vmatpush1.msra.mxu0 %v657
    %659 = vmatprep.subr.mxu0 0.0
    %v660 = vand.u32 %v34, 4294901760
    %661 = vmatpush1.msra.mxu0 %v660
    %662 = vmatprep.subr.mxu0 0.0
    %v663 = vand.u32 %v33, 4294901760
    %664 = vmatpush1.msra.mxu0 %v663
    %665 = vmatprep.subr.mxu0 0.0
    %v666 = vand.u32 %v32, 4294901760
    %667 = vmatpush1.msra.mxu0 %v666
    %668 = vmatprep.subr.mxu0 0.0
    %v669 = vand.u32 %v31, 4294901760
    %670 = vmatpush1.msra.mxu0 %v669
    %671 = vmatprep.subr.mxu0 0.0
    %v672 = vand.u32 %v30, 4294901760
    %673 = vmatpush1.msra.mxu0 %v672
    %674 = vmatprep.subr.mxu0 0.0
    %v675 = vand.u32 %v29, 4294901760
    %676 = vmatpush1.msra.mxu0 %v675
    %677 = vmatprep.subr.mxu0 0.0
    %v678 = vand.u32 %v28, 4294901760
    %679 = vmatpush1.msra.mxu0 %v678
    %680 = vmatprep.subr.mxu0 0.0
    %v681 = vand.u32 %v27, 4294901760
    %682 = vmatpush1.msra.mxu0 %v681
    %683 = vmatprep.subr.mxu0 0.0
    %v684 = vand.u32 %v26, 4294901760
    %685 = vmatpush1.msra.mxu0 %v684
    %686 = vmatprep.subr.mxu0 0.0
    %v687 = vand.u32 %v25, 4294901760
    %688 = vmatpush1.msra.mxu0 %v687
    %689 = vmatprep.subr.mxu0 0.0
    %v690 = vand.u32 %v24, 4294901760
    %691 = vmatpush1.msra.mxu0 %v690
    %692 = vmatprep.subr.mxu0 0.0
    %v693 = vand.u32 %v23, 4294901760
    %694 = vmatpush1.msra.mxu0 %v693
    %695 = vmatprep.subr.mxu0 0.0
    %v696 = vand.u32 %v54, 4294901760
    %697 = vmatpush2.msra.mxu0 %v696
    %698 = vmatprep.subr.mxu0 0.0
    %v699 = vand.u32 %v53, 4294901760
    %700 = vmatpush2.msra.mxu0 %v699
    %701 = vmatprep.subr.mxu0 0.0
    %v702 = vand.u32 %v52, 4294901760
    %703 = vmatpush2.msra.mxu0 %v702
    %704 = vmatprep.subr.mxu0 0.0
    %v705 = vand.u32 %v51, 4294901760
    %706 = vmatpush2.msra.mxu0 %v705
    %707 = vmatprep.subr.mxu0 0.0
    %v708 = vand.u32 %v50, 4294901760
    %709 = vmatpush2.msra.mxu0 %v708
    %710 = vmatprep.subr.mxu0 0.0
    %v711 = vand.u32 %v49, 4294901760
    %712 = vmatpush2.msra.mxu0 %v711
    %713 = vmatprep.subr.mxu0 0.0
    %v714 = vand.u32 %v48, 4294901760
    %715 = vmatpush2.msra.mxu0 %v714
    %716 = vmatprep.subr.mxu0 0.0
    %v717 = vand.u32 %v47, 4294901760
    %718 = vmatpush2.msra.mxu0 %v717
    %719 = vmatprep.subr.mxu0 0.0
    %v720 = vand.u32 %v46, 4294901760
    %721 = vmatpush2.msra.mxu0 %v720
    %722 = vmatprep.subr.mxu0 0.0
    %v723 = vand.u32 %v45, 4294901760
    %724 = vmatpush2.msra.mxu0 %v723
    %725 = vmatprep.subr.mxu0 0.0
    %v726 = vand.u32 %v44, 4294901760
    %727 = vmatpush2.msra.mxu0 %v726
    %728 = vmatprep.subr.mxu0 0.0
    %v729 = vand.u32 %v43, 4294901760
    %730 = vmatpush2.msra.mxu0 %v729
    %731 = vmatprep.subr.mxu0 0.0
    %v732 = vand.u32 %v42, 4294901760
    %733 = vmatpush2.msra.mxu0 %v732
    %734 = vmatprep.subr.mxu0 0.0
    %v735 = vand.u32 %v41, 4294901760
    %736 = vmatpush2.msra.mxu0 %v735
    %737 = vmatprep.subr.mxu0 0.0
    %v738 = vand.u32 %v40, 4294901760
    %739 = vmatpush2.msra.mxu0 %v738
    %740 = vmatprep.subr.mxu0 0.0
    %v741 = vand.u32 %v39, 4294901760
    %742 = vmatpush2.msra.mxu0 %v741
    %v743 = vand.u32 %v138, 4294901760
    %v744 = vsub.f32 %v138, %v743
    %v745 = vand.u32 %v744, 4294901760
    %746 = vmatprep.mubr.f32.mxu0 %v745
    %v747 = vand.u32 %v130, 4294901760
    %v748 = vsub.f32 %v130, %v747
    %v749 = vand.u32 %v748, 4294901760
    %750 = vmatmul.mubr.f32.gmra.mxu0 %v749
    %v751 = vpop.f32.mrf.mxu0
    %v752 = vadd.f32 %v644, %v751
    %v753 = vpop.f32.mrf.mxu0
    %754 = vdwg.mxu0
    %755 = vmatprep.subr.mxu0 0.0
    %v756 = vand.u32 %v38, 4294901760
    %v757 = vsub.f32 %v38, %v756
    %v758 = vand.u32 %v757, 4294901760
    %759 = vmatpush1.msra.mxu0 %v758
    %760 = vmatprep.subr.mxu0 0.0
    %v761 = vand.u32 %v37, 4294901760
    %v762 = vsub.f32 %v37, %v761
    %v763 = vand.u32 %v762, 4294901760
    %764 = vmatpush1.msra.mxu0 %v763
    %765 = vmatprep.subr.mxu0 0.0
    %v766 = vand.u32 %v36, 4294901760
    %v767 = vsub.f32 %v36, %v766
    %v768 = vand.u32 %v767, 4294901760
    %769 = vmatpush1.msra.mxu0 %v768
    %770 = vmatprep.subr.mxu0 0.0
    %v771 = vand.u32 %v35, 4294901760
    %v772 = vsub.f32 %v35, %v771
    %v773 = vand.u32 %v772, 4294901760
    %774 = vmatpush1.msra.mxu0 %v773
    %775 = vmatprep.subr.mxu0 0.0
    %v776 = vand.u32 %v34, 4294901760
    %v777 = vsub.f32 %v34, %v776
    %v778 = vand.u32 %v777, 4294901760
    %779 = vmatpush1.msra.mxu0 %v778
    %780 = vmatprep.subr.mxu0 0.0
    %v781 = vand.u32 %v33, 4294901760
    %v782 = vsub.f32 %v33, %v781
    %v783 = vand.u32 %v782, 4294901760
    %784 = vmatpush1.msra.mxu0 %v783
    %785 = vmatprep.subr.mxu0 0.0
    %v786 = vand.u32 %v32, 4294901760
    %v787 = vsub.f32 %v32, %v786
    %v788 = vand.u32 %v787, 4294901760
    %789 = vmatpush1.msra.mxu0 %v788
    %790 = vmatprep.subr.mxu0 0.0
    %v791 = vand.u32 %v31, 4294901760
    %v792 = vsub.f32 %v31, %v791
    %v793 = vand.u32 %v792, 4294901760
    %794 = vmatpush1.msra.mxu0 %v793
    %795 = vmatprep.subr.mxu0 0.0
    %v796 = vand.u32 %v30, 4294901760
    %v797 = vsub.f32 %v30, %v796
    %v798 = vand.u32 %v797, 4294901760
    %799 = vmatpush1.msra.mxu0 %v798
    %800 = vmatprep.subr.mxu0 0.0
    %v801 = vand.u32 %v29, 4294901760
    %v802 = vsub.f32 %v29, %v801
    %v803 = vand.u32 %v802, 4294901760
    %804 = vmatpush1.msra.mxu0 %v803
    %805 = vmatprep.subr.mxu0 0.0
    %v806 = vand.u32 %v28, 4294901760
    %v807 = vsub.f32 %v28, %v806
    %v808 = vand.u32 %v807, 4294901760
    %809 = vmatpush1.msra.mxu0 %v808
    %810 = vmatprep.subr.mxu0 0.0
    %v811 = vand.u32 %v27, 4294901760
    %v812 = vsub.f32 %v27, %v811
    %v813 = vand.u32 %v812, 4294901760
    %814 = vmatpush1.msra.mxu0 %v813
    %815 = vmatprep.subr.mxu0 0.0
    %v816 = vand.u32 %v26, 4294901760
    %v817 = vsub.f32 %v26, %v816
    %v818 = vand.u32 %v817, 4294901760
    %819 = vmatpush1.msra.mxu0 %v818
    %820 = vmatprep.subr.mxu0 0.0
    %v821 = vand.u32 %v25, 4294901760
    %v822 = vsub.f32 %v25, %v821
    %v823 = vand.u32 %v822, 4294901760
    %824 = vmatpush1.msra.mxu0 %v823
    %825 = vmatprep.subr.mxu0 0.0
    %v826 = vand.u32 %v24, 4294901760
    %v827 = vsub.f32 %v24, %v826
    %v828 = vand.u32 %v827, 4294901760
    %829 = vmatpush1.msra.mxu0 %v828
    %830 = vmatprep.subr.mxu0 0.0
    %v831 = vand.u32 %v23, 4294901760
    %v832 = vsub.f32 %v23, %v831
    %v833 = vand.u32 %v832, 4294901760
    %834 = vmatpush1.msra.mxu0 %v833
    %835 = vmatprep.subr.mxu0 0.0
    %v836 = vand.u32 %v54, 4294901760
    %v837 = vsub.f32 %v54, %v836
    %v838 = vand.u32 %v837, 4294901760
    %839 = vmatpush2.msra.mxu0 %v838
    %840 = vmatprep.subr.mxu0 0.0
    %v841 = vand.u32 %v53, 4294901760
    %v842 = vsub.f32 %v53, %v841
    %v843 = vand.u32 %v842, 4294901760
    %844 = vmatpush2.msra.mxu0 %v843
    %845 = vmatprep.subr.mxu0 0.0
    %v846 = vand.u32 %v52, 4294901760
    %v847 = vsub.f32 %v52, %v846
    %v848 = vand.u32 %v847, 4294901760
    %849 = vmatpush2.msra.mxu0 %v848
    %850 = vmatprep.subr.mxu0 0.0
    %v851 = vand.u32 %v51, 4294901760
    %v852 = vsub.f32 %v51, %v851
    %v853 = vand.u32 %v852, 4294901760
    %854 = vmatpush2.msra.mxu0 %v853
    %855 = vmatprep.subr.mxu0 0.0
    %v856 = vand.u32 %v50, 4294901760
    %v857 = vsub.f32 %v50, %v856
    %v858 = vand.u32 %v857, 4294901760
    %859 = vmatpush2.msra.mxu0 %v858
    %860 = vmatprep.subr.mxu0 0.0
    %v861 = vand.u32 %v49, 4294901760
    %v862 = vsub.f32 %v49, %v861
    %v863 = vand.u32 %v862, 4294901760
    %864 = vmatpush2.msra.mxu0 %v863
    %865 = vmatprep.subr.mxu0 0.0
    %v866 = vand.u32 %v48, 4294901760
    %v867 = vsub.f32 %v48, %v866
    %v868 = vand.u32 %v867, 4294901760
    %869 = vmatpush2.msra.mxu0 %v868
    %870 = vmatprep.subr.mxu0 0.0
    %v871 = vand.u32 %v47, 4294901760
    %v872 = vsub.f32 %v47, %v871
    %v873 = vand.u32 %v872, 4294901760
    %874 = vmatpush2.msra.mxu0 %v873
    %875 = vmatprep.subr.mxu0 0.0
    %v876 = vand.u32 %v46, 4294901760
    %v877 = vsub.f32 %v46, %v876
    %v878 = vand.u32 %v877, 4294901760
    %879 = vmatpush2.msra.mxu0 %v878
    %880 = vmatprep.subr.mxu0 0.0
    %v881 = vand.u32 %v45, 4294901760
    %v882 = vsub.f32 %v45, %v881
    %v883 = vand.u32 %v882, 4294901760
    %884 = vmatpush2.msra.mxu0 %v883
    %885 = vmatprep.subr.mxu0 0.0
    %v886 = vand.u32 %v44, 4294901760
    %v887 = vsub.f32 %v44, %v886
    %v888 = vand.u32 %v887, 4294901760
    %889 = vmatpush2.msra.mxu0 %v888
    %890 = vmatprep.subr.mxu0 0.0
    %v891 = vand.u32 %v43, 4294901760
    %v892 = vsub.f32 %v43, %v891
    %v893 = vand.u32 %v892, 4294901760
    %894 = vmatpush2.msra.mxu0 %v893
    %895 = vmatprep.subr.mxu0 0.0
    %v896 = vand.u32 %v42, 4294901760
    %v897 = vsub.f32 %v42, %v896
    %v898 = vand.u32 %v897, 4294901760
    %899 = vmatpush2.msra.mxu0 %v898
    %900 = vmatprep.subr.mxu0 0.0
    %v901 = vand.u32 %v41, 4294901760
    %v902 = vsub.f32 %v41, %v901
    %v903 = vand.u32 %v902, 4294901760
    %904 = vmatpush2.msra.mxu0 %v903
    %905 = vmatprep.subr.mxu0 0.0
    %v906 = vand.u32 %v40, 4294901760
    %v907 = vsub.f32 %v40, %v906
    %v908 = vand.u32 %v907, 4294901760
    %909 = vmatpush2.msra.mxu0 %v908
    %910 = vmatprep.subr.mxu0 0.0
    %v911 = vand.u32 %v39, 4294901760
    %v912 = vsub.f32 %v39, %v911
    %v913 = vand.u32 %v912, 4294901760
    %914 = vmatpush2.msra.mxu0 %v913
    %v915 = vand.u32 %v138, 4294901760
    %916 = vmatprep.mubr.f32.mxu0 %v915
    %v917 = vand.u32 %v130, 4294901760
    %918 = vmatmul.mubr.f32.gmra.mxu0 %v917
    %v919 = vpop.f32.mrf.mxu0
    %v920 = vadd.f32 %v752, %v919
    %v921 = vpop.f32.mrf.mxu0
    %922 = vdwg.mxu0
    %923 = vmatprep.subr.mxu0 0.0
    %v924 = vand.u32 %v38, 4294901760
    %925 = vmatpush1.msra.mxu0 %v924
    %926 = vmatprep.subr.mxu0 0.0
    %v927 = vand.u32 %v37, 4294901760
    %928 = vmatpush1.msra.mxu0 %v927
    %929 = vmatprep.subr.mxu0 0.0
    %v930 = vand.u32 %v36, 4294901760
    %931 = vmatpush1.msra.mxu0 %v930
    %932 = vmatprep.subr.mxu0 0.0
    %v933 = vand.u32 %v35, 4294901760
    %934 = vmatpush1.msra.mxu0 %v933
    %935 = vmatprep.subr.mxu0 0.0
    %v936 = vand.u32 %v34, 4294901760
    %937 = vmatpush1.msra.mxu0 %v936
    %938 = vmatprep.subr.mxu0 0.0
    %v939 = vand.u32 %v33, 4294901760
    %940 = vmatpush1.msra.mxu0 %v939
    %941 = vmatprep.subr.mxu0 0.0
    %v942 = vand.u32 %v32, 4294901760
    %943 = vmatpush1.msra.mxu0 %v942
    %944 = vmatprep.subr.mxu0 0.0
    %v945 = vand.u32 %v31, 4294901760
    %946 = vmatpush1.msra.mxu0 %v945
    %947 = vmatprep.subr.mxu0 0.0
    %v948 = vand.u32 %v30, 4294901760
    %949 = vmatpush1.msra.mxu0 %v948
    %950 = vmatprep.subr.mxu0 0.0
    %v951 = vand.u32 %v29, 4294901760
    %952 = vmatpush1.msra.mxu0 %v951
    %953 = vmatprep.subr.mxu0 0.0
    %v954 = vand.u32 %v28, 4294901760
    %955 = vmatpush1.msra.mxu0 %v954
    %956 = vmatprep.subr.mxu0 0.0
    %v957 = vand.u32 %v27, 4294901760
    %958 = vmatpush1.msra.mxu0 %v957
    %959 = vmatprep.subr.mxu0 0.0
    %v960 = vand.u32 %v26, 4294901760
    %961 = vmatpush1.msra.mxu0 %v960
    %962 = vmatprep.subr.mxu0 0.0
    %v963 = vand.u32 %v25, 4294901760
    %964 = vmatpush1.msra.mxu0 %v963
    %965 = vmatprep.subr.mxu0 0.0
    %v966 = vand.u32 %v24, 4294901760
    %967 = vmatpush1.msra.mxu0 %v966
    %968 = vmatprep.subr.mxu0 0.0
    %v969 = vand.u32 %v23, 4294901760
    %970 = vmatpush1.msra.mxu0 %v969
    %971 = vmatprep.subr.mxu0 0.0
    %v972 = vand.u32 %v54, 4294901760
    %973 = vmatpush2.msra.mxu0 %v972
    %974 = vmatprep.subr.mxu0 0.0
    %v975 = vand.u32 %v53, 4294901760
    %976 = vmatpush2.msra.mxu0 %v975
    %977 = vmatprep.subr.mxu0 0.0
    %v978 = vand.u32 %v52, 4294901760
    %979 = vmatpush2.msra.mxu0 %v978
    %980 = vmatprep.subr.mxu0 0.0
    %v981 = vand.u32 %v51, 4294901760
    %982 = vmatpush2.msra.mxu0 %v981
    %983 = vmatprep.subr.mxu0 0.0
    %v984 = vand.u32 %v50, 4294901760
    %985 = vmatpush2.msra.mxu0 %v984
    %986 = vmatprep.subr.mxu0 0.0
    %v987 = vand.u32 %v49, 4294901760
    %988 = vmatpush2.msra.mxu0 %v987
    %989 = vmatprep.subr.mxu0 0.0
    %v990 = vand.u32 %v48, 4294901760
    %991 = vmatpush2.msra.mxu0 %v990
    %992 = vmatprep.subr.mxu0 0.0
    %v993 = vand.u32 %v47, 4294901760
    %994 = vmatpush2.msra.mxu0 %v993
    %995 = vmatprep.subr.mxu0 0.0
    %v996 = vand.u32 %v46, 4294901760
    %997 = vmatpush2.msra.mxu0 %v996
    %998 = vmatprep.subr.mxu0 0.0
    %v999 = vand.u32 %v45, 4294901760
    %1000 = vmatpush2.msra.mxu0 %v999
    %1001 = vmatprep.subr.mxu0 0.0
    %v1002 = vand.u32 %v44, 4294901760
    %1003 = vmatpush2.msra.mxu0 %v1002
    %1004 = vmatprep.subr.mxu0 0.0
    %v1005 = vand.u32 %v43, 4294901760
    %1006 = vmatpush2.msra.mxu0 %v1005
    %1007 = vmatprep.subr.mxu0 0.0
    %v1008 = vand.u32 %v42, 4294901760
    %1009 = vmatpush2.msra.mxu0 %v1008
    %1010 = vmatprep.subr.mxu0 0.0
    %v1011 = vand.u32 %v41, 4294901760
    %1012 = vmatpush2.msra.mxu0 %v1011
    %1013 = vmatprep.subr.mxu0 0.0
    %v1014 = vand.u32 %v40, 4294901760
    %1015 = vmatpush2.msra.mxu0 %v1014
    %1016 = vmatprep.subr.mxu0 0.0
    %v1017 = vand.u32 %v39, 4294901760
    %1018 = vmatpush2.msra.mxu0 %v1017
    %v1019 = vand.u32 %v138, 4294901760
    %1020 = vmatprep.mubr.f32.mxu0 %v1019
    %v1021 = vand.u32 %v130, 4294901760
    %1022 = vmatmul.mubr.f32.gmra.mxu0 %v1021
    %v1023 = vpop.f32.mrf.mxu0
    %v1024 = vadd.f32 %v920, %v1023
    %v1025 = vpop.f32.mrf.mxu0
    %1026 = vdwg.mxu0
    %1027 = vmatprep.subr.mxu0 0.0
    %v1028 = vand.u32 %v70, 4294901760
    %1029 = vmatpush1.msra.mxu0 %v1028
    %1030 = vmatprep.subr.mxu0 0.0
    %v1031 = vand.u32 %v69, 4294901760
    %1032 = vmatpush1.msra.mxu0 %v1031
    %1033 = vmatprep.subr.mxu0 0.0
    %v1034 = vand.u32 %v68, 4294901760
    %1035 = vmatpush1.msra.mxu0 %v1034
    %1036 = vmatprep.subr.mxu0 0.0
    %v1037 = vand.u32 %v67, 4294901760
    %1038 = vmatpush1.msra.mxu0 %v1037
    %1039 = vmatprep.subr.mxu0 0.0
    %v1040 = vand.u32 %v66, 4294901760
    %1041 = vmatpush1.msra.mxu0 %v1040
    %1042 = vmatprep.subr.mxu0 0.0
    %v1043 = vand.u32 %v65, 4294901760
    %1044 = vmatpush1.msra.mxu0 %v1043
    %1045 = vmatprep.subr.mxu0 0.0
    %v1046 = vand.u32 %v64, 4294901760
    %1047 = vmatpush1.msra.mxu0 %v1046
    %1048 = vmatprep.subr.mxu0 0.0
    %v1049 = vand.u32 %v63, 4294901760
    %1050 = vmatpush1.msra.mxu0 %v1049
    %1051 = vmatprep.subr.mxu0 0.0
    %v1052 = vand.u32 %v62, 4294901760
    %1053 = vmatpush1.msra.mxu0 %v1052
    %1054 = vmatprep.subr.mxu0 0.0
    %v1055 = vand.u32 %v61, 4294901760
    %1056 = vmatpush1.msra.mxu0 %v1055
    %1057 = vmatprep.subr.mxu0 0.0
    %v1058 = vand.u32 %v60, 4294901760
    %1059 = vmatpush1.msra.mxu0 %v1058
    %1060 = vmatprep.subr.mxu0 0.0
    %v1061 = vand.u32 %v59, 4294901760
    %1062 = vmatpush1.msra.mxu0 %v1061
    %1063 = vmatprep.subr.mxu0 0.0
    %v1064 = vand.u32 %v58, 4294901760
    %1065 = vmatpush1.msra.mxu0 %v1064
    %1066 = vmatprep.subr.mxu0 0.0
    %v1067 = vand.u32 %v57, 4294901760
    %1068 = vmatpush1.msra.mxu0 %v1067
    %1069 = vmatprep.subr.mxu0 0.0
    %v1070 = vand.u32 %v56, 4294901760
    %1071 = vmatpush1.msra.mxu0 %v1070
    %1072 = vmatprep.subr.mxu0 0.0
    %v1073 = vand.u32 %v55, 4294901760
    %1074 = vmatpush1.msra.mxu0 %v1073
    %1075 = vmatprep.subr.mxu0 0.0
    %v1076 = vand.u32 %v86, 4294901760
    %1077 = vmatpush2.msra.mxu0 %v1076
    %1078 = vmatprep.subr.mxu0 0.0
    %v1079 = vand.u32 %v85, 4294901760
    %1080 = vmatpush2.msra.mxu0 %v1079
    %1081 = vmatprep.subr.mxu0 0.0
    %v1082 = vand.u32 %v84, 4294901760
    %1083 = vmatpush2.msra.mxu0 %v1082
    %1084 = vmatprep.subr.mxu0 0.0
    %v1085 = vand.u32 %v83, 4294901760
    %1086 = vmatpush2.msra.mxu0 %v1085
    %1087 = vmatprep.subr.mxu0 0.0
    %v1088 = vand.u32 %v82, 4294901760
    %1089 = vmatpush2.msra.mxu0 %v1088
    %1090 = vmatprep.subr.mxu0 0.0
    %v1091 = vand.u32 %v81, 4294901760
    %1092 = vmatpush2.msra.mxu0 %v1091
    %1093 = vmatprep.subr.mxu0 0.0
    %v1094 = vand.u32 %v80, 4294901760
    %1095 = vmatpush2.msra.mxu0 %v1094
    %1096 = vmatprep.subr.mxu0 0.0
    %v1097 = vand.u32 %v79, 4294901760
    %1098 = vmatpush2.msra.mxu0 %v1097
    %1099 = vmatprep.subr.mxu0 0.0
    %v1100 = vand.u32 %v78, 4294901760
    %1101 = vmatpush2.msra.mxu0 %v1100
    %1102 = vmatprep.subr.mxu0 0.0
    %v1103 = vand.u32 %v77, 4294901760
    %1104 = vmatpush2.msra.mxu0 %v1103
    %1105 = vmatprep.subr.mxu0 0.0
    %v1106 = vand.u32 %v76, 4294901760
    %1107 = vmatpush2.msra.mxu0 %v1106
    %1108 = vmatprep.subr.mxu0 0.0
    %v1109 = vand.u32 %v75, 4294901760
    %1110 = vmatpush2.msra.mxu0 %v1109
    %1111 = vmatprep.subr.mxu0 0.0
    %v1112 = vand.u32 %v74, 4294901760
    %1113 = vmatpush2.msra.mxu0 %v1112
    %1114 = vmatprep.subr.mxu0 0.0
    %v1115 = vand.u32 %v73, 4294901760
    %1116 = vmatpush2.msra.mxu0 %v1115
    %1117 = vmatprep.subr.mxu0 0.0
    %v1118 = vand.u32 %v72, 4294901760
    %1119 = vmatpush2.msra.mxu0 %v1118
    %1120 = vmatprep.subr.mxu0 0.0
    %v1121 = vand.u32 %v71, 4294901760
    %1122 = vmatpush2.msra.mxu0 %v1121
    %v1123 = vand.u32 %v139, 4294901760
    %v1124 = vsub.f32 %v139, %v1123
    %v1125 = vand.u32 %v1124, 4294901760
    %v1126 = vsub.f32 %v1124, %v1125
    %v1127 = vand.u32 %v1126, 4294901760
    %1128 = vmatprep.mubr.f32.mxu0 %v1127
    %v1129 = vand.u32 %v137, 4294901760
    %v1130 = vsub.f32 %v137, %v1129
    %v1131 = vand.u32 %v1130, 4294901760
    %v1132 = vsub.f32 %v1130, %v1131
    %v1133 = vand.u32 %v1132, 4294901760
    %1134 = vmatmul.mubr.f32.gmra.mxu0 %v1133
    %v1135 = vpop.f32.mrf.mxu0
    %v1136 = vadd.f32 %v1024, %v1135
    %v1137 = vpop.f32.mrf.mxu0
    %1138 = vdwg.mxu0
    %1139 = vmatprep.subr.mxu0 0.0
    %v1140 = vand.u32 %v70, 4294901760
    %v1141 = vsub.f32 %v70, %v1140
    %v1142 = vand.u32 %v1141, 4294901760
    %v1143 = vsub.f32 %v1141, %v1142
    %v1144 = vand.u32 %v1143, 4294901760
    %1145 = vmatpush1.msra.mxu0 %v1144
    %1146 = vmatprep.subr.mxu0 0.0
    %v1147 = vand.u32 %v69, 4294901760
    %v1148 = vsub.f32 %v69, %v1147
    %v1149 = vand.u32 %v1148, 4294901760
    %v1150 = vsub.f32 %v1148, %v1149
    %v1151 = vand.u32 %v1150, 4294901760
    %1152 = vmatpush1.msra.mxu0 %v1151
    %1153 = vmatprep.subr.mxu0 0.0
    %v1154 = vand.u32 %v68, 4294901760
    %v1155 = vsub.f32 %v68, %v1154
    %v1156 = vand.u32 %v1155, 4294901760
    %v1157 = vsub.f32 %v1155, %v1156
    %v1158 = vand.u32 %v1157, 4294901760
    %1159 = vmatpush1.msra.mxu0 %v1158
    %1160 = vmatprep.subr.mxu0 0.0
    %v1161 = vand.u32 %v67, 4294901760
    %v1162 = vsub.f32 %v67, %v1161
    %v1163 = vand.u32 %v1162, 4294901760
    %v1164 = vsub.f32 %v1162, %v1163
    %v1165 = vand.u32 %v1164, 4294901760
    %1166 = vmatpush1.msra.mxu0 %v1165
    %1167 = vmatprep.subr.mxu0 0.0
    %v1168 = vand.u32 %v66, 4294901760
    %v1169 = vsub.f32 %v66, %v1168
    %v1170 = vand.u32 %v1169, 4294901760
    %v1171 = vsub.f32 %v1169, %v1170
    %v1172 = vand.u32 %v1171, 4294901760
    %1173 = vmatpush1.msra.mxu0 %v1172
    %1174 = vmatprep.subr.mxu0 0.0
    %v1175 = vand.u32 %v65, 4294901760
    %v1176 = vsub.f32 %v65, %v1175
    %v1177 = vand.u32 %v1176, 4294901760
    %v1178 = vsub.f32 %v1176, %v1177
    %v1179 = vand.u32 %v1178, 4294901760
    %1180 = vmatpush1.msra.mxu0 %v1179
    %1181 = vmatprep.subr.mxu0 0.0
    %v1182 = vand.u32 %v64, 4294901760
    %v1183 = vsub.f32 %v64, %v1182
    %v1184 = vand.u32 %v1183, 4294901760
    %v1185 = vsub.f32 %v1183, %v1184
    %v1186 = vand.u32 %v1185, 4294901760
    %1187 = vmatpush1.msra.mxu0 %v1186
    %1188 = vmatprep.subr.mxu0 0.0
    %v1189 = vand.u32 %v63, 4294901760
    %v1190 = vsub.f32 %v63, %v1189
    %v1191 = vand.u32 %v1190, 4294901760
    %v1192 = vsub.f32 %v1190, %v1191
    %v1193 = vand.u32 %v1192, 4294901760
    %1194 = vmatpush1.msra.mxu0 %v1193
    %1195 = vmatprep.subr.mxu0 0.0
    %v1196 = vand.u32 %v62, 4294901760
    %v1197 = vsub.f32 %v62, %v1196
    %v1198 = vand.u32 %v1197, 4294901760
    %v1199 = vsub.f32 %v1197, %v1198
    %v1200 = vand.u32 %v1199, 4294901760
    %1201 = vmatpush1.msra.mxu0 %v1200
    %1202 = vmatprep.subr.mxu0 0.0
    %v1203 = vand.u32 %v61, 4294901760
    %v1204 = vsub.f32 %v61, %v1203
    %v1205 = vand.u32 %v1204, 4294901760
    %v1206 = vsub.f32 %v1204, %v1205
    %v1207 = vand.u32 %v1206, 4294901760
    %1208 = vmatpush1.msra.mxu0 %v1207
    %1209 = vmatprep.subr.mxu0 0.0
    %v1210 = vand.u32 %v60, 4294901760
    %v1211 = vsub.f32 %v60, %v1210
    %v1212 = vand.u32 %v1211, 4294901760
    %v1213 = vsub.f32 %v1211, %v1212
    %v1214 = vand.u32 %v1213, 4294901760
    %1215 = vmatpush1.msra.mxu0 %v1214
    %1216 = vmatprep.subr.mxu0 0.0
    %v1217 = vand.u32 %v59, 4294901760
    %v1218 = vsub.f32 %v59, %v1217
    %v1219 = vand.u32 %v1218, 4294901760
    %v1220 = vsub.f32 %v1218, %v1219
    %v1221 = vand.u32 %v1220, 4294901760
    %1222 = vmatpush1.msra.mxu0 %v1221
    %1223 = vmatprep.subr.mxu0 0.0
    %v1224 = vand.u32 %v58, 4294901760
    %v1225 = vsub.f32 %v58, %v1224
    %v1226 = vand.u32 %v1225, 4294901760
    %v1227 = vsub.f32 %v1225, %v1226
    %v1228 = vand.u32 %v1227, 4294901760
    %1229 = vmatpush1.msra.mxu0 %v1228
    %1230 = vmatprep.subr.mxu0 0.0
    %v1231 = vand.u32 %v57, 4294901760
    %v1232 = vsub.f32 %v57, %v1231
    %v1233 = vand.u32 %v1232, 4294901760
    %v1234 = vsub.f32 %v1232, %v1233
    %v1235 = vand.u32 %v1234, 4294901760
    %1236 = vmatpush1.msra.mxu0 %v1235
    %1237 = vmatprep.subr.mxu0 0.0
    %v1238 = vand.u32 %v56, 4294901760
    %v1239 = vsub.f32 %v56, %v1238
    %v1240 = vand.u32 %v1239, 4294901760
    %v1241 = vsub.f32 %v1239, %v1240
    %v1242 = vand.u32 %v1241, 4294901760
    %1243 = vmatpush1.msra.mxu0 %v1242
    %1244 = vmatprep.subr.mxu0 0.0
    %v1245 = vand.u32 %v55, 4294901760
    %v1246 = vsub.f32 %v55, %v1245
    %v1247 = vand.u32 %v1246, 4294901760
    %v1248 = vsub.f32 %v1246, %v1247
    %v1249 = vand.u32 %v1248, 4294901760
    %1250 = vmatpush1.msra.mxu0 %v1249
    %1251 = vmatprep.subr.mxu0 0.0
    %v1252 = vand.u32 %v86, 4294901760
    %v1253 = vsub.f32 %v86, %v1252
    %v1254 = vand.u32 %v1253, 4294901760
    %v1255 = vsub.f32 %v1253, %v1254
    %v1256 = vand.u32 %v1255, 4294901760
    %1257 = vmatpush2.msra.mxu0 %v1256
    %1258 = vmatprep.subr.mxu0 0.0
    %v1259 = vand.u32 %v85, 4294901760
    %v1260 = vsub.f32 %v85, %v1259
    %v1261 = vand.u32 %v1260, 4294901760
    %v1262 = vsub.f32 %v1260, %v1261
    %v1263 = vand.u32 %v1262, 4294901760
    %1264 = vmatpush2.msra.mxu0 %v1263
    %1265 = vmatprep.subr.mxu0 0.0
    %v1266 = vand.u32 %v84, 4294901760
    %v1267 = vsub.f32 %v84, %v1266
    %v1268 = vand.u32 %v1267, 4294901760
    %v1269 = vsub.f32 %v1267, %v1268
    %v1270 = vand.u32 %v1269, 4294901760
    %1271 = vmatpush2.msra.mxu0 %v1270
    %1272 = vmatprep.subr.mxu0 0.0
    %v1273 = vand.u32 %v83, 4294901760
    %v1274 = vsub.f32 %v83, %v1273
    %v1275 = vand.u32 %v1274, 4294901760
    %v1276 = vsub.f32 %v1274, %v1275
    %v1277 = vand.u32 %v1276, 4294901760
    %1278 = vmatpush2.msra.mxu0 %v1277
    %1279 = vmatprep.subr.mxu0 0.0
    %v1280 = vand.u32 %v82, 4294901760
    %v1281 = vsub.f32 %v82, %v1280
    %v1282 = vand.u32 %v1281, 4294901760
    %v1283 = vsub.f32 %v1281, %v1282
    %v1284 = vand.u32 %v1283, 4294901760
    %1285 = vmatpush2.msra.mxu0 %v1284
    %1286 = vmatprep.subr.mxu0 0.0
    %v1287 = vand.u32 %v81, 4294901760
    %v1288 = vsub.f32 %v81, %v1287
    %v1289 = vand.u32 %v1288, 4294901760
    %v1290 = vsub.f32 %v1288, %v1289
    %v1291 = vand.u32 %v1290, 4294901760
    %1292 = vmatpush2.msra.mxu0 %v1291
    %1293 = vmatprep.subr.mxu0 0.0
    %v1294 = vand.u32 %v80, 4294901760
    %v1295 = vsub.f32 %v80, %v1294
    %v1296 = vand.u32 %v1295, 4294901760
    %v1297 = vsub.f32 %v1295, %v1296
    %v1298 = vand.u32 %v1297, 4294901760
    %1299 = vmatpush2.msra.mxu0 %v1298
    %1300 = vmatprep.subr.mxu0 0.0
    %v1301 = vand.u32 %v79, 4294901760
    %v1302 = vsub.f32 %v79, %v1301
    %v1303 = vand.u32 %v1302, 4294901760
    %v1304 = vsub.f32 %v1302, %v1303
    %v1305 = vand.u32 %v1304, 4294901760
    %1306 = vmatpush2.msra.mxu0 %v1305
    %1307 = vmatprep.subr.mxu0 0.0
    %v1308 = vand.u32 %v78, 4294901760
    %v1309 = vsub.f32 %v78, %v1308
    %v1310 = vand.u32 %v1309, 4294901760
    %v1311 = vsub.f32 %v1309, %v1310
    %v1312 = vand.u32 %v1311, 4294901760
    %1313 = vmatpush2.msra.mxu0 %v1312
    %1314 = vmatprep.subr.mxu0 0.0
    %v1315 = vand.u32 %v77, 4294901760
    %v1316 = vsub.f32 %v77, %v1315
    %v1317 = vand.u32 %v1316, 4294901760
    %v1318 = vsub.f32 %v1316, %v1317
    %v1319 = vand.u32 %v1318, 4294901760
    %1320 = vmatpush2.msra.mxu0 %v1319
    %1321 = vmatprep.subr.mxu0 0.0
    %v1322 = vand.u32 %v76, 4294901760
    %v1323 = vsub.f32 %v76, %v1322
    %v1324 = vand.u32 %v1323, 4294901760
    %v1325 = vsub.f32 %v1323, %v1324
    %v1326 = vand.u32 %v1325, 4294901760
    %1327 = vmatpush2.msra.mxu0 %v1326
    %1328 = vmatprep.subr.mxu0 0.0
    %v1329 = vand.u32 %v75, 4294901760
    %v1330 = vsub.f32 %v75, %v1329
    %v1331 = vand.u32 %v1330, 4294901760
    %v1332 = vsub.f32 %v1330, %v1331
    %v1333 = vand.u32 %v1332, 4294901760
    %1334 = vmatpush2.msra.mxu0 %v1333
    %1335 = vmatprep.subr.mxu0 0.0
    %v1336 = vand.u32 %v74, 4294901760
    %v1337 = vsub.f32 %v74, %v1336
    %v1338 = vand.u32 %v1337, 4294901760
    %v1339 = vsub.f32 %v1337, %v1338
    %v1340 = vand.u32 %v1339, 4294901760
    %1341 = vmatpush2.msra.mxu0 %v1340
    %1342 = vmatprep.subr.mxu0 0.0
    %v1343 = vand.u32 %v73, 4294901760
    %v1344 = vsub.f32 %v73, %v1343
    %v1345 = vand.u32 %v1344, 4294901760
    %v1346 = vsub.f32 %v1344, %v1345
    %v1347 = vand.u32 %v1346, 4294901760
    %1348 = vmatpush2.msra.mxu0 %v1347
    %1349 = vmatprep.subr.mxu0 0.0
    %v1350 = vand.u32 %v72, 4294901760
    %v1351 = vsub.f32 %v72, %v1350
    %v1352 = vand.u32 %v1351, 4294901760
    %v1353 = vsub.f32 %v1351, %v1352
    %v1354 = vand.u32 %v1353, 4294901760
    %1355 = vmatpush2.msra.mxu0 %v1354
    %1356 = vmatprep.subr.mxu0 0.0
    %v1357 = vand.u32 %v71, 4294901760
    %v1358 = vsub.f32 %v71, %v1357
    %v1359 = vand.u32 %v1358, 4294901760
    %v1360 = vsub.f32 %v1358, %v1359
    %v1361 = vand.u32 %v1360, 4294901760
    %1362 = vmatpush2.msra.mxu0 %v1361
    %v1363 = vand.u32 %v139, 4294901760
    %1364 = vmatprep.mubr.f32.mxu0 %v1363
    %v1365 = vand.u32 %v137, 4294901760
    %1366 = vmatmul.mubr.f32.gmra.mxu0 %v1365
    %v1367 = vpop.f32.mrf.mxu0
    %v1368 = vadd.f32 %v1136, %v1367
    %v1369 = vpop.f32.mrf.mxu0
    %1370 = vdwg.mxu0
    %1371 = vmatprep.subr.mxu0 0.0
    %v1372 = vand.u32 %v70, 4294901760
    %v1373 = vsub.f32 %v70, %v1372
    %1374 = vmatpush1.msra.mxu0 %v1373
    %1375 = vmatprep.subr.mxu0 0.0
    %v1376 = vand.u32 %v69, 4294901760
    %v1377 = vsub.f32 %v69, %v1376
    %1378 = vmatpush1.msra.mxu0 %v1377
    %1379 = vmatprep.subr.mxu0 0.0
    %v1380 = vand.u32 %v68, 4294901760
    %v1381 = vsub.f32 %v68, %v1380
    %1382 = vmatpush1.msra.mxu0 %v1381
    %1383 = vmatprep.subr.mxu0 0.0
    %v1384 = vand.u32 %v67, 4294901760
    %v1385 = vsub.f32 %v67, %v1384
    %1386 = vmatpush1.msra.mxu0 %v1385
    %1387 = vmatprep.subr.mxu0 0.0
    %v1388 = vand.u32 %v66, 4294901760
    %v1389 = vsub.f32 %v66, %v1388
    %1390 = vmatpush1.msra.mxu0 %v1389
    %1391 = vmatprep.subr.mxu0 0.0
    %v1392 = vand.u32 %v65, 4294901760
    %v1393 = vsub.f32 %v65, %v1392
    %1394 = vmatpush1.msra.mxu0 %v1393
    %1395 = vmatprep.subr.mxu0 0.0
    %v1396 = vand.u32 %v64, 4294901760
    %v1397 = vsub.f32 %v64, %v1396
    %1398 = vmatpush1.msra.mxu0 %v1397
    %1399 = vmatprep.subr.mxu0 0.0
    %v1400 = vand.u32 %v63, 4294901760
    %v1401 = vsub.f32 %v63, %v1400
    %1402 = vmatpush1.msra.mxu0 %v1401
    %1403 = vmatprep.subr.mxu0 0.0
    %v1404 = vand.u32 %v62, 4294901760
    %v1405 = vsub.f32 %v62, %v1404
    %1406 = vmatpush1.msra.mxu0 %v1405
    %1407 = vmatprep.subr.mxu0 0.0
    %v1408 = vand.u32 %v61, 4294901760
    %v1409 = vsub.f32 %v61, %v1408
    %1410 = vmatpush1.msra.mxu0 %v1409
    %1411 = vmatprep.subr.mxu0 0.0
    %v1412 = vand.u32 %v60, 4294901760
    %v1413 = vsub.f32 %v60, %v1412
    %1414 = vmatpush1.msra.mxu0 %v1413
    %1415 = vmatprep.subr.mxu0 0.0
    %v1416 = vand.u32 %v59, 4294901760
    %v1417 = vsub.f32 %v59, %v1416
    %1418 = vmatpush1.msra.mxu0 %v1417
    %1419 = vmatprep.subr.mxu0 0.0
    %v1420 = vand.u32 %v58, 4294901760
    %v1421 = vsub.f32 %v58, %v1420
    %1422 = vmatpush1.msra.mxu0 %v1421
    %1423 = vmatprep.subr.mxu0 0.0
    %v1424 = vand.u32 %v57, 4294901760
    %v1425 = vsub.f32 %v57, %v1424
    %1426 = vmatpush1.msra.mxu0 %v1425
    %1427 = vmatprep.subr.mxu0 0.0
    %v1428 = vand.u32 %v56, 4294901760
    %v1429 = vsub.f32 %v56, %v1428
    %1430 = vmatpush1.msra.mxu0 %v1429
    %1431 = vmatprep.subr.mxu0 0.0
    %v1432 = vand.u32 %v55, 4294901760
    %v1433 = vsub.f32 %v55, %v1432
    %1434 = vmatpush1.msra.mxu0 %v1433
    %1435 = vmatprep.subr.mxu0 0.0
    %v1436 = vand.u32 %v86, 4294901760
    %v1437 = vsub.f32 %v86, %v1436
    %1438 = vmatpush2.msra.mxu0 %v1437
    %1439 = vmatprep.subr.mxu0 0.0
    %v1440 = vand.u32 %v85, 4294901760
    %v1441 = vsub.f32 %v85, %v1440
    %1442 = vmatpush2.msra.mxu0 %v1441
    %1443 = vmatprep.subr.mxu0 0.0
    %v1444 = vand.u32 %v84, 4294901760
    %v1445 = vsub.f32 %v84, %v1444
    %1446 = vmatpush2.msra.mxu0 %v1445
    %1447 = vmatprep.subr.mxu0 0.0
    %v1448 = vand.u32 %v83, 4294901760
    %v1449 = vsub.f32 %v83, %v1448
    %1450 = vmatpush2.msra.mxu0 %v1449
    %1451 = vmatprep.subr.mxu0 0.0
    %v1452 = vand.u32 %v82, 4294901760
    %v1453 = vsub.f32 %v82, %v1452
    %1454 = vmatpush2.msra.mxu0 %v1453
    %1455 = vmatprep.subr.mxu0 0.0
    %v1456 = vand.u32 %v81, 4294901760
    %v1457 = vsub.f32 %v81, %v1456
    %1458 = vmatpush2.msra.mxu0 %v1457
    %1459 = vmatprep.subr.mxu0 0.0
    %v1460 = vand.u32 %v80, 4294901760
    %v1461 = vsub.f32 %v80, %v1460
    %1462 = vmatpush2.msra.mxu0 %v1461
    %1463 = vmatprep.subr.mxu0 0.0
    %v1464 = vand.u32 %v79, 4294901760
    %v1465 = vsub.f32 %v79, %v1464
    %1466 = vmatpush2.msra.mxu0 %v1465
    %1467 = vmatprep.subr.mxu0 0.0
    %v1468 = vand.u32 %v78, 4294901760
    %v1469 = vsub.f32 %v78, %v1468
    %1470 = vmatpush2.msra.mxu0 %v1469
    %1471 = vmatprep.subr.mxu0 0.0
    %v1472 = vand.u32 %v77, 4294901760
    %v1473 = vsub.f32 %v77, %v1472
    %1474 = vmatpush2.msra.mxu0 %v1473
    %1475 = vmatprep.subr.mxu0 0.0
    %v1476 = vand.u32 %v76, 4294901760
    %v1477 = vsub.f32 %v76, %v1476
    %1478 = vmatpush2.msra.mxu0 %v1477
    %1479 = vmatprep.subr.mxu0 0.0
    %v1480 = vand.u32 %v75, 4294901760
    %v1481 = vsub.f32 %v75, %v1480
    %1482 = vmatpush2.msra.mxu0 %v1481
    %1483 = vmatprep.subr.mxu0 0.0
    %v1484 = vand.u32 %v74, 4294901760
    %v1485 = vsub.f32 %v74, %v1484
    %1486 = vmatpush2.msra.mxu0 %v1485
    %1487 = vmatprep.subr.mxu0 0.0
    %v1488 = vand.u32 %v73, 4294901760
    %v1489 = vsub.f32 %v73, %v1488
    %1490 = vmatpush2.msra.mxu0 %v1489
    %1491 = vmatprep.subr.mxu0 0.0
    %v1492 = vand.u32 %v72, 4294901760
    %v1493 = vsub.f32 %v72, %v1492
    %1494 = vmatpush2.msra.mxu0 %v1493
    %1495 = vmatprep.subr.mxu0 0.0
    %v1496 = vand.u32 %v71, 4294901760
    %v1497 = vsub.f32 %v71, %v1496
    %1498 = vmatpush2.msra.mxu0 %v1497
    %v1499 = vand.u32 %v139, 4294901760
    %v1500 = vsub.f32 %v139, %v1499
    %1501 = vmatprep.mubr.f32.mxu0 %v1500
    %v1502 = vand.u32 %v137, 4294901760
    %v1503 = vsub.f32 %v137, %v1502
    %1504 = vmatmul.mubr.f32.gmra.mxu0 %v1503
    %v1505 = vpop.f32.mrf.mxu0
    %v1506 = vadd.f32 %v1368, %v1505
    %v1507 = vpop.f32.mrf.mxu0
    %1508 = vdwg.mxu0
    %1509 = vmatprep.subr.mxu0 0.0
    %v1510 = vand.u32 %v70, 4294901760
    %1511 = vmatpush1.msra.mxu0 %v1510
    %1512 = vmatprep.subr.mxu0 0.0
    %v1513 = vand.u32 %v69, 4294901760
    %1514 = vmatpush1.msra.mxu0 %v1513
    %1515 = vmatprep.subr.mxu0 0.0
    %v1516 = vand.u32 %v68, 4294901760
    %1517 = vmatpush1.msra.mxu0 %v1516
    %1518 = vmatprep.subr.mxu0 0.0
    %v1519 = vand.u32 %v67, 4294901760
    %1520 = vmatpush1.msra.mxu0 %v1519
    %1521 = vmatprep.subr.mxu0 0.0
    %v1522 = vand.u32 %v66, 4294901760
    %1523 = vmatpush1.msra.mxu0 %v1522
    %1524 = vmatprep.subr.mxu0 0.0
    %v1525 = vand.u32 %v65, 4294901760
    %1526 = vmatpush1.msra.mxu0 %v1525
    %1527 = vmatprep.subr.mxu0 0.0
    %v1528 = vand.u32 %v64, 4294901760
    %1529 = vmatpush1.msra.mxu0 %v1528
    %1530 = vmatprep.subr.mxu0 0.0
    %v1531 = vand.u32 %v63, 4294901760
    %1532 = vmatpush1.msra.mxu0 %v1531
    %1533 = vmatprep.subr.mxu0 0.0
    %v1534 = vand.u32 %v62, 4294901760
    %1535 = vmatpush1.msra.mxu0 %v1534
    %1536 = vmatprep.subr.mxu0 0.0
    %v1537 = vand.u32 %v61, 4294901760
    %1538 = vmatpush1.msra.mxu0 %v1537
    %1539 = vmatprep.subr.mxu0 0.0
    %v1540 = vand.u32 %v60, 4294901760
    %1541 = vmatpush1.msra.mxu0 %v1540
    %1542 = vmatprep.subr.mxu0 0.0
    %v1543 = vand.u32 %v59, 4294901760
    %1544 = vmatpush1.msra.mxu0 %v1543
    %1545 = vmatprep.subr.mxu0 0.0
    %v1546 = vand.u32 %v58, 4294901760
    %1547 = vmatpush1.msra.mxu0 %v1546
    %1548 = vmatprep.subr.mxu0 0.0
    %v1549 = vand.u32 %v57, 4294901760
    %1550 = vmatpush1.msra.mxu0 %v1549
    %1551 = vmatprep.subr.mxu0 0.0
    %v1552 = vand.u32 %v56, 4294901760
    %1553 = vmatpush1.msra.mxu0 %v1552
    %1554 = vmatprep.subr.mxu0 0.0
    %v1555 = vand.u32 %v55, 4294901760
    %1556 = vmatpush1.msra.mxu0 %v1555
    %1557 = vmatprep.subr.mxu0 0.0
    %v1558 = vand.u32 %v86, 4294901760
    %1559 = vmatpush2.msra.mxu0 %v1558
    %1560 = vmatprep.subr.mxu0 0.0
    %v1561 = vand.u32 %v85, 4294901760
    %1562 = vmatpush2.msra.mxu0 %v1561
    %1563 = vmatprep.subr.mxu0 0.0
    %v1564 = vand.u32 %v84, 4294901760
    %1565 = vmatpush2.msra.mxu0 %v1564
    %1566 = vmatprep.subr.mxu0 0.0
    %v1567 = vand.u32 %v83, 4294901760
    %1568 = vmatpush2.msra.mxu0 %v1567
    %1569 = vmatprep.subr.mxu0 0.0
    %v1570 = vand.u32 %v82, 4294901760
    %1571 = vmatpush2.msra.mxu0 %v1570
    %1572 = vmatprep.subr.mxu0 0.0
    %v1573 = vand.u32 %v81, 4294901760
    %1574 = vmatpush2.msra.mxu0 %v1573
    %1575 = vmatprep.subr.mxu0 0.0
    %v1576 = vand.u32 %v80, 4294901760
    %1577 = vmatpush2.msra.mxu0 %v1576
    %1578 = vmatprep.subr.mxu0 0.0
    %v1579 = vand.u32 %v79, 4294901760
    %1580 = vmatpush2.msra.mxu0 %v1579
    %1581 = vmatprep.subr.mxu0 0.0
    %v1582 = vand.u32 %v78, 4294901760
    %1583 = vmatpush2.msra.mxu0 %v1582
    %1584 = vmatprep.subr.mxu0 0.0
    %v1585 = vand.u32 %v77, 4294901760
    %1586 = vmatpush2.msra.mxu0 %v1585
    %1587 = vmatprep.subr.mxu0 0.0
    %v1588 = vand.u32 %v76, 4294901760
    %1589 = vmatpush2.msra.mxu0 %v1588
    %1590 = vmatprep.subr.mxu0 0.0
    %v1591 = vand.u32 %v75, 4294901760
    %1592 = vmatpush2.msra.mxu0 %v1591
    %1593 = vmatprep.subr.mxu0 0.0
    %v1594 = vand.u32 %v74, 4294901760
    %1595 = vmatpush2.msra.mxu0 %v1594
    %1596 = vmatprep.subr.mxu0 0.0
    %v1597 = vand.u32 %v73, 4294901760
    %1598 = vmatpush2.msra.mxu0 %v1597
    %1599 = vmatprep.subr.mxu0 0.0
    %v1600 = vand.u32 %v72, 4294901760
    %1601 = vmatpush2.msra.mxu0 %v1600
    %1602 = vmatprep.subr.mxu0 0.0
    %v1603 = vand.u32 %v71, 4294901760
    %1604 = vmatpush2.msra.mxu0 %v1603
    %v1605 = vand.u32 %v139, 4294901760
    %v1606 = vsub.f32 %v139, %v1605
    %v1607 = vand.u32 %v1606, 4294901760
    %1608 = vmatprep.mubr.f32.mxu0 %v1607
    %v1609 = vand.u32 %v137, 4294901760
    %v1610 = vsub.f32 %v137, %v1609
    %v1611 = vand.u32 %v1610, 4294901760
    %1612 = vmatmul.mubr.f32.gmra.mxu0 %v1611
    %v1613 = vpop.f32.mrf.mxu0
    %v1614 = vadd.f32 %v1506, %v1613
    %v1615 = vpop.f32.mrf.mxu0
    %1616 = vdwg.mxu0
    %1617 = vmatprep.subr.mxu0 0.0
    %v1618 = vand.u32 %v70, 4294901760
    %v1619 = vsub.f32 %v70, %v1618
    %v1620 = vand.u32 %v1619, 4294901760
    %1621 = vmatpush1.msra.mxu0 %v1620
    %1622 = vmatprep.subr.mxu0 0.0
    %v1623 = vand.u32 %v69, 4294901760
    %v1624 = vsub.f32 %v69, %v1623
    %v1625 = vand.u32 %v1624, 4294901760
    %1626 = vmatpush1.msra.mxu0 %v1625
    %1627 = vmatprep.subr.mxu0 0.0
    %v1628 = vand.u32 %v68, 4294901760
    %v1629 = vsub.f32 %v68, %v1628
    %v1630 = vand.u32 %v1629, 4294901760
    %1631 = vmatpush1.msra.mxu0 %v1630
    %1632 = vmatprep.subr.mxu0 0.0
    %v1633 = vand.u32 %v67, 4294901760
    %v1634 = vsub.f32 %v67, %v1633
    %v1635 = vand.u32 %v1634, 4294901760
    %1636 = vmatpush1.msra.mxu0 %v1635
    %1637 = vmatprep.subr.mxu0 0.0
    %v1638 = vand.u32 %v66, 4294901760
    %v1639 = vsub.f32 %v66, %v1638
    %v1640 = vand.u32 %v1639, 4294901760
    %1641 = vmatpush1.msra.mxu0 %v1640
    %1642 = vmatprep.subr.mxu0 0.0
    %v1643 = vand.u32 %v65, 4294901760
    %v1644 = vsub.f32 %v65, %v1643
    %v1645 = vand.u32 %v1644, 4294901760
    %1646 = vmatpush1.msra.mxu0 %v1645
    %1647 = vmatprep.subr.mxu0 0.0
    %v1648 = vand.u32 %v64, 4294901760
    %v1649 = vsub.f32 %v64, %v1648
    %v1650 = vand.u32 %v1649, 4294901760
    %1651 = vmatpush1.msra.mxu0 %v1650
    %1652 = vmatprep.subr.mxu0 0.0
    %v1653 = vand.u32 %v63, 4294901760
    %v1654 = vsub.f32 %v63, %v1653
    %v1655 = vand.u32 %v1654, 4294901760
    %1656 = vmatpush1.msra.mxu0 %v1655
    %1657 = vmatprep.subr.mxu0 0.0
    %v1658 = vand.u32 %v62, 4294901760
    %v1659 = vsub.f32 %v62, %v1658
    %v1660 = vand.u32 %v1659, 4294901760
    %1661 = vmatpush1.msra.mxu0 %v1660
    %1662 = vmatprep.subr.mxu0 0.0
    %v1663 = vand.u32 %v61, 4294901760
    %v1664 = vsub.f32 %v61, %v1663
    %v1665 = vand.u32 %v1664, 4294901760
    %1666 = vmatpush1.msra.mxu0 %v1665
    %1667 = vmatprep.subr.mxu0 0.0
    %v1668 = vand.u32 %v60, 4294901760
    %v1669 = vsub.f32 %v60, %v1668
    %v1670 = vand.u32 %v1669, 4294901760
    %1671 = vmatpush1.msra.mxu0 %v1670
    %1672 = vmatprep.subr.mxu0 0.0
    %v1673 = vand.u32 %v59, 4294901760
    %v1674 = vsub.f32 %v59, %v1673
    %v1675 = vand.u32 %v1674, 4294901760
    %1676 = vmatpush1.msra.mxu0 %v1675
    %1677 = vmatprep.subr.mxu0 0.0
    %v1678 = vand.u32 %v58, 4294901760
    %v1679 = vsub.f32 %v58, %v1678
    %v1680 = vand.u32 %v1679, 4294901760
    %1681 = vmatpush1.msra.mxu0 %v1680
    %1682 = vmatprep.subr.mxu0 0.0
    %v1683 = vand.u32 %v57, 4294901760
    %v1684 = vsub.f32 %v57, %v1683
    %v1685 = vand.u32 %v1684, 4294901760
    %1686 = vmatpush1.msra.mxu0 %v1685
    %1687 = vmatprep.subr.mxu0 0.0
    %v1688 = vand.u32 %v56, 4294901760
    %v1689 = vsub.f32 %v56, %v1688
    %v1690 = vand.u32 %v1689, 4294901760
    %1691 = vmatpush1.msra.mxu0 %v1690
    %1692 = vmatprep.subr.mxu0 0.0
    %v1693 = vand.u32 %v55, 4294901760
    %v1694 = vsub.f32 %v55, %v1693
    %v1695 = vand.u32 %v1694, 4294901760
    %1696 = vmatpush1.msra.mxu0 %v1695
    %1697 = vmatprep.subr.mxu0 0.0
    %v1698 = vand.u32 %v86, 4294901760
    %v1699 = vsub.f32 %v86, %v1698
    %v1700 = vand.u32 %v1699, 4294901760
    %1701 = vmatpush2.msra.mxu0 %v1700
    %1702 = vmatprep.subr.mxu0 0.0
    %v1703 = vand.u32 %v85, 4294901760
    %v1704 = vsub.f32 %v85, %v1703
    %v1705 = vand.u32 %v1704, 4294901760
    %1706 = vmatpush2.msra.mxu0 %v1705
    %1707 = vmatprep.subr.mxu0 0.0
    %v1708 = vand.u32 %v84, 4294901760
    %v1709 = vsub.f32 %v84, %v1708
    %v1710 = vand.u32 %v1709, 4294901760
    %1711 = vmatpush2.msra.mxu0 %v1710
    %1712 = vmatprep.subr.mxu0 0.0
    %v1713 = vand.u32 %v83, 4294901760
    %v1714 = vsub.f32 %v83, %v1713
    %v1715 = vand.u32 %v1714, 4294901760
    %1716 = vmatpush2.msra.mxu0 %v1715
    %1717 = vmatprep.subr.mxu0 0.0
    %v1718 = vand.u32 %v82, 4294901760
    %v1719 = vsub.f32 %v82, %v1718
    %v1720 = vand.u32 %v1719, 4294901760
    %1721 = vmatpush2.msra.mxu0 %v1720
    %1722 = vmatprep.subr.mxu0 0.0
    %v1723 = vand.u32 %v81, 4294901760
    %v1724 = vsub.f32 %v81, %v1723
    %v1725 = vand.u32 %v1724, 4294901760
    %1726 = vmatpush2.msra.mxu0 %v1725
    %1727 = vmatprep.subr.mxu0 0.0
    %v1728 = vand.u32 %v80, 4294901760
    %v1729 = vsub.f32 %v80, %v1728
    %v1730 = vand.u32 %v1729, 4294901760
    %1731 = vmatpush2.msra.mxu0 %v1730
    %1732 = vmatprep.subr.mxu0 0.0
    %v1733 = vand.u32 %v79, 4294901760
    %v1734 = vsub.f32 %v79, %v1733
    %v1735 = vand.u32 %v1734, 4294901760
    %1736 = vmatpush2.msra.mxu0 %v1735
    %1737 = vmatprep.subr.mxu0 0.0
    %v1738 = vand.u32 %v78, 4294901760
    %v1739 = vsub.f32 %v78, %v1738
    %v1740 = vand.u32 %v1739, 4294901760
    %1741 = vmatpush2.msra.mxu0 %v1740
    %1742 = vmatprep.subr.mxu0 0.0
    %v1743 = vand.u32 %v77, 4294901760
    %v1744 = vsub.f32 %v77, %v1743
    %v1745 = vand.u32 %v1744, 4294901760
    %1746 = vmatpush2.msra.mxu0 %v1745
    %1747 = vmatprep.subr.mxu0 0.0
    %v1748 = vand.u32 %v76, 4294901760
    %v1749 = vsub.f32 %v76, %v1748
    %v1750 = vand.u32 %v1749, 4294901760
    %1751 = vmatpush2.msra.mxu0 %v1750
    %1752 = vmatprep.subr.mxu0 0.0
    %v1753 = vand.u32 %v75, 4294901760
    %v1754 = vsub.f32 %v75, %v1753
    %v1755 = vand.u32 %v1754, 4294901760
    %1756 = vmatpush2.msra.mxu0 %v1755
    %1757 = vmatprep.subr.mxu0 0.0
    %v1758 = vand.u32 %v74, 4294901760
    %v1759 = vsub.f32 %v74, %v1758
    %v1760 = vand.u32 %v1759, 4294901760
    %1761 = vmatpush2.msra.mxu0 %v1760
    %1762 = vmatprep.subr.mxu0 0.0
    %v1763 = vand.u32 %v73, 4294901760
    %v1764 = vsub.f32 %v73, %v1763
    %v1765 = vand.u32 %v1764, 4294901760
    %1766 = vmatpush2.msra.mxu0 %v1765
    %1767 = vmatprep.subr.mxu0 0.0
    %v1768 = vand.u32 %v72, 4294901760
    %v1769 = vsub.f32 %v72, %v1768
    %v1770 = vand.u32 %v1769, 4294901760
    %1771 = vmatpush2.msra.mxu0 %v1770
    %1772 = vmatprep.subr.mxu0 0.0
    %v1773 = vand.u32 %v71, 4294901760
    %v1774 = vsub.f32 %v71, %v1773
    %v1775 = vand.u32 %v1774, 4294901760
    %1776 = vmatpush2.msra.mxu0 %v1775
    %v1777 = vand.u32 %v139, 4294901760
    %1778 = vmatprep.mubr.f32.mxu0 %v1777
    %v1779 = vand.u32 %v137, 4294901760
    %1780 = vmatmul.mubr.f32.gmra.mxu0 %v1779
    %v1781 = vpop.f32.mrf.mxu0
    %v1782 = vadd.f32 %v1614, %v1781
    %v1783 = vpop.f32.mrf.mxu0
    %1784 = vdwg.mxu0
    %1785 = vmatprep.subr.mxu0 0.0
    %v1786 = vand.u32 %v70, 4294901760
    %1787 = vmatpush1.msra.mxu0 %v1786
    %1788 = vmatprep.subr.mxu0 0.0
    %v1789 = vand.u32 %v69, 4294901760
    %1790 = vmatpush1.msra.mxu0 %v1789
    %1791 = vmatprep.subr.mxu0 0.0
    %v1792 = vand.u32 %v68, 4294901760
    %1793 = vmatpush1.msra.mxu0 %v1792
    %1794 = vmatprep.subr.mxu0 0.0
    %v1795 = vand.u32 %v67, 4294901760
    %1796 = vmatpush1.msra.mxu0 %v1795
    %1797 = vmatprep.subr.mxu0 0.0
    %v1798 = vand.u32 %v66, 4294901760
    %1799 = vmatpush1.msra.mxu0 %v1798
    %1800 = vmatprep.subr.mxu0 0.0
    %v1801 = vand.u32 %v65, 4294901760
    %1802 = vmatpush1.msra.mxu0 %v1801
    %1803 = vmatprep.subr.mxu0 0.0
    %v1804 = vand.u32 %v64, 4294901760
    %1805 = vmatpush1.msra.mxu0 %v1804
    %1806 = vmatprep.subr.mxu0 0.0
    %v1807 = vand.u32 %v63, 4294901760
    %1808 = vmatpush1.msra.mxu0 %v1807
    %1809 = vmatprep.subr.mxu0 0.0
    %v1810 = vand.u32 %v62, 4294901760
    %1811 = vmatpush1.msra.mxu0 %v1810
    %1812 = vmatprep.subr.mxu0 0.0
    %v1813 = vand.u32 %v61, 4294901760
    %1814 = vmatpush1.msra.mxu0 %v1813
    %1815 = vmatprep.subr.mxu0 0.0
    %v1816 = vand.u32 %v60, 4294901760
    %1817 = vmatpush1.msra.mxu0 %v1816
    %1818 = vmatprep.subr.mxu0 0.0
    %v1819 = vand.u32 %v59, 4294901760
    %1820 = vmatpush1.msra.mxu0 %v1819
    %1821 = vmatprep.subr.mxu0 0.0
    %v1822 = vand.u32 %v58, 4294901760
    %1823 = vmatpush1.msra.mxu0 %v1822
    %1824 = vmatprep.subr.mxu0 0.0
    %v1825 = vand.u32 %v57, 4294901760
    %1826 = vmatpush1.msra.mxu0 %v1825
    %1827 = vmatprep.subr.mxu0 0.0
    %v1828 = vand.u32 %v56, 4294901760
    %1829 = vmatpush1.msra.mxu0 %v1828
    %1830 = vmatprep.subr.mxu0 0.0
    %v1831 = vand.u32 %v55, 4294901760
    %1832 = vmatpush1.msra.mxu0 %v1831
    %1833 = vmatprep.subr.mxu0 0.0
    %v1834 = vand.u32 %v86, 4294901760
    %1835 = vmatpush2.msra.mxu0 %v1834
    %1836 = vmatprep.subr.mxu0 0.0
    %v1837 = vand.u32 %v85, 4294901760
    %1838 = vmatpush2.msra.mxu0 %v1837
    %1839 = vmatprep.subr.mxu0 0.0
    %v1840 = vand.u32 %v84, 4294901760
    %1841 = vmatpush2.msra.mxu0 %v1840
    %1842 = vmatprep.subr.mxu0 0.0
    %v1843 = vand.u32 %v83, 4294901760
    %1844 = vmatpush2.msra.mxu0 %v1843
    %1845 = vmatprep.subr.mxu0 0.0
    %v1846 = vand.u32 %v82, 4294901760
    %1847 = vmatpush2.msra.mxu0 %v1846
    %1848 = vmatprep.subr.mxu0 0.0
    %v1849 = vand.u32 %v81, 4294901760
    %1850 = vmatpush2.msra.mxu0 %v1849
    %1851 = vmatprep.subr.mxu0 0.0
    %v1852 = vand.u32 %v80, 4294901760
    %1853 = vmatpush2.msra.mxu0 %v1852
    %1854 = vmatprep.subr.mxu0 0.0
    %v1855 = vand.u32 %v79, 4294901760
    %1856 = vmatpush2.msra.mxu0 %v1855
    %1857 = vmatprep.subr.mxu0 0.0
    %v1858 = vand.u32 %v78, 4294901760
    %1859 = vmatpush2.msra.mxu0 %v1858
    %1860 = vmatprep.subr.mxu0 0.0
    %v1861 = vand.u32 %v77, 4294901760
    %1862 = vmatpush2.msra.mxu0 %v1861
    %1863 = vmatprep.subr.mxu0 0.0
    %v1864 = vand.u32 %v76, 4294901760
    %1865 = vmatpush2.msra.mxu0 %v1864
    %1866 = vmatprep.subr.mxu0 0.0
    %v1867 = vand.u32 %v75, 4294901760
    %1868 = vmatpush2.msra.mxu0 %v1867
    %1869 = vmatprep.subr.mxu0 0.0
    %v1870 = vand.u32 %v74, 4294901760
    %1871 = vmatpush2.msra.mxu0 %v1870
    %1872 = vmatprep.subr.mxu0 0.0
    %v1873 = vand.u32 %v73, 4294901760
    %1874 = vmatpush2.msra.mxu0 %v1873
    %1875 = vmatprep.subr.mxu0 0.0
    %v1876 = vand.u32 %v72, 4294901760
    %1877 = vmatpush2.msra.mxu0 %v1876
    %1878 = vmatprep.subr.mxu0 0.0
    %v1879 = vand.u32 %v71, 4294901760
    %1880 = vmatpush2.msra.mxu0 %v1879
    %v1881 = vand.u32 %v139, 4294901760
    %1882 = vmatprep.mubr.f32.mxu0 %v1881
    %v1883 = vand.u32 %v137, 4294901760
    %1884 = vmatmul.mubr.f32.gmra.mxu0 %v1883
    %v1885 = vpop.f32.mrf.mxu0
    %v1886 = vadd.f32 %v1782, %v1885
    %v1887 = vpop.f32.mrf.mxu0
    %1888 = vdwg.mxu0
    %1889 = vmatprep.subr.mxu0 0.0
    %v1890 = vand.u32 %v102, 4294901760
    %1891 = vmatpush1.msra.mxu0 %v1890
    %1892 = vmatprep.subr.mxu0 0.0
    %v1893 = vand.u32 %v101, 4294901760
    %1894 = vmatpush1.msra.mxu0 %v1893
    %1895 = vmatprep.subr.mxu0 0.0
    %v1896 = vand.u32 %v100, 4294901760
    %1897 = vmatpush1.msra.mxu0 %v1896
    %1898 = vmatprep.subr.mxu0 0.0
    %v1899 = vand.u32 %v99, 4294901760
    %1900 = vmatpush1.msra.mxu0 %v1899
    %1901 = vmatprep.subr.mxu0 0.0
    %v1902 = vand.u32 %v98, 4294901760
    %1903 = vmatpush1.msra.mxu0 %v1902
    %1904 = vmatprep.subr.mxu0 0.0
    %v1905 = vand.u32 %v97, 4294901760
    %1906 = vmatpush1.msra.mxu0 %v1905
    %1907 = vmatprep.subr.mxu0 0.0
    %v1908 = vand.u32 %v96, 4294901760
    %1909 = vmatpush1.msra.mxu0 %v1908
    %1910 = vmatprep.subr.mxu0 0.0
    %v1911 = vand.u32 %v95, 4294901760
    %1912 = vmatpush1.msra.mxu0 %v1911
    %1913 = vmatprep.subr.mxu0 0.0
    %v1914 = vand.u32 %v94, 4294901760
    %1915 = vmatpush1.msra.mxu0 %v1914
    %1916 = vmatprep.subr.mxu0 0.0
    %v1917 = vand.u32 %v93, 4294901760
    %1918 = vmatpush1.msra.mxu0 %v1917
    %1919 = vmatprep.subr.mxu0 0.0
    %v1920 = vand.u32 %v92, 4294901760
    %1921 = vmatpush1.msra.mxu0 %v1920
    %1922 = vmatprep.subr.mxu0 0.0
    %v1923 = vand.u32 %v91, 4294901760
    %1924 = vmatpush1.msra.mxu0 %v1923
    %1925 = vmatprep.subr.mxu0 0.0
    %v1926 = vand.u32 %v90, 4294901760
    %1927 = vmatpush1.msra.mxu0 %v1926
    %1928 = vmatprep.subr.mxu0 0.0
    %v1929 = vand.u32 %v89, 4294901760
    %1930 = vmatpush1.msra.mxu0 %v1929
    %1931 = vmatprep.subr.mxu0 0.0
    %v1932 = vand.u32 %v88, 4294901760
    %1933 = vmatpush1.msra.mxu0 %v1932
    %1934 = vmatprep.subr.mxu0 0.0
    %v1935 = vand.u32 %v87, 4294901760
    %1936 = vmatpush1.msra.mxu0 %v1935
    %1937 = vmatprep.subr.mxu0 0.0
    %v1938 = vand.u32 %v118, 4294901760
    %1939 = vmatpush2.msra.mxu0 %v1938
    %1940 = vmatprep.subr.mxu0 0.0
    %v1941 = vand.u32 %v117, 4294901760
    %1942 = vmatpush2.msra.mxu0 %v1941
    %1943 = vmatprep.subr.mxu0 0.0
    %v1944 = vand.u32 %v116, 4294901760
    %1945 = vmatpush2.msra.mxu0 %v1944
    %1946 = vmatprep.subr.mxu0 0.0
    %v1947 = vand.u32 %v115, 4294901760
    %1948 = vmatpush2.msra.mxu0 %v1947
    %1949 = vmatprep.subr.mxu0 0.0
    %v1950 = vand.u32 %v114, 4294901760
    %1951 = vmatpush2.msra.mxu0 %v1950
    %1952 = vmatprep.subr.mxu0 0.0
    %v1953 = vand.u32 %v113, 4294901760
    %1954 = vmatpush2.msra.mxu0 %v1953
    %1955 = vmatprep.subr.mxu0 0.0
    %v1956 = vand.u32 %v112, 4294901760
    %1957 = vmatpush2.msra.mxu0 %v1956
    %1958 = vmatprep.subr.mxu0 0.0
    %v1959 = vand.u32 %v111, 4294901760
    %1960 = vmatpush2.msra.mxu0 %v1959
    %1961 = vmatprep.subr.mxu0 0.0
    %v1962 = vand.u32 %v110, 4294901760
    %1963 = vmatpush2.msra.mxu0 %v1962
    %1964 = vmatprep.subr.mxu0 0.0
    %v1965 = vand.u32 %v109, 4294901760
    %1966 = vmatpush2.msra.mxu0 %v1965
    %1967 = vmatprep.subr.mxu0 0.0
    %v1968 = vand.u32 %v108, 4294901760
    %1969 = vmatpush2.msra.mxu0 %v1968
    %1970 = vmatprep.subr.mxu0 0.0
    %v1971 = vand.u32 %v107, 4294901760
    %1972 = vmatpush2.msra.mxu0 %v1971
    %1973 = vmatprep.subr.mxu0 0.0
    %v1974 = vand.u32 %v106, 4294901760
    %1975 = vmatpush2.msra.mxu0 %v1974
    %1976 = vmatprep.subr.mxu0 0.0
    %v1977 = vand.u32 %v105, 4294901760
    %1978 = vmatpush2.msra.mxu0 %v1977
    %1979 = vmatprep.subr.mxu0 0.0
    %v1980 = vand.u32 %v104, 4294901760
    %1981 = vmatpush2.msra.mxu0 %v1980
    %1982 = vmatprep.subr.mxu0 0.0
    %v1983 = vand.u32 %v103, 4294901760
    %1984 = vmatpush2.msra.mxu0 %v1983
    %v1985 = vand.u32 %v155, 4294901760
    %v1986 = vsub.f32 %v155, %v1985
    %v1987 = vand.u32 %v1986, 4294901760
    %v1988 = vsub.f32 %v1986, %v1987
    %v1989 = vand.u32 %v1988, 4294901760
    %1990 = vmatprep.mubr.f32.mxu0 %v1989
    %v1991 = vand.u32 %v147, 4294901760
    %v1992 = vsub.f32 %v147, %v1991
    %v1993 = vand.u32 %v1992, 4294901760
    %v1994 = vsub.f32 %v1992, %v1993
    %v1995 = vand.u32 %v1994, 4294901760
    %1996 = vmatmul.mubr.f32.gmra.mxu0 %v1995
    %v1997 = vpop.f32.mrf.mxu0
    %v1998 = vadd.f32 %v1886, %v1997
    %v1999 = vpop.f32.mrf.mxu0
    %2000 = vdwg.mxu0
    %2001 = vmatprep.subr.mxu0 0.0
    %v2002 = vand.u32 %v102, 4294901760
    %v2003 = vsub.f32 %v102, %v2002
    %v2004 = vand.u32 %v2003, 4294901760
    %v2005 = vsub.f32 %v2003, %v2004
    %v2006 = vand.u32 %v2005, 4294901760
    %2007 = vmatpush1.msra.mxu0 %v2006
    %2008 = vmatprep.subr.mxu0 0.0
    %v2009 = vand.u32 %v101, 4294901760
    %v2010 = vsub.f32 %v101, %v2009
    %v2011 = vand.u32 %v2010, 4294901760
    %v2012 = vsub.f32 %v2010, %v2011
    %v2013 = vand.u32 %v2012, 4294901760
    %2014 = vmatpush1.msra.mxu0 %v2013
    %2015 = vmatprep.subr.mxu0 0.0
    %v2016 = vand.u32 %v100, 4294901760
    %v2017 = vsub.f32 %v100, %v2016
    %v2018 = vand.u32 %v2017, 4294901760
    %v2019 = vsub.f32 %v2017, %v2018
    %v2020 = vand.u32 %v2019, 4294901760
    %2021 = vmatpush1.msra.mxu0 %v2020
    %2022 = vmatprep.subr.mxu0 0.0
    %v2023 = vand.u32 %v99, 4294901760
    %v2024 = vsub.f32 %v99, %v2023
    %v2025 = vand.u32 %v2024, 4294901760
    %v2026 = vsub.f32 %v2024, %v2025
    %v2027 = vand.u32 %v2026, 4294901760
    %2028 = vmatpush1.msra.mxu0 %v2027
    %2029 = vmatprep.subr.mxu0 0.0
    %v2030 = vand.u32 %v98, 4294901760
    %v2031 = vsub.f32 %v98, %v2030
    %v2032 = vand.u32 %v2031, 4294901760
    %v2033 = vsub.f32 %v2031, %v2032
    %v2034 = vand.u32 %v2033, 4294901760
    %2035 = vmatpush1.msra.mxu0 %v2034
    %2036 = vmatprep.subr.mxu0 0.0
    %v2037 = vand.u32 %v97, 4294901760
    %v2038 = vsub.f32 %v97, %v2037
    %v2039 = vand.u32 %v2038, 4294901760
    %v2040 = vsub.f32 %v2038, %v2039
    %v2041 = vand.u32 %v2040, 4294901760
    %2042 = vmatpush1.msra.mxu0 %v2041
    %2043 = vmatprep.subr.mxu0 0.0
    %v2044 = vand.u32 %v96, 4294901760
    %v2045 = vsub.f32 %v96, %v2044
    %v2046 = vand.u32 %v2045, 4294901760
    %v2047 = vsub.f32 %v2045, %v2046
    %v2048 = vand.u32 %v2047, 4294901760
    %2049 = vmatpush1.msra.mxu0 %v2048
    %2050 = vmatprep.subr.mxu0 0.0
    %v2051 = vand.u32 %v95, 4294901760
    %v2052 = vsub.f32 %v95, %v2051
    %v2053 = vand.u32 %v2052, 4294901760
    %v2054 = vsub.f32 %v2052, %v2053
    %v2055 = vand.u32 %v2054, 4294901760
    %2056 = vmatpush1.msra.mxu0 %v2055
    %2057 = vmatprep.subr.mxu0 0.0
    %v2058 = vand.u32 %v94, 4294901760
    %v2059 = vsub.f32 %v94, %v2058
    %v2060 = vand.u32 %v2059, 4294901760
    %v2061 = vsub.f32 %v2059, %v2060
    %v2062 = vand.u32 %v2061, 4294901760
    %2063 = vmatpush1.msra.mxu0 %v2062
    %2064 = vmatprep.subr.mxu0 0.0
    %v2065 = vand.u32 %v93, 4294901760
    %v2066 = vsub.f32 %v93, %v2065
    %v2067 = vand.u32 %v2066, 4294901760
    %v2068 = vsub.f32 %v2066, %v2067
    %v2069 = vand.u32 %v2068, 4294901760
    %2070 = vmatpush1.msra.mxu0 %v2069
    %2071 = vmatprep.subr.mxu0 0.0
    %v2072 = vand.u32 %v92, 4294901760
    %v2073 = vsub.f32 %v92, %v2072
    %v2074 = vand.u32 %v2073, 4294901760
    %v2075 = vsub.f32 %v2073, %v2074
    %v2076 = vand.u32 %v2075, 4294901760
    %2077 = vmatpush1.msra.mxu0 %v2076
    %2078 = vmatprep.subr.mxu0 0.0
    %v2079 = vand.u32 %v91, 4294901760
    %v2080 = vsub.f32 %v91, %v2079
    %v2081 = vand.u32 %v2080, 4294901760
    %v2082 = vsub.f32 %v2080, %v2081
    %v2083 = vand.u32 %v2082, 4294901760
    %2084 = vmatpush1.msra.mxu0 %v2083
    %2085 = vmatprep.subr.mxu0 0.0
    %v2086 = vand.u32 %v90, 4294901760
    %v2087 = vsub.f32 %v90, %v2086
    %v2088 = vand.u32 %v2087, 4294901760
    %v2089 = vsub.f32 %v2087, %v2088
    %v2090 = vand.u32 %v2089, 4294901760
    %2091 = vmatpush1.msra.mxu0 %v2090
    %2092 = vmatprep.subr.mxu0 0.0
    %v2093 = vand.u32 %v89, 4294901760
    %v2094 = vsub.f32 %v89, %v2093
    %v2095 = vand.u32 %v2094, 4294901760
    %v2096 = vsub.f32 %v2094, %v2095
    %v2097 = vand.u32 %v2096, 4294901760
    %2098 = vmatpush1.msra.mxu0 %v2097
    %2099 = vmatprep.subr.mxu0 0.0
    %v2100 = vand.u32 %v88, 4294901760
    %v2101 = vsub.f32 %v88, %v2100
    %v2102 = vand.u32 %v2101, 4294901760
    %v2103 = vsub.f32 %v2101, %v2102
    %v2104 = vand.u32 %v2103, 4294901760
    %2105 = vmatpush1.msra.mxu0 %v2104
    %2106 = vmatprep.subr.mxu0 0.0
    %v2107 = vand.u32 %v87, 4294901760
    %v2108 = vsub.f32 %v87, %v2107
    %v2109 = vand.u32 %v2108, 4294901760
    %v2110 = vsub.f32 %v2108, %v2109
    %v2111 = vand.u32 %v2110, 4294901760
    %2112 = vmatpush1.msra.mxu0 %v2111
    %2113 = vmatprep.subr.mxu0 0.0
    %v2114 = vand.u32 %v118, 4294901760
    %v2115 = vsub.f32 %v118, %v2114
    %v2116 = vand.u32 %v2115, 4294901760
    %v2117 = vsub.f32 %v2115, %v2116
    %v2118 = vand.u32 %v2117, 4294901760
    %2119 = vmatpush2.msra.mxu0 %v2118
    %2120 = vmatprep.subr.mxu0 0.0
    %v2121 = vand.u32 %v117, 4294901760
    %v2122 = vsub.f32 %v117, %v2121
    %v2123 = vand.u32 %v2122, 4294901760
    %v2124 = vsub.f32 %v2122, %v2123
    %v2125 = vand.u32 %v2124, 4294901760
    %2126 = vmatpush2.msra.mxu0 %v2125
    %2127 = vmatprep.subr.mxu0 0.0
    %v2128 = vand.u32 %v116, 4294901760
    %v2129 = vsub.f32 %v116, %v2128
    %v2130 = vand.u32 %v2129, 4294901760
    %v2131 = vsub.f32 %v2129, %v2130
    %v2132 = vand.u32 %v2131, 4294901760
    %2133 = vmatpush2.msra.mxu0 %v2132
    %2134 = vmatprep.subr.mxu0 0.0
    %v2135 = vand.u32 %v115, 4294901760
    %v2136 = vsub.f32 %v115, %v2135
    %v2137 = vand.u32 %v2136, 4294901760
    %v2138 = vsub.f32 %v2136, %v2137
    %v2139 = vand.u32 %v2138, 4294901760
    %2140 = vmatpush2.msra.mxu0 %v2139
    %2141 = vmatprep.subr.mxu0 0.0
    %v2142 = vand.u32 %v114, 4294901760
    %v2143 = vsub.f32 %v114, %v2142
    %v2144 = vand.u32 %v2143, 4294901760
    %v2145 = vsub.f32 %v2143, %v2144
    %v2146 = vand.u32 %v2145, 4294901760
    %2147 = vmatpush2.msra.mxu0 %v2146
    %2148 = vmatprep.subr.mxu0 0.0
    %v2149 = vand.u32 %v113, 4294901760
    %v2150 = vsub.f32 %v113, %v2149
    %v2151 = vand.u32 %v2150, 4294901760
    %v2152 = vsub.f32 %v2150, %v2151
    %v2153 = vand.u32 %v2152, 4294901760
    %2154 = vmatpush2.msra.mxu0 %v2153
    %2155 = vmatprep.subr.mxu0 0.0
    %v2156 = vand.u32 %v112, 4294901760
    %v2157 = vsub.f32 %v112, %v2156
    %v2158 = vand.u32 %v2157, 4294901760
    %v2159 = vsub.f32 %v2157, %v2158
    %v2160 = vand.u32 %v2159, 4294901760
    %2161 = vmatpush2.msra.mxu0 %v2160
    %2162 = vmatprep.subr.mxu0 0.0
    %v2163 = vand.u32 %v111, 4294901760
    %v2164 = vsub.f32 %v111, %v2163
    %v2165 = vand.u32 %v2164, 4294901760
    %v2166 = vsub.f32 %v2164, %v2165
    %v2167 = vand.u32 %v2166, 4294901760
    %2168 = vmatpush2.msra.mxu0 %v2167
    %2169 = vmatprep.subr.mxu0 0.0
    %v2170 = vand.u32 %v110, 4294901760
    %v2171 = vsub.f32 %v110, %v2170
    %v2172 = vand.u32 %v2171, 4294901760
    %v2173 = vsub.f32 %v2171, %v2172
    %v2174 = vand.u32 %v2173, 4294901760
    %2175 = vmatpush2.msra.mxu0 %v2174
    %2176 = vmatprep.subr.mxu0 0.0
    %v2177 = vand.u32 %v109, 4294901760
    %v2178 = vsub.f32 %v109, %v2177
    %v2179 = vand.u32 %v2178, 4294901760
    %v2180 = vsub.f32 %v2178, %v2179
    %v2181 = vand.u32 %v2180, 4294901760
    %2182 = vmatpush2.msra.mxu0 %v2181
    %2183 = vmatprep.subr.mxu0 0.0
    %v2184 = vand.u32 %v108, 4294901760
    %v2185 = vsub.f32 %v108, %v2184
    %v2186 = vand.u32 %v2185, 4294901760
    %v2187 = vsub.f32 %v2185, %v2186
    %v2188 = vand.u32 %v2187, 4294901760
    %2189 = vmatpush2.msra.mxu0 %v2188
    %2190 = vmatprep.subr.mxu0 0.0
    %v2191 = vand.u32 %v107, 4294901760
    %v2192 = vsub.f32 %v107, %v2191
    %v2193 = vand.u32 %v2192, 4294901760
    %v2194 = vsub.f32 %v2192, %v2193
    %v2195 = vand.u32 %v2194, 4294901760
    %2196 = vmatpush2.msra.mxu0 %v2195
    %2197 = vmatprep.subr.mxu0 0.0
    %v2198 = vand.u32 %v106, 4294901760
    %v2199 = vsub.f32 %v106, %v2198
    %v2200 = vand.u32 %v2199, 4294901760
    %v2201 = vsub.f32 %v2199, %v2200
    %v2202 = vand.u32 %v2201, 4294901760
    %2203 = vmatpush2.msra.mxu0 %v2202
    %2204 = vmatprep.subr.mxu0 0.0
    %v2205 = vand.u32 %v105, 4294901760
    %v2206 = vsub.f32 %v105, %v2205
    %v2207 = vand.u32 %v2206, 4294901760
    %v2208 = vsub.f32 %v2206, %v2207
    %v2209 = vand.u32 %v2208, 4294901760
    %2210 = vmatpush2.msra.mxu0 %v2209
    %2211 = vmatprep.subr.mxu0 0.0
    %v2212 = vand.u32 %v104, 4294901760
    %v2213 = vsub.f32 %v104, %v2212
    %v2214 = vand.u32 %v2213, 4294901760
    %v2215 = vsub.f32 %v2213, %v2214
    %v2216 = vand.u32 %v2215, 4294901760
    %2217 = vmatpush2.msra.mxu0 %v2216
    %2218 = vmatprep.subr.mxu0 0.0
    %v2219 = vand.u32 %v103, 4294901760
    %v2220 = vsub.f32 %v103, %v2219
    %v2221 = vand.u32 %v2220, 4294901760
    %v2222 = vsub.f32 %v2220, %v2221
    %v2223 = vand.u32 %v2222, 4294901760
    %2224 = vmatpush2.msra.mxu0 %v2223
    %v2225 = vand.u32 %v155, 4294901760
    %2226 = vmatprep.mubr.f32.mxu0 %v2225
    %v2227 = vand.u32 %v147, 4294901760
    %2228 = vmatmul.mubr.f32.gmra.mxu0 %v2227
    %v2229 = vpop.f32.mrf.mxu0
    %v2230 = vadd.f32 %v1998, %v2229
    %v2231 = vpop.f32.mrf.mxu0
    %2232 = vdwg.mxu0
    %2233 = vmatprep.subr.mxu0 0.0
    %v2234 = vand.u32 %v102, 4294901760
    %v2235 = vsub.f32 %v102, %v2234
    %2236 = vmatpush1.msra.mxu0 %v2235
    %2237 = vmatprep.subr.mxu0 0.0
    %v2238 = vand.u32 %v101, 4294901760
    %v2239 = vsub.f32 %v101, %v2238
    %2240 = vmatpush1.msra.mxu0 %v2239
    %2241 = vmatprep.subr.mxu0 0.0
    %v2242 = vand.u32 %v100, 4294901760
    %v2243 = vsub.f32 %v100, %v2242
    %2244 = vmatpush1.msra.mxu0 %v2243
    %2245 = vmatprep.subr.mxu0 0.0
    %v2246 = vand.u32 %v99, 4294901760
    %v2247 = vsub.f32 %v99, %v2246
    %2248 = vmatpush1.msra.mxu0 %v2247
    %2249 = vmatprep.subr.mxu0 0.0
    %v2250 = vand.u32 %v98, 4294901760
    %v2251 = vsub.f32 %v98, %v2250
    %2252 = vmatpush1.msra.mxu0 %v2251
    %2253 = vmatprep.subr.mxu0 0.0
    %v2254 = vand.u32 %v97, 4294901760
    %v2255 = vsub.f32 %v97, %v2254
    %2256 = vmatpush1.msra.mxu0 %v2255
    %2257 = vmatprep.subr.mxu0 0.0
    %v2258 = vand.u32 %v96, 4294901760
    %v2259 = vsub.f32 %v96, %v2258
    %2260 = vmatpush1.msra.mxu0 %v2259
    %2261 = vmatprep.subr.mxu0 0.0
    %v2262 = vand.u32 %v95, 4294901760
    %v2263 = vsub.f32 %v95, %v2262
    %2264 = vmatpush1.msra.mxu0 %v2263
    %2265 = vmatprep.subr.mxu0 0.0
    %v2266 = vand.u32 %v94, 4294901760
    %v2267 = vsub.f32 %v94, %v2266
    %2268 = vmatpush1.msra.mxu0 %v2267
    %2269 = vmatprep.subr.mxu0 0.0
    %v2270 = vand.u32 %v93, 4294901760
    %v2271 = vsub.f32 %v93, %v2270
    %2272 = vmatpush1.msra.mxu0 %v2271
    %2273 = vmatprep.subr.mxu0 0.0
    %v2274 = vand.u32 %v92, 4294901760
    %v2275 = vsub.f32 %v92, %v2274
    %2276 = vmatpush1.msra.mxu0 %v2275
    %2277 = vmatprep.subr.mxu0 0.0
    %v2278 = vand.u32 %v91, 4294901760
    %v2279 = vsub.f32 %v91, %v2278
    %2280 = vmatpush1.msra.mxu0 %v2279
    %2281 = vmatprep.subr.mxu0 0.0
    %v2282 = vand.u32 %v90, 4294901760
    %v2283 = vsub.f32 %v90, %v2282
    %2284 = vmatpush1.msra.mxu0 %v2283
    %2285 = vmatprep.subr.mxu0 0.0
    %v2286 = vand.u32 %v89, 4294901760
    %v2287 = vsub.f32 %v89, %v2286
    %2288 = vmatpush1.msra.mxu0 %v2287
    %2289 = vmatprep.subr.mxu0 0.0
    %v2290 = vand.u32 %v88, 4294901760
    %v2291 = vsub.f32 %v88, %v2290
    %2292 = vmatpush1.msra.mxu0 %v2291
    %2293 = vmatprep.subr.mxu0 0.0
    %v2294 = vand.u32 %v87, 4294901760
    %v2295 = vsub.f32 %v87, %v2294
    %2296 = vmatpush1.msra.mxu0 %v2295
    %2297 = vmatprep.subr.mxu0 0.0
    %v2298 = vand.u32 %v118, 4294901760
    %v2299 = vsub.f32 %v118, %v2298
    %2300 = vmatpush2.msra.mxu0 %v2299
    %2301 = vmatprep.subr.mxu0 0.0
    %v2302 = vand.u32 %v117, 4294901760
    %v2303 = vsub.f32 %v117, %v2302
    %2304 = vmatpush2.msra.mxu0 %v2303
    %2305 = vmatprep.subr.mxu0 0.0
    %v2306 = vand.u32 %v116, 4294901760
    %v2307 = vsub.f32 %v116, %v2306
    %2308 = vmatpush2.msra.mxu0 %v2307
    %2309 = vmatprep.subr.mxu0 0.0
    %v2310 = vand.u32 %v115, 4294901760
    %v2311 = vsub.f32 %v115, %v2310
    %2312 = vmatpush2.msra.mxu0 %v2311
    %2313 = vmatprep.subr.mxu0 0.0
    %v2314 = vand.u32 %v114, 4294901760
    %v2315 = vsub.f32 %v114, %v2314
    %2316 = vmatpush2.msra.mxu0 %v2315
    %2317 = vmatprep.subr.mxu0 0.0
    %v2318 = vand.u32 %v113, 4294901760
    %v2319 = vsub.f32 %v113, %v2318
    %2320 = vmatpush2.msra.mxu0 %v2319
    %2321 = vmatprep.subr.mxu0 0.0
    %v2322 = vand.u32 %v112, 4294901760
    %v2323 = vsub.f32 %v112, %v2322
    %2324 = vmatpush2.msra.mxu0 %v2323
    %2325 = vmatprep.subr.mxu0 0.0
    %v2326 = vand.u32 %v111, 4294901760
    %v2327 = vsub.f32 %v111, %v2326
    %2328 = vmatpush2.msra.mxu0 %v2327
    %2329 = vmatprep.subr.mxu0 0.0
    %v2330 = vand.u32 %v110, 4294901760
    %v2331 = vsub.f32 %v110, %v2330
    %2332 = vmatpush2.msra.mxu0 %v2331
    %2333 = vmatprep.subr.mxu0 0.0
    %v2334 = vand.u32 %v109, 4294901760
    %v2335 = vsub.f32 %v109, %v2334
    %2336 = vmatpush2.msra.mxu0 %v2335
    %2337 = vmatprep.subr.mxu0 0.0
    %v2338 = vand.u32 %v108, 4294901760
    %v2339 = vsub.f32 %v108, %v2338
    %2340 = vmatpush2.msra.mxu0 %v2339
    %2341 = vmatprep.subr.mxu0 0.0
    %v2342 = vand.u32 %v107, 4294901760
    %v2343 = vsub.f32 %v107, %v2342
    %2344 = vmatpush2.msra.mxu0 %v2343
    %2345 = vmatprep.subr.mxu0 0.0
    %v2346 = vand.u32 %v106, 4294901760
    %v2347 = vsub.f32 %v106, %v2346
    %2348 = vmatpush2.msra.mxu0 %v2347
    %2349 = vmatprep.subr.mxu0 0.0
    %v2350 = vand.u32 %v105, 4294901760
    %v2351 = vsub.f32 %v105, %v2350
    %2352 = vmatpush2.msra.mxu0 %v2351
    %2353 = vmatprep.subr.mxu0 0.0
    %v2354 = vand.u32 %v104, 4294901760
    %v2355 = vsub.f32 %v104, %v2354
    %2356 = vmatpush2.msra.mxu0 %v2355
    %2357 = vmatprep.subr.mxu0 0.0
    %v2358 = vand.u32 %v103, 4294901760
    %v2359 = vsub.f32 %v103, %v2358
    %2360 = vmatpush2.msra.mxu0 %v2359
    %v2361 = vand.u32 %v155, 4294901760
    %v2362 = vsub.f32 %v155, %v2361
    %2363 = vmatprep.mubr.f32.mxu0 %v2362
    %v2364 = vand.u32 %v147, 4294901760
    %v2365 = vsub.f32 %v147, %v2364
    %2366 = vmatmul.mubr.f32.gmra.mxu0 %v2365
    %v2367 = vpop.f32.mrf.mxu0
    %v2368 = vadd.f32 %v2230, %v2367
    %v2369 = vpop.f32.mrf.mxu0
    %2370 = vdwg.mxu0
    %2371 = vmatprep.subr.mxu0 0.0
    %v2372 = vand.u32 %v102, 4294901760
    %2373 = vmatpush1.msra.mxu0 %v2372
    %2374 = vmatprep.subr.mxu0 0.0
    %v2375 = vand.u32 %v101, 4294901760
    %2376 = vmatpush1.msra.mxu0 %v2375
    %2377 = vmatprep.subr.mxu0 0.0
    %v2378 = vand.u32 %v100, 4294901760
    %2379 = vmatpush1.msra.mxu0 %v2378
    %2380 = vmatprep.subr.mxu0 0.0
    %v2381 = vand.u32 %v99, 4294901760
    %2382 = vmatpush1.msra.mxu0 %v2381
    %2383 = vmatprep.subr.mxu0 0.0
    %v2384 = vand.u32 %v98, 4294901760
    %2385 = vmatpush1.msra.mxu0 %v2384
    %2386 = vmatprep.subr.mxu0 0.0
    %v2387 = vand.u32 %v97, 4294901760
    %2388 = vmatpush1.msra.mxu0 %v2387
    %2389 = vmatprep.subr.mxu0 0.0
    %v2390 = vand.u32 %v96, 4294901760
    %2391 = vmatpush1.msra.mxu0 %v2390
    %2392 = vmatprep.subr.mxu0 0.0
    %v2393 = vand.u32 %v95, 4294901760
    %2394 = vmatpush1.msra.mxu0 %v2393
    %2395 = vmatprep.subr.mxu0 0.0
    %v2396 = vand.u32 %v94, 4294901760
    %2397 = vmatpush1.msra.mxu0 %v2396
    %2398 = vmatprep.subr.mxu0 0.0
    %v2399 = vand.u32 %v93, 4294901760
    %2400 = vmatpush1.msra.mxu0 %v2399
    %2401 = vmatprep.subr.mxu0 0.0
    %v2402 = vand.u32 %v92, 4294901760
    %2403 = vmatpush1.msra.mxu0 %v2402
    %2404 = vmatprep.subr.mxu0 0.0
    %v2405 = vand.u32 %v91, 4294901760
    %2406 = vmatpush1.msra.mxu0 %v2405
    %2407 = vmatprep.subr.mxu0 0.0
    %v2408 = vand.u32 %v90, 4294901760
    %2409 = vmatpush1.msra.mxu0 %v2408
    %2410 = vmatprep.subr.mxu0 0.0
    %v2411 = vand.u32 %v89, 4294901760
    %2412 = vmatpush1.msra.mxu0 %v2411
    %2413 = vmatprep.subr.mxu0 0.0
    %v2414 = vand.u32 %v88, 4294901760
    %2415 = vmatpush1.msra.mxu0 %v2414
    %2416 = vmatprep.subr.mxu0 0.0
    %v2417 = vand.u32 %v87, 4294901760
    %2418 = vmatpush1.msra.mxu0 %v2417
    %2419 = vmatprep.subr.mxu0 0.0
    %v2420 = vand.u32 %v118, 4294901760
    %2421 = vmatpush2.msra.mxu0 %v2420
    %2422 = vmatprep.subr.mxu0 0.0
    %v2423 = vand.u32 %v117, 4294901760
    %2424 = vmatpush2.msra.mxu0 %v2423
    %2425 = vmatprep.subr.mxu0 0.0
    %v2426 = vand.u32 %v116, 4294901760
    %2427 = vmatpush2.msra.mxu0 %v2426
    %2428 = vmatprep.subr.mxu0 0.0
    %v2429 = vand.u32 %v115, 4294901760
    %2430 = vmatpush2.msra.mxu0 %v2429
    %2431 = vmatprep.subr.mxu0 0.0
    %v2432 = vand.u32 %v114, 4294901760
    %2433 = vmatpush2.msra.mxu0 %v2432
    %2434 = vmatprep.subr.mxu0 0.0
    %v2435 = vand.u32 %v113, 4294901760
    %2436 = vmatpush2.msra.mxu0 %v2435
    %2437 = vmatprep.subr.mxu0 0.0
    %v2438 = vand.u32 %v112, 4294901760
    %2439 = vmatpush2.msra.mxu0 %v2438
    %2440 = vmatprep.subr.mxu0 0.0
    %v2441 = vand.u32 %v111, 4294901760
    %2442 = vmatpush2.msra.mxu0 %v2441
    %2443 = vmatprep.subr.mxu0 0.0
    %v2444 = vand.u32 %v110, 4294901760
    %2445 = vmatpush2.msra.mxu0 %v2444
    %2446 = vmatprep.subr.mxu0 0.0
    %v2447 = vand.u32 %v109, 4294901760
    %2448 = vmatpush2.msra.mxu0 %v2447
    %2449 = vmatprep.subr.mxu0 0.0
    %v2450 = vand.u32 %v108, 4294901760
    %2451 = vmatpush2.msra.mxu0 %v2450
    %2452 = vmatprep.subr.mxu0 0.0
    %v2453 = vand.u32 %v107, 4294901760
    %2454 = vmatpush2.msra.mxu0 %v2453
    %2455 = vmatprep.subr.mxu0 0.0
    %v2456 = vand.u32 %v106, 4294901760
    %2457 = vmatpush2.msra.mxu0 %v2456
    %2458 = vmatprep.subr.mxu0 0.0
    %v2459 = vand.u32 %v105, 4294901760
    %2460 = vmatpush2.msra.mxu0 %v2459
    %2461 = vmatprep.subr.mxu0 0.0
    %v2462 = vand.u32 %v104, 4294901760
    %2463 = vmatpush2.msra.mxu0 %v2462
    %2464 = vmatprep.subr.mxu0 0.0
    %v2465 = vand.u32 %v103, 4294901760
    %2466 = vmatpush2.msra.mxu0 %v2465
    %v2467 = vand.u32 %v155, 4294901760
    %v2468 = vsub.f32 %v155, %v2467
    %v2469 = vand.u32 %v2468, 4294901760
    %2470 = vmatprep.mubr.f32.mxu0 %v2469
    %v2471 = vand.u32 %v147, 4294901760
    %v2472 = vsub.f32 %v147, %v2471
    %v2473 = vand.u32 %v2472, 4294901760
    %2474 = vmatmul.mubr.f32.gmra.mxu0 %v2473
    %v2475 = vpop.f32.mrf.mxu0
    %v2476 = vadd.f32 %v2368, %v2475
    %v2477 = vpop.f32.mrf.mxu0
    %2478 = vdwg.mxu0
    %2479 = vmatprep.subr.mxu0 0.0
    %v2480 = vand.u32 %v102, 4294901760
    %v2481 = vsub.f32 %v102, %v2480
    %v2482 = vand.u32 %v2481, 4294901760
    %2483 = vmatpush1.msra.mxu0 %v2482
    %2484 = vmatprep.subr.mxu0 0.0
    %v2485 = vand.u32 %v101, 4294901760
    %v2486 = vsub.f32 %v101, %v2485
    %v2487 = vand.u32 %v2486, 4294901760
    %2488 = vmatpush1.msra.mxu0 %v2487
    %2489 = vmatprep.subr.mxu0 0.0
    %v2490 = vand.u32 %v100, 4294901760
    %v2491 = vsub.f32 %v100, %v2490
    %v2492 = vand.u32 %v2491, 4294901760
    %2493 = vmatpush1.msra.mxu0 %v2492
    %2494 = vmatprep.subr.mxu0 0.0
    %v2495 = vand.u32 %v99, 4294901760
    %v2496 = vsub.f32 %v99, %v2495
    %v2497 = vand.u32 %v2496, 4294901760
    %2498 = vmatpush1.msra.mxu0 %v2497
    %2499 = vmatprep.subr.mxu0 0.0
    %v2500 = vand.u32 %v98, 4294901760
    %v2501 = vsub.f32 %v98, %v2500
    %v2502 = vand.u32 %v2501, 4294901760
    %2503 = vmatpush1.msra.mxu0 %v2502
    %2504 = vmatprep.subr.mxu0 0.0
    %v2505 = vand.u32 %v97, 4294901760
    %v2506 = vsub.f32 %v97, %v2505
    %v2507 = vand.u32 %v2506, 4294901760
    %2508 = vmatpush1.msra.mxu0 %v2507
    %2509 = vmatprep.subr.mxu0 0.0
    %v2510 = vand.u32 %v96, 4294901760
    %v2511 = vsub.f32 %v96, %v2510
    %v2512 = vand.u32 %v2511, 4294901760
    %2513 = vmatpush1.msra.mxu0 %v2512
    %2514 = vmatprep.subr.mxu0 0.0
    %v2515 = vand.u32 %v95, 4294901760
    %v2516 = vsub.f32 %v95, %v2515
    %v2517 = vand.u32 %v2516, 4294901760
    %2518 = vmatpush1.msra.mxu0 %v2517
    %2519 = vmatprep.subr.mxu0 0.0
    %v2520 = vand.u32 %v94, 4294901760
    %v2521 = vsub.f32 %v94, %v2520
    %v2522 = vand.u32 %v2521, 4294901760
    %2523 = vmatpush1.msra.mxu0 %v2522
    %2524 = vmatprep.subr.mxu0 0.0
    %v2525 = vand.u32 %v93, 4294901760
    %v2526 = vsub.f32 %v93, %v2525
    %v2527 = vand.u32 %v2526, 4294901760
    %2528 = vmatpush1.msra.mxu0 %v2527
    %2529 = vmatprep.subr.mxu0 0.0
    %v2530 = vand.u32 %v92, 4294901760
    %v2531 = vsub.f32 %v92, %v2530
    %v2532 = vand.u32 %v2531, 4294901760
    %2533 = vmatpush1.msra.mxu0 %v2532
    %2534 = vmatprep.subr.mxu0 0.0
    %v2535 = vand.u32 %v91, 4294901760
    %v2536 = vsub.f32 %v91, %v2535
    %v2537 = vand.u32 %v2536, 4294901760
    %2538 = vmatpush1.msra.mxu0 %v2537
    %2539 = vmatprep.subr.mxu0 0.0
    %v2540 = vand.u32 %v90, 4294901760
    %v2541 = vsub.f32 %v90, %v2540
    %v2542 = vand.u32 %v2541, 4294901760
    %2543 = vmatpush1.msra.mxu0 %v2542
    %2544 = vmatprep.subr.mxu0 0.0
    %v2545 = vand.u32 %v89, 4294901760
    %v2546 = vsub.f32 %v89, %v2545
    %v2547 = vand.u32 %v2546, 4294901760
    %2548 = vmatpush1.msra.mxu0 %v2547
    %2549 = vmatprep.subr.mxu0 0.0
    %v2550 = vand.u32 %v88, 4294901760
    %v2551 = vsub.f32 %v88, %v2550
    %v2552 = vand.u32 %v2551, 4294901760
    %2553 = vmatpush1.msra.mxu0 %v2552
    %2554 = vmatprep.subr.mxu0 0.0
    %v2555 = vand.u32 %v87, 4294901760
    %v2556 = vsub.f32 %v87, %v2555
    %v2557 = vand.u32 %v2556, 4294901760
    %2558 = vmatpush1.msra.mxu0 %v2557
    %2559 = vmatprep.subr.mxu0 0.0
    %v2560 = vand.u32 %v118, 4294901760
    %v2561 = vsub.f32 %v118, %v2560
    %v2562 = vand.u32 %v2561, 4294901760
    %2563 = vmatpush2.msra.mxu0 %v2562
    %2564 = vmatprep.subr.mxu0 0.0
    %v2565 = vand.u32 %v117, 4294901760
    %v2566 = vsub.f32 %v117, %v2565
    %v2567 = vand.u32 %v2566, 4294901760
    %2568 = vmatpush2.msra.mxu0 %v2567
    %2569 = vmatprep.subr.mxu0 0.0
    %v2570 = vand.u32 %v116, 4294901760
    %v2571 = vsub.f32 %v116, %v2570
    %v2572 = vand.u32 %v2571, 4294901760
    %2573 = vmatpush2.msra.mxu0 %v2572
    %2574 = vmatprep.subr.mxu0 0.0
    %v2575 = vand.u32 %v115, 4294901760
    %v2576 = vsub.f32 %v115, %v2575
    %v2577 = vand.u32 %v2576, 4294901760
    %2578 = vmatpush2.msra.mxu0 %v2577
    %2579 = vmatprep.subr.mxu0 0.0
    %v2580 = vand.u32 %v114, 4294901760
    %v2581 = vsub.f32 %v114, %v2580
    %v2582 = vand.u32 %v2581, 4294901760
    %2583 = vmatpush2.msra.mxu0 %v2582
    %2584 = vmatprep.subr.mxu0 0.0
    %v2585 = vand.u32 %v113, 4294901760
    %v2586 = vsub.f32 %v113, %v2585
    %v2587 = vand.u32 %v2586, 4294901760
    %2588 = vmatpush2.msra.mxu0 %v2587
    %2589 = vmatprep.subr.mxu0 0.0
    %v2590 = vand.u32 %v112, 4294901760
    %v2591 = vsub.f32 %v112, %v2590
    %v2592 = vand.u32 %v2591, 4294901760
    %2593 = vmatpush2.msra.mxu0 %v2592
    %2594 = vmatprep.subr.mxu0 0.0
    %v2595 = vand.u32 %v111, 4294901760
    %v2596 = vsub.f32 %v111, %v2595
    %v2597 = vand.u32 %v2596, 4294901760
    %2598 = vmatpush2.msra.mxu0 %v2597
    %2599 = vmatprep.subr.mxu0 0.0
    %v2600 = vand.u32 %v110, 4294901760
    %v2601 = vsub.f32 %v110, %v2600
    %v2602 = vand.u32 %v2601, 4294901760
    %2603 = vmatpush2.msra.mxu0 %v2602
    %2604 = vmatprep.subr.mxu0 0.0
    %v2605 = vand.u32 %v109, 4294901760
    %v2606 = vsub.f32 %v109, %v2605
    %v2607 = vand.u32 %v2606, 4294901760
    %2608 = vmatpush2.msra.mxu0 %v2607
    %2609 = vmatprep.subr.mxu0 0.0
    %v2610 = vand.u32 %v108, 4294901760
    %v2611 = vsub.f32 %v108, %v2610
    %v2612 = vand.u32 %v2611, 4294901760
    %2613 = vmatpush2.msra.mxu0 %v2612
    %2614 = vmatprep.subr.mxu0 0.0
    %v2615 = vand.u32 %v107, 4294901760
    %v2616 = vsub.f32 %v107, %v2615
    %v2617 = vand.u32 %v2616, 4294901760
    %2618 = vmatpush2.msra.mxu0 %v2617
    %2619 = vmatprep.subr.mxu0 0.0
    %v2620 = vand.u32 %v106, 4294901760
    %v2621 = vsub.f32 %v106, %v2620
    %v2622 = vand.u32 %v2621, 4294901760
    %2623 = vmatpush2.msra.mxu0 %v2622
    %2624 = vmatprep.subr.mxu0 0.0
    %v2625 = vand.u32 %v105, 4294901760
    %v2626 = vsub.f32 %v105, %v2625
    %v2627 = vand.u32 %v2626, 4294901760
    %2628 = vmatpush2.msra.mxu0 %v2627
    %2629 = vmatprep.subr.mxu0 0.0
    %v2630 = vand.u32 %v104, 4294901760
    %v2631 = vsub.f32 %v104, %v2630
    %v2632 = vand.u32 %v2631, 4294901760
    %2633 = vmatpush2.msra.mxu0 %v2632
    %2634 = vmatprep.subr.mxu0 0.0
    %v2635 = vand.u32 %v103, 4294901760
    %v2636 = vsub.f32 %v103, %v2635
    %v2637 = vand.u32 %v2636, 4294901760
    %2638 = vmatpush2.msra.mxu0 %v2637
    %v2639 = vand.u32 %v155, 4294901760
    %2640 = vmatprep.mubr.f32.mxu0 %v2639
    %v2641 = vand.u32 %v147, 4294901760
    %2642 = vmatmul.mubr.f32.gmra.mxu0 %v2641
    %v2643 = vpop.f32.mrf.mxu0
    %v2644 = vadd.f32 %v2476, %v2643
    %v2645 = vpop.f32.mrf.mxu0
    %2646 = vdwg.mxu0
    %2647 = vmatprep.subr.mxu0 0.0
    %v2648 = vand.u32 %v102, 4294901760
    %2649 = vmatpush1.msra.mxu0 %v2648
    %2650 = vmatprep.subr.mxu0 0.0
    %v2651 = vand.u32 %v101, 4294901760
    %2652 = vmatpush1.msra.mxu0 %v2651
    %2653 = vmatprep.subr.mxu0 0.0
    %v2654 = vand.u32 %v100, 4294901760
    %2655 = vmatpush1.msra.mxu0 %v2654
    %2656 = vmatprep.subr.mxu0 0.0
    %v2657 = vand.u32 %v99, 4294901760
    %2658 = vmatpush1.msra.mxu0 %v2657
    %2659 = vmatprep.subr.mxu0 0.0
    %v2660 = vand.u32 %v98, 4294901760
    %2661 = vmatpush1.msra.mxu0 %v2660
    %2662 = vmatprep.subr.mxu0 0.0
    %v2663 = vand.u32 %v97, 4294901760
    %2664 = vmatpush1.msra.mxu0 %v2663
    %2665 = vmatprep.subr.mxu0 0.0
    %v2666 = vand.u32 %v96, 4294901760
    %2667 = vmatpush1.msra.mxu0 %v2666
    %2668 = vmatprep.subr.mxu0 0.0
    %v2669 = vand.u32 %v95, 4294901760
    %2670 = vmatpush1.msra.mxu0 %v2669
    %2671 = vmatprep.subr.mxu0 0.0
    %v2672 = vand.u32 %v94, 4294901760
    %2673 = vmatpush1.msra.mxu0 %v2672
    %2674 = vmatprep.subr.mxu0 0.0
    %v2675 = vand.u32 %v93, 4294901760
    %2676 = vmatpush1.msra.mxu0 %v2675
    %2677 = vmatprep.subr.mxu0 0.0
    %v2678 = vand.u32 %v92, 4294901760
    %2679 = vmatpush1.msra.mxu0 %v2678
    %2680 = vmatprep.subr.mxu0 0.0
    %v2681 = vand.u32 %v91, 4294901760
    %2682 = vmatpush1.msra.mxu0 %v2681
    %2683 = vmatprep.subr.mxu0 0.0
    %v2684 = vand.u32 %v90, 4294901760
    %2685 = vmatpush1.msra.mxu0 %v2684
    %2686 = vmatprep.subr.mxu0 0.0
    %v2687 = vand.u32 %v89, 4294901760
    %2688 = vmatpush1.msra.mxu0 %v2687
    %2689 = vmatprep.subr.mxu0 0.0
    %v2690 = vand.u32 %v88, 4294901760
    %2691 = vmatpush1.msra.mxu0 %v2690
    %2692 = vmatprep.subr.mxu0 0.0
    %v2693 = vand.u32 %v87, 4294901760
    %2694 = vmatpush1.msra.mxu0 %v2693
    %2695 = vmatprep.subr.mxu0 0.0
    %v2696 = vand.u32 %v118, 4294901760
    %2697 = vmatpush2.msra.mxu0 %v2696
    %2698 = vmatprep.subr.mxu0 0.0
    %v2699 = vand.u32 %v117, 4294901760
    %2700 = vmatpush2.msra.mxu0 %v2699
    %2701 = vmatprep.subr.mxu0 0.0
    %v2702 = vand.u32 %v116, 4294901760
    %2703 = vmatpush2.msra.mxu0 %v2702
    %2704 = vmatprep.subr.mxu0 0.0
    %v2705 = vand.u32 %v115, 4294901760
    %2706 = vmatpush2.msra.mxu0 %v2705
    %2707 = vmatprep.subr.mxu0 0.0
    %v2708 = vand.u32 %v114, 4294901760
    %2709 = vmatpush2.msra.mxu0 %v2708
    %2710 = vmatprep.subr.mxu0 0.0
    %v2711 = vand.u32 %v113, 4294901760
    %2712 = vmatpush2.msra.mxu0 %v2711
    %2713 = vmatprep.subr.mxu0 0.0
    %v2714 = vand.u32 %v112, 4294901760
    %2715 = vmatpush2.msra.mxu0 %v2714
    %2716 = vmatprep.subr.mxu0 0.0
    %v2717 = vand.u32 %v111, 4294901760
    %2718 = vmatpush2.msra.mxu0 %v2717
    %2719 = vmatprep.subr.mxu0 0.0
    %v2720 = vand.u32 %v110, 4294901760
    %2721 = vmatpush2.msra.mxu0 %v2720
    %2722 = vmatprep.subr.mxu0 0.0
    %v2723 = vand.u32 %v109, 4294901760
    %2724 = vmatpush2.msra.mxu0 %v2723
    %2725 = vmatprep.subr.mxu0 0.0
    %v2726 = vand.u32 %v108, 4294901760
    %2727 = vmatpush2.msra.mxu0 %v2726
    %2728 = vmatprep.subr.mxu0 0.0
    %v2729 = vand.u32 %v107, 4294901760
    %2730 = vmatpush2.msra.mxu0 %v2729
    %2731 = vmatprep.subr.mxu0 0.0
    %v2732 = vand.u32 %v106, 4294901760
    %2733 = vmatpush2.msra.mxu0 %v2732
    %2734 = vmatprep.subr.mxu0 0.0
    %v2735 = vand.u32 %v105, 4294901760
    %2736 = vmatpush2.msra.mxu0 %v2735
    %2737 = vmatprep.subr.mxu0 0.0
    %v2738 = vand.u32 %v104, 4294901760
    %2739 = vmatpush2.msra.mxu0 %v2738
    %2740 = vmatprep.subr.mxu0 0.0
    %v2741 = vand.u32 %v103, 4294901760
    %2742 = vmatpush2.msra.mxu0 %v2741
    %v2743 = vand.u32 %v155, 4294901760
    %2744 = vmatprep.mubr.f32.mxu0 %v2743
    %v2745 = vand.u32 %v147, 4294901760
    %2746 = vmatmul.mubr.f32.gmra.mxu0 %v2745
    %v2747 = vpop.f32.mrf.mxu0
    %v2748 = vadd.f32 %v2644, %v2747
    %v2749 = vpop.f32.mrf.mxu0
    %2750 = vdwg.mxu0
    %2751 = vmatprep.subr.mxu0 0.0
    %2752 = vmatpush1.msra.mxu0 0.0
    %2753 = vmatprep.subr.mxu0 0.0
    %2754 = vmatpush1.msra.mxu0 0.0
    %2755 = vmatprep.subr.mxu0 0.0
    %2756 = vmatpush1.msra.mxu0 0.0
    %2757 = vmatprep.subr.mxu0 0.0
    %2758 = vmatpush1.msra.mxu0 0.0
    %2759 = vmatprep.subr.mxu0 0.0
    %2760 = vmatpush1.msra.mxu0 0.0
    %2761 = vmatprep.subr.mxu0 0.0
    %2762 = vmatpush1.msra.mxu0 0.0
    %2763 = vmatprep.subr.mxu0 0.0
    %2764 = vmatpush1.msra.mxu0 0.0
    %2765 = vmatprep.subr.mxu0 0.0
    %2766 = vmatpush1.msra.mxu0 0.0
    %2767 = vmatprep.subr.mxu0 0.0
    %2768 = vmatpush1.msra.mxu0 0.0
    %2769 = vmatprep.subr.mxu0 0.0
    %2770 = vmatpush1.msra.mxu0 0.0
    %2771 = vmatprep.subr.mxu0 0.0
    %2772 = vmatpush1.msra.mxu0 0.0
    %2773 = vmatprep.subr.mxu0 0.0
    %2774 = vmatpush1.msra.mxu0 0.0
    %2775 = vmatprep.subr.mxu0 0.0
    %2776 = vmatpush1.msra.mxu0 0.0
    %2777 = vmatprep.subr.mxu0 0.0
    %2778 = vmatpush1.msra.mxu0 0.0
    %2779 = vmatprep.subr.mxu0 0.0
    %v2780 = vand.u32 %v120, 4294901760
    %2781 = vmatpush1.msra.mxu0 %v2780
    %2782 = vmatprep.subr.mxu0 0.0
    %v2783 = vand.u32 %v119, 4294901760
    %2784 = vmatpush1.msra.mxu0 %v2783
    %2785 = vmatprep.subr.mxu0 0.0
    %2786 = vmatpush2.msra.mxu0 0.0
    %2787 = vmatprep.subr.mxu0 0.0
    %2788 = vmatpush2.msra.mxu0 0.0
    %2789 = vmatprep.subr.mxu0 0.0
    %2790 = vmatpush2.msra.mxu0 0.0
    %2791 = vmatprep.subr.mxu0 0.0
    %2792 = vmatpush2.msra.mxu0 0.0
    %2793 = vmatprep.subr.mxu0 0.0
    %2794 = vmatpush2.msra.mxu0 0.0
    %2795 = vmatprep.subr.mxu0 0.0
    %2796 = vmatpush2.msra.mxu0 0.0
    %2797 = vmatprep.subr.mxu0 0.0
    %2798 = vmatpush2.msra.mxu0 0.0
    %2799 = vmatprep.subr.mxu0 0.0
    %2800 = vmatpush2.msra.mxu0 0.0
    %2801 = vmatprep.subr.mxu0 0.0
    %2802 = vmatpush2.msra.mxu0 0.0
    %2803 = vmatprep.subr.mxu0 0.0
    %2804 = vmatpush2.msra.mxu0 0.0
    %2805 = vmatprep.subr.mxu0 0.0
    %2806 = vmatpush2.msra.mxu0 0.0
    %2807 = vmatprep.subr.mxu0 0.0
    %2808 = vmatpush2.msra.mxu0 0.0
    %2809 = vmatprep.subr.mxu0 0.0
    %2810 = vmatpush2.msra.mxu0 0.0
    %2811 = vmatprep.subr.mxu0 0.0
    %2812 = vmatpush2.msra.mxu0 0.0
    %2813 = vmatprep.subr.mxu0 0.0
    %2814 = vmatpush2.msra.mxu0 0.0
    %2815 = vmatprep.subr.mxu0 0.0
    %2816 = vmatpush2.msra.mxu0 0.0
    %2817 = vmatprep.mubr.f32.mxu0 0.0
    %v2818 = vand.u32 %v163, 4294901760
    %v2819 = vsub.f32 %v163, %v2818
    %v2820 = vand.u32 %v2819, 4294901760
    %v2821 = vsub.f32 %v2819, %v2820
    %v2822 = vand.u32 %v2821, 4294901760
    %2823 = vmatmul.mubr.f32.gmra.mxu0 %v2822
    %v2824 = vpop.f32.mrf.mxu0
    %v2825 = vadd.f32 %v2748, %v2824
    %v2826 = vpop.f32.mrf.mxu0
    %2827 = vdwg.mxu0
    %2828 = vmatprep.subr.mxu0 0.0
    %2829 = vmatpush1.msra.mxu0 0.0
    %2830 = vmatprep.subr.mxu0 0.0
    %2831 = vmatpush1.msra.mxu0 0.0
    %2832 = vmatprep.subr.mxu0 0.0
    %2833 = vmatpush1.msra.mxu0 0.0
    %2834 = vmatprep.subr.mxu0 0.0
    %2835 = vmatpush1.msra.mxu0 0.0
    %2836 = vmatprep.subr.mxu0 0.0
    %2837 = vmatpush1.msra.mxu0 0.0
    %2838 = vmatprep.subr.mxu0 0.0
    %2839 = vmatpush1.msra.mxu0 0.0
    %2840 = vmatprep.subr.mxu0 0.0
    %2841 = vmatpush1.msra.mxu0 0.0
    %2842 = vmatprep.subr.mxu0 0.0
    %2843 = vmatpush1.msra.mxu0 0.0
    %2844 = vmatprep.subr.mxu0 0.0
    %2845 = vmatpush1.msra.mxu0 0.0
    %2846 = vmatprep.subr.mxu0 0.0
    %2847 = vmatpush1.msra.mxu0 0.0
    %2848 = vmatprep.subr.mxu0 0.0
    %2849 = vmatpush1.msra.mxu0 0.0
    %2850 = vmatprep.subr.mxu0 0.0
    %2851 = vmatpush1.msra.mxu0 0.0
    %2852 = vmatprep.subr.mxu0 0.0
    %2853 = vmatpush1.msra.mxu0 0.0
    %2854 = vmatprep.subr.mxu0 0.0
    %2855 = vmatpush1.msra.mxu0 0.0
    %2856 = vmatprep.subr.mxu0 0.0
    %v2857 = vand.u32 %v120, 4294901760
    %v2858 = vsub.f32 %v120, %v2857
    %v2859 = vand.u32 %v2858, 4294901760
    %v2860 = vsub.f32 %v2858, %v2859
    %v2861 = vand.u32 %v2860, 4294901760
    %2862 = vmatpush1.msra.mxu0 %v2861
    %2863 = vmatprep.subr.mxu0 0.0
    %v2864 = vand.u32 %v119, 4294901760
    %v2865 = vsub.f32 %v119, %v2864
    %v2866 = vand.u32 %v2865, 4294901760
    %v2867 = vsub.f32 %v2865, %v2866
    %v2868 = vand.u32 %v2867, 4294901760
    %2869 = vmatpush1.msra.mxu0 %v2868
    %2870 = vmatprep.subr.mxu0 0.0
    %2871 = vmatpush2.msra.mxu0 0.0
    %2872 = vmatprep.subr.mxu0 0.0
    %2873 = vmatpush2.msra.mxu0 0.0
    %2874 = vmatprep.subr.mxu0 0.0
    %2875 = vmatpush2.msra.mxu0 0.0
    %2876 = vmatprep.subr.mxu0 0.0
    %2877 = vmatpush2.msra.mxu0 0.0
    %2878 = vmatprep.subr.mxu0 0.0
    %2879 = vmatpush2.msra.mxu0 0.0
    %2880 = vmatprep.subr.mxu0 0.0
    %2881 = vmatpush2.msra.mxu0 0.0
    %2882 = vmatprep.subr.mxu0 0.0
    %2883 = vmatpush2.msra.mxu0 0.0
    %2884 = vmatprep.subr.mxu0 0.0
    %2885 = vmatpush2.msra.mxu0 0.0
    %2886 = vmatprep.subr.mxu0 0.0
    %2887 = vmatpush2.msra.mxu0 0.0
    %2888 = vmatprep.subr.mxu0 0.0
    %2889 = vmatpush2.msra.mxu0 0.0
    %2890 = vmatprep.subr.mxu0 0.0
    %2891 = vmatpush2.msra.mxu0 0.0
    %2892 = vmatprep.subr.mxu0 0.0
    %2893 = vmatpush2.msra.mxu0 0.0
    %2894 = vmatprep.subr.mxu0 0.0
    %2895 = vmatpush2.msra.mxu0 0.0
    %2896 = vmatprep.subr.mxu0 0.0
    %2897 = vmatpush2.msra.mxu0 0.0
    %2898 = vmatprep.subr.mxu0 0.0
    %2899 = vmatpush2.msra.mxu0 0.0
    %2900 = vmatprep.subr.mxu0 0.0
    %2901 = vmatpush2.msra.mxu0 0.0
    %2902 = vmatprep.mubr.f32.mxu0 0.0
    %v2903 = vand.u32 %v163, 4294901760
    %2904 = vmatmul.mubr.f32.gmra.mxu0 %v2903
    %v2905 = vpop.f32.mrf.mxu0
    %v2906 = vadd.f32 %v2825, %v2905
    %v2907 = vpop.f32.mrf.mxu0
    %2908 = vdwg.mxu0
    %2909 = vmatprep.subr.mxu0 0.0
    %2910 = vmatpush1.msra.mxu0 0.0
    %2911 = vmatprep.subr.mxu0 0.0
    %2912 = vmatpush1.msra.mxu0 0.0
    %2913 = vmatprep.subr.mxu0 0.0
    %2914 = vmatpush1.msra.mxu0 0.0
    %2915 = vmatprep.subr.mxu0 0.0
    %2916 = vmatpush1.msra.mxu0 0.0
    %2917 = vmatprep.subr.mxu0 0.0
    %2918 = vmatpush1.msra.mxu0 0.0
    %2919 = vmatprep.subr.mxu0 0.0
    %2920 = vmatpush1.msra.mxu0 0.0
    %2921 = vmatprep.subr.mxu0 0.0
    %2922 = vmatpush1.msra.mxu0 0.0
    %2923 = vmatprep.subr.mxu0 0.0
    %2924 = vmatpush1.msra.mxu0 0.0
    %2925 = vmatprep.subr.mxu0 0.0
    %2926 = vmatpush1.msra.mxu0 0.0
    %2927 = vmatprep.subr.mxu0 0.0
    %2928 = vmatpush1.msra.mxu0 0.0
    %2929 = vmatprep.subr.mxu0 0.0
    %2930 = vmatpush1.msra.mxu0 0.0
    %2931 = vmatprep.subr.mxu0 0.0
    %2932 = vmatpush1.msra.mxu0 0.0
    %2933 = vmatprep.subr.mxu0 0.0
    %2934 = vmatpush1.msra.mxu0 0.0
    %2935 = vmatprep.subr.mxu0 0.0
    %2936 = vmatpush1.msra.mxu0 0.0
    %2937 = vmatprep.subr.mxu0 0.0
    %v2938 = vand.u32 %v120, 4294901760
    %v2939 = vsub.f32 %v120, %v2938
    %2940 = vmatpush1.msra.mxu0 %v2939
    %2941 = vmatprep.subr.mxu0 0.0
    %v2942 = vand.u32 %v119, 4294901760
    %v2943 = vsub.f32 %v119, %v2942
    %2944 = vmatpush1.msra.mxu0 %v2943
    %2945 = vmatprep.subr.mxu0 0.0
    %2946 = vmatpush2.msra.mxu0 0.0
    %2947 = vmatprep.subr.mxu0 0.0
    %2948 = vmatpush2.msra.mxu0 0.0
    %2949 = vmatprep.subr.mxu0 0.0
    %2950 = vmatpush2.msra.mxu0 0.0
    %2951 = vmatprep.subr.mxu0 0.0
    %2952 = vmatpush2.msra.mxu0 0.0
    %2953 = vmatprep.subr.mxu0 0.0
    %2954 = vmatpush2.msra.mxu0 0.0
    %2955 = vmatprep.subr.mxu0 0.0
    %2956 = vmatpush2.msra.mxu0 0.0
    %2957 = vmatprep.subr.mxu0 0.0
    %2958 = vmatpush2.msra.mxu0 0.0
    %2959 = vmatprep.subr.mxu0 0.0
    %2960 = vmatpush2.msra.mxu0 0.0
    %2961 = vmatprep.subr.mxu0 0.0
    %2962 = vmatpush2.msra.mxu0 0.0
    %2963 = vmatprep.subr.mxu0 0.0
    %2964 = vmatpush2.msra.mxu0 0.0
    %2965 = vmatprep.subr.mxu0 0.0
    %2966 = vmatpush2.msra.mxu0 0.0
    %2967 = vmatprep.subr.mxu0 0.0
    %2968 = vmatpush2.msra.mxu0 0.0
    %2969 = vmatprep.subr.mxu0 0.0
    %2970 = vmatpush2.msra.mxu0 0.0
    %2971 = vmatprep.subr.mxu0 0.0
    %2972 = vmatpush2.msra.mxu0 0.0
    %2973 = vmatprep.subr.mxu0 0.0
    %2974 = vmatpush2.msra.mxu0 0.0
    %2975 = vmatprep.subr.mxu0 0.0
    %2976 = vmatpush2.msra.mxu0 0.0
    %2977 = vmatprep.mubr.f32.mxu0 0.0
    %v2978 = vand.u32 %v163, 4294901760
    %v2979 = vsub.f32 %v163, %v2978
    %2980 = vmatmul.mubr.f32.gmra.mxu0 %v2979
    %v2981 = vpop.f32.mrf.mxu0
    %v2982 = vadd.f32 %v2906, %v2981
    %v2983 = vpop.f32.mrf.mxu0
    %2984 = vdwg.mxu0
    %2985 = vmatprep.subr.mxu0 0.0
    %2986 = vmatpush1.msra.mxu0 0.0
    %2987 = vmatprep.subr.mxu0 0.0
    %2988 = vmatpush1.msra.mxu0 0.0
    %2989 = vmatprep.subr.mxu0 0.0
    %2990 = vmatpush1.msra.mxu0 0.0
    %2991 = vmatprep.subr.mxu0 0.0
    %2992 = vmatpush1.msra.mxu0 0.0
    %2993 = vmatprep.subr.mxu0 0.0
    %2994 = vmatpush1.msra.mxu0 0.0
    %2995 = vmatprep.subr.mxu0 0.0
    %2996 = vmatpush1.msra.mxu0 0.0
    %2997 = vmatprep.subr.mxu0 0.0
    %2998 = vmatpush1.msra.mxu0 0.0
    %2999 = vmatprep.subr.mxu0 0.0
    %3000 = vmatpush1.msra.mxu0 0.0
    %3001 = vmatprep.subr.mxu0 0.0
    %3002 = vmatpush1.msra.mxu0 0.0
    %3003 = vmatprep.subr.mxu0 0.0
    %3004 = vmatpush1.msra.mxu0 0.0
    %3005 = vmatprep.subr.mxu0 0.0
    %3006 = vmatpush1.msra.mxu0 0.0
    %3007 = vmatprep.subr.mxu0 0.0
    %3008 = vmatpush1.msra.mxu0 0.0
    %3009 = vmatprep.subr.mxu0 0.0
    %3010 = vmatpush1.msra.mxu0 0.0
    %3011 = vmatprep.subr.mxu0 0.0
    %3012 = vmatpush1.msra.mxu0 0.0
    %3013 = vmatprep.subr.mxu0 0.0
    %v3014 = vand.u32 %v120, 4294901760
    %3015 = vmatpush1.msra.mxu0 %v3014
    %3016 = vmatprep.subr.mxu0 0.0
    %v3017 = vand.u32 %v119, 4294901760
    %3018 = vmatpush1.msra.mxu0 %v3017
    %3019 = vmatprep.subr.mxu0 0.0
    %3020 = vmatpush2.msra.mxu0 0.0
    %3021 = vmatprep.subr.mxu0 0.0
    %3022 = vmatpush2.msra.mxu0 0.0
    %3023 = vmatprep.subr.mxu0 0.0
    %3024 = vmatpush2.msra.mxu0 0.0
    %3025 = vmatprep.subr.mxu0 0.0
    %3026 = vmatpush2.msra.mxu0 0.0
    %3027 = vmatprep.subr.mxu0 0.0
    %3028 = vmatpush2.msra.mxu0 0.0
    %3029 = vmatprep.subr.mxu0 0.0
    %3030 = vmatpush2.msra.mxu0 0.0
    %3031 = vmatprep.subr.mxu0 0.0
    %3032 = vmatpush2.msra.mxu0 0.0
    %3033 = vmatprep.subr.mxu0 0.0
    %3034 = vmatpush2.msra.mxu0 0.0
    %3035 = vmatprep.subr.mxu0 0.0
    %3036 = vmatpush2.msra.mxu0 0.0
    %3037 = vmatprep.subr.mxu0 0.0
    %3038 = vmatpush2.msra.mxu0 0.0
    %3039 = vmatprep.subr.mxu0 0.0
    %3040 = vmatpush2.msra.mxu0 0.0
    %3041 = vmatprep.subr.mxu0 0.0
    %3042 = vmatpush2.msra.mxu0 0.0
    %3043 = vmatprep.subr.mxu0 0.0
    %3044 = vmatpush2.msra.mxu0 0.0
    %3045 = vmatprep.subr.mxu0 0.0
    %3046 = vmatpush2.msra.mxu0 0.0
    %3047 = vmatprep.subr.mxu0 0.0
    %3048 = vmatpush2.msra.mxu0 0.0
    %3049 = vmatprep.subr.mxu0 0.0
    %3050 = vmatpush2.msra.mxu0 0.0
    %3051 = vmatprep.mubr.f32.mxu0 0.0
    %v3052 = vand.u32 %v163, 4294901760
    %v3053 = vsub.f32 %v163, %v3052
    %v3054 = vand.u32 %v3053, 4294901760
    %3055 = vmatmul.mubr.f32.gmra.mxu0 %v3054
    %v3056 = vpop.f32.mrf.mxu0
    %v3057 = vadd.f32 %v2982, %v3056
    %v3058 = vpop.f32.mrf.mxu0
    %3059 = vdwg.mxu0
    %3060 = vmatprep.subr.mxu0 0.0
    %3061 = vmatpush1.msra.mxu0 0.0
    %3062 = vmatprep.subr.mxu0 0.0
    %3063 = vmatpush1.msra.mxu0 0.0
    %3064 = vmatprep.subr.mxu0 0.0
    %3065 = vmatpush1.msra.mxu0 0.0
    %3066 = vmatprep.subr.mxu0 0.0
    %3067 = vmatpush1.msra.mxu0 0.0
    %3068 = vmatprep.subr.mxu0 0.0
    %3069 = vmatpush1.msra.mxu0 0.0
    %3070 = vmatprep.subr.mxu0 0.0
    %3071 = vmatpush1.msra.mxu0 0.0
    %3072 = vmatprep.subr.mxu0 0.0
    %3073 = vmatpush1.msra.mxu0 0.0
    %3074 = vmatprep.subr.mxu0 0.0
    %3075 = vmatpush1.msra.mxu0 0.0
    %3076 = vmatprep.subr.mxu0 0.0
    %3077 = vmatpush1.msra.mxu0 0.0
    %3078 = vmatprep.subr.mxu0 0.0
    %3079 = vmatpush1.msra.mxu0 0.0
    %3080 = vmatprep.subr.mxu0 0.0
    %3081 = vmatpush1.msra.mxu0 0.0
    %3082 = vmatprep.subr.mxu0 0.0
    %3083 = vmatpush1.msra.mxu0 0.0
    %3084 = vmatprep.subr.mxu0 0.0
    %3085 = vmatpush1.msra.mxu0 0.0
    %3086 = vmatprep.subr.mxu0 0.0
    %3087 = vmatpush1.msra.mxu0 0.0
    %3088 = vmatprep.subr.mxu0 0.0
    %v3089 = vand.u32 %v120, 4294901760
    %v3090 = vsub.f32 %v120, %v3089
    %v3091 = vand.u32 %v3090, 4294901760
    %3092 = vmatpush1.msra.mxu0 %v3091
    %3093 = vmatprep.subr.mxu0 0.0
    %v3094 = vand.u32 %v119, 4294901760
    %v3095 = vsub.f32 %v119, %v3094
    %v3096 = vand.u32 %v3095, 4294901760
    %3097 = vmatpush1.msra.mxu0 %v3096
    %3098 = vmatprep.subr.mxu0 0.0
    %3099 = vmatpush2.msra.mxu0 0.0
    %3100 = vmatprep.subr.mxu0 0.0
    %3101 = vmatpush2.msra.mxu0 0.0
    %3102 = vmatprep.subr.mxu0 0.0
    %3103 = vmatpush2.msra.mxu0 0.0
    %3104 = vmatprep.subr.mxu0 0.0
    %3105 = vmatpush2.msra.mxu0 0.0
    %3106 = vmatprep.subr.mxu0 0.0
    %3107 = vmatpush2.msra.mxu0 0.0
    %3108 = vmatprep.subr.mxu0 0.0
    %3109 = vmatpush2.msra.mxu0 0.0
    %3110 = vmatprep.subr.mxu0 0.0
    %3111 = vmatpush2.msra.mxu0 0.0
    %3112 = vmatprep.subr.mxu0 0.0
    %3113 = vmatpush2.msra.mxu0 0.0
    %3114 = vmatprep.subr.mxu0 0.0
    %3115 = vmatpush2.msra.mxu0 0.0
    %3116 = vmatprep.subr.mxu0 0.0
    %3117 = vmatpush2.msra.mxu0 0.0
    %3118 = vmatprep.subr.mxu0 0.0
    %3119 = vmatpush2.msra.mxu0 0.0
    %3120 = vmatprep.subr.mxu0 0.0
    %3121 = vmatpush2.msra.mxu0 0.0
    %3122 = vmatprep.subr.mxu0 0.0
    %3123 = vmatpush2.msra.mxu0 0.0
    %3124 = vmatprep.subr.mxu0 0.0
    %3125 = vmatpush2.msra.mxu0 0.0
    %3126 = vmatprep.subr.mxu0 0.0
    %3127 = vmatpush2.msra.mxu0 0.0
    %3128 = vmatprep.subr.mxu0 0.0
    %3129 = vmatpush2.msra.mxu0 0.0
    %3130 = vmatprep.mubr.f32.mxu0 0.0
    %v3131 = vand.u32 %v163, 4294901760
    %3132 = vmatmul.mubr.f32.gmra.mxu0 %v3131
    %v3133 = vpop.f32.mrf.mxu0
    %v3134 = vadd.f32 %v3057, %v3133
    %v3135 = vpop.f32.mrf.mxu0
    %3136 = vdwg.mxu0
    %3137 = vmatprep.subr.mxu0 0.0
    %3138 = vmatpush1.msra.mxu0 0.0
    %3139 = vmatprep.subr.mxu0 0.0
    %3140 = vmatpush1.msra.mxu0 0.0
    %3141 = vmatprep.subr.mxu0 0.0
    %3142 = vmatpush1.msra.mxu0 0.0
    %3143 = vmatprep.subr.mxu0 0.0
    %3144 = vmatpush1.msra.mxu0 0.0
    %3145 = vmatprep.subr.mxu0 0.0
    %3146 = vmatpush1.msra.mxu0 0.0
    %3147 = vmatprep.subr.mxu0 0.0
    %3148 = vmatpush1.msra.mxu0 0.0
    %3149 = vmatprep.subr.mxu0 0.0
    %3150 = vmatpush1.msra.mxu0 0.0
    %3151 = vmatprep.subr.mxu0 0.0
    %3152 = vmatpush1.msra.mxu0 0.0
    %3153 = vmatprep.subr.mxu0 0.0
    %3154 = vmatpush1.msra.mxu0 0.0
    %3155 = vmatprep.subr.mxu0 0.0
    %3156 = vmatpush1.msra.mxu0 0.0
    %3157 = vmatprep.subr.mxu0 0.0
    %3158 = vmatpush1.msra.mxu0 0.0
    %3159 = vmatprep.subr.mxu0 0.0
    %3160 = vmatpush1.msra.mxu0 0.0
    %3161 = vmatprep.subr.mxu0 0.0
    %3162 = vmatpush1.msra.mxu0 0.0
    %3163 = vmatprep.subr.mxu0 0.0
    %3164 = vmatpush1.msra.mxu0 0.0
    %3165 = vmatprep.subr.mxu0 0.0
    %v3166 = vand.u32 %v120, 4294901760
    %3167 = vmatpush1.msra.mxu0 %v3166
    %3168 = vmatprep.subr.mxu0 0.0
    %v3169 = vand.u32 %v119, 4294901760
    %3170 = vmatpush1.msra.mxu0 %v3169
    %3171 = vmatprep.subr.mxu0 0.0
    %3172 = vmatpush2.msra.mxu0 0.0
    %3173 = vmatprep.subr.mxu0 0.0
    %3174 = vmatpush2.msra.mxu0 0.0
    %3175 = vmatprep.subr.mxu0 0.0
    %3176 = vmatpush2.msra.mxu0 0.0
    %3177 = vmatprep.subr.mxu0 0.0
    %3178 = vmatpush2.msra.mxu0 0.0
    %3179 = vmatprep.subr.mxu0 0.0
    %3180 = vmatpush2.msra.mxu0 0.0
    %3181 = vmatprep.subr.mxu0 0.0
    %3182 = vmatpush2.msra.mxu0 0.0
    %3183 = vmatprep.subr.mxu0 0.0
    %3184 = vmatpush2.msra.mxu0 0.0
    %3185 = vmatprep.subr.mxu0 0.0
    %3186 = vmatpush2.msra.mxu0 0.0
    %3187 = vmatprep.subr.mxu0 0.0
    %3188 = vmatpush2.msra.mxu0 0.0
    %3189 = vmatprep.subr.mxu0 0.0
    %3190 = vmatpush2.msra.mxu0 0.0
    %3191 = vmatprep.subr.mxu0 0.0
    %3192 = vmatpush2.msra.mxu0 0.0
    %3193 = vmatprep.subr.mxu0 0.0
    %3194 = vmatpush2.msra.mxu0 0.0
    %3195 = vmatprep.subr.mxu0 0.0
    %3196 = vmatpush2.msra.mxu0 0.0
    %3197 = vmatprep.subr.mxu0 0.0
    %3198 = vmatpush2.msra.mxu0 0.0
    %3199 = vmatprep.subr.mxu0 0.0
    %3200 = vmatpush2.msra.mxu0 0.0
    %3201 = vmatprep.subr.mxu0 0.0
    %3202 = vmatpush2.msra.mxu0 0.0
    %3203 = vmatprep.mubr.f32.mxu0 0.0
    %v3204 = vand.u32 %v163, 4294901760
    %3205 = vmatmul.mubr.f32.gmra.mxu0 %v3204
    %v3206 = vpop.f32.mrf.mxu0
    %v3207 = vadd.f32 %v3134, %v3206
    %v3208 = vpop.f32.mrf.mxu0
    %3209 = vdwg.mxu0
    %vm3210 = vcmp.gt.f32.partialorder %v3207, 0.0
    %v3211 = vmin.f32 %v3207, 0.0
    %v3212 = vmul.f32 %v3211, 1.442695
    %v3213 = vpow.pop %v3212
    %v3214 = vsub.f32 %v3213, 1.0
    %v3215 = vmul.f32 %v3214, 1.6732632
    %v3216 = vsel %vm3210, %v3207, %v3215
    %v3217 = vmul.f32 %v3216, 1.050701
    %v3218 = vld [vmem:[%s2] sm:$0xff]
    %v3219 = vld [vmem:[%s2 + $0x8] sm:$0xff]
    %v3220 = vld [vmem:[%s2 + $0x10] sm:$0xff]
    %v3221 = vld [vmem:[%s2 + $0x18] sm:$0xff]
    %v3222 = vld [vmem:[%s2 + $0x20] sm:$0xff]
    %v3223 = vld [vmem:[%s2 + $0x28] sm:$0x7f]
    %v3224 = vld [vmem:[%s3] sm:$0x1]
    %v3226 = vlaneseq
    %v3227 = vshrl.u32 %v3226, 7
    %v3228 = vsub.s32 0, %v3227
    %v3229 = vrot.slane %v3224, %v3228
    %vm3231 = vcmask 384000
    %v3233 = vsel %vm3231, %v3217, 0
    %vm3235 = vcmask 1046528
    %v3237 = vsel %vm3235, %v3223, 0
    %3239 = vmatprep.subr.mxu0 0.0
    %3240 = vmatpush1.msra.mxu0 0.0
    %3241 = vmatprep.subr.mxu0 0.0
    %3242 = vmatpush1.msra.mxu0 0.0
    %3243 = vmatprep.subr.mxu0 0.0
    %3244 = vmatpush1.msra.mxu0 0.0
    %3245 = vmatprep.subr.mxu0 0.0
    %3246 = vmatpush1.msra.mxu0 0.0
    %3247 = vmatprep.subr.mxu0 0.0
    %3248 = vmatpush1.msra.mxu0 0.0
    %3249 = vmatprep.subr.mxu0 0.0
    %3250 = vmatpush1.msra.mxu0 0.0
    %3251 = vmatprep.subr.mxu0 0.0
    %3252 = vmatpush1.msra.mxu0 0.0
    %3253 = vmatprep.subr.mxu0 0.0
    %3254 = vmatpush1.msra.mxu0 0.0
    %3255 = vmatprep.subr.mxu0 0.0
    %3256 = vmatpush1.msra.mxu0 0.0
    %3257 = vmatprep.subr.mxu0 0.0
    %3258 = vmatpush1.msra.mxu0 0.0
    %3259 = vmatprep.subr.mxu0 0.0
    %v3260 = vand.u32 %v3237, 4294901760
    %3261 = vmatpush1.msra.mxu0 %v3260
    %3262 = vmatprep.subr.mxu0 0.0
    %v3263 = vand.u32 %v3222, 4294901760
    %3264 = vmatpush1.msra.mxu0 %v3263
    %3265 = vmatprep.subr.mxu0 0.0
    %v3266 = vand.u32 %v3221, 4294901760
    %3267 = vmatpush1.msra.mxu0 %v3266
    %3268 = vmatprep.subr.mxu0 0.0
    %v3269 = vand.u32 %v3220, 4294901760
    %3270 = vmatpush1.msra.mxu0 %v3269
    %3271 = vmatprep.subr.mxu0 0.0
    %v3272 = vand.u32 %v3219, 4294901760
    %3273 = vmatpush1.msra.mxu0 %v3272
    %3274 = vmatprep.subr.mxu0 0.0
    %v3275 = vand.u32 %v3218, 4294901760
    %3276 = vmatpush1.msra.mxu0 %v3275
    %3277 = vmatprep.subr.mxu0 0.0
    %3278 = vmatpush2.msra.mxu0 0.0
    %3279 = vmatprep.subr.mxu0 0.0
    %3280 = vmatpush2.msra.mxu0 0.0
    %3281 = vmatprep.subr.mxu0 0.0
    %3282 = vmatpush2.msra.mxu0 0.0
    %3283 = vmatprep.subr.mxu0 0.0
    %3284 = vmatpush2.msra.mxu0 0.0
    %3285 = vmatprep.subr.mxu0 0.0
    %3286 = vmatpush2.msra.mxu0 0.0
    %3287 = vmatprep.subr.mxu0 0.0
    %3288 = vmatpush2.msra.mxu0 0.0
    %3289 = vmatprep.subr.mxu0 0.0
    %3290 = vmatpush2.msra.mxu0 0.0
    %3291 = vmatprep.subr.mxu0 0.0
    %3292 = vmatpush2.msra.mxu0 0.0
    %3293 = vmatprep.subr.mxu0 0.0
    %3294 = vmatpush2.msra.mxu0 0.0
    %3295 = vmatprep.subr.mxu0 0.0
    %3296 = vmatpush2.msra.mxu0 0.0
    %3297 = vmatprep.subr.mxu0 0.0
    %3298 = vmatpush2.msra.mxu0 0.0
    %3299 = vmatprep.subr.mxu0 0.0
    %3300 = vmatpush2.msra.mxu0 0.0
    %3301 = vmatprep.subr.mxu0 0.0
    %3302 = vmatpush2.msra.mxu0 0.0
    %3303 = vmatprep.subr.mxu0 0.0
    %3304 = vmatpush2.msra.mxu0 0.0
    %3305 = vmatprep.subr.mxu0 0.0
    %3306 = vmatpush2.msra.mxu0 0.0
    %3307 = vmatprep.subr.mxu0 0.0
    %3308 = vmatpush2.msra.mxu0 0.0
    %3309 = vmatprep.mubr.f32.mxu0 0.0
    %v3310 = vand.u32 %v3233, 4294901760
    %v3311 = vsub.f32 %v3233, %v3310
    %v3312 = vand.u32 %v3311, 4294901760
    %v3313 = vsub.f32 %v3311, %v3312
    %v3314 = vand.u32 %v3313, 4294901760
    %3315 = vmatmul.mubr.f32.gmra.mxu0 %v3314
    %v3316 = vpop.f32.mrf.mxu0
    %v3317 = vadd.f32 %v3229, %v3316
    %v3318 = vpop.f32.mrf.mxu0
    %3319 = vdwg.mxu0
    %3320 = vmatprep.subr.mxu0 0.0
    %3321 = vmatpush1.msra.mxu0 0.0
    %3322 = vmatprep.subr.mxu0 0.0
    %3323 = vmatpush1.msra.mxu0 0.0
    %3324 = vmatprep.subr.mxu0 0.0
    %3325 = vmatpush1.msra.mxu0 0.0
    %3326 = vmatprep.subr.mxu0 0.0
    %3327 = vmatpush1.msra.mxu0 0.0
    %3328 = vmatprep.subr.mxu0 0.0
    %3329 = vmatpush1.msra.mxu0 0.0
    %3330 = vmatprep.subr.mxu0 0.0
    %3331 = vmatpush1.msra.mxu0 0.0
    %3332 = vmatprep.subr.mxu0 0.0
    %3333 = vmatpush1.msra.mxu0 0.0
    %3334 = vmatprep.subr.mxu0 0.0
    %3335 = vmatpush1.msra.mxu0 0.0
    %3336 = vmatprep.subr.mxu0 0.0
    %3337 = vmatpush1.msra.mxu0 0.0
    %3338 = vmatprep.subr.mxu0 0.0
    %3339 = vmatpush1.msra.mxu0 0.0
    %3340 = vmatprep.subr.mxu0 0.0
    %v3341 = vand.u32 %v3237, 4294901760
    %v3342 = vsub.f32 %v3237, %v3341
    %v3343 = vand.u32 %v3342, 4294901760
    %v3344 = vsub.f32 %v3342, %v3343
    %v3345 = vand.u32 %v3344, 4294901760
    %3346 = vmatpush1.msra.mxu0 %v3345
    %3347 = vmatprep.subr.mxu0 0.0
    %v3348 = vand.u32 %v3222, 4294901760
    %v3349 = vsub.f32 %v3222, %v3348
    %v3350 = vand.u32 %v3349, 4294901760
    %v3351 = vsub.f32 %v3349, %v3350
    %v3352 = vand.u32 %v3351, 4294901760
    %3353 = vmatpush1.msra.mxu0 %v3352
    %3354 = vmatprep.subr.mxu0 0.0
    %v3355 = vand.u32 %v3221, 4294901760
    %v3356 = vsub.f32 %v3221, %v3355
    %v3357 = vand.u32 %v3356, 4294901760
    %v3358 = vsub.f32 %v3356, %v3357
    %v3359 = vand.u32 %v3358, 4294901760
    %3360 = vmatpush1.msra.mxu0 %v3359
    %3361 = vmatprep.subr.mxu0 0.0
    %v3362 = vand.u32 %v3220, 4294901760
    %v3363 = vsub.f32 %v3220, %v3362
    %v3364 = vand.u32 %v3363, 4294901760
    %v3365 = vsub.f32 %v3363, %v3364
    %v3366 = vand.u32 %v3365, 4294901760
    %3367 = vmatpush1.msra.mxu0 %v3366
    %3368 = vmatprep.subr.mxu0 0.0
    %v3369 = vand.u32 %v3219, 4294901760
    %v3370 = vsub.f32 %v3219, %v3369
    %v3371 = vand.u32 %v3370, 4294901760
    %v3372 = vsub.f32 %v3370, %v3371
    %v3373 = vand.u32 %v3372, 4294901760
    %3374 = vmatpush1.msra.mxu0 %v3373
    %3375 = vmatprep.subr.mxu0 0.0
    %v3376 = vand.u32 %v3218, 4294901760
    %v3377 = vsub.f32 %v3218, %v3376
    %v3378 = vand.u32 %v3377, 4294901760
    %v3379 = vsub.f32 %v3377, %v3378
    %v3380 = vand.u32 %v3379, 4294901760
    %3381 = vmatpush1.msra.mxu0 %v3380
    %3382 = vmatprep.subr.mxu0 0.0
    %3383 = vmatpush2.msra.mxu0 0.0
    %3384 = vmatprep.subr.mxu0 0.0
    %3385 = vmatpush2.msra.mxu0 0.0
    %3386 = vmatprep.subr.mxu0 0.0
    %3387 = vmatpush2.msra.mxu0 0.0
    %3388 = vmatprep.subr.mxu0 0.0
    %3389 = vmatpush2.msra.mxu0 0.0
    %3390 = vmatprep.subr.mxu0 0.0
    %3391 = vmatpush2.msra.mxu0 0.0
    %3392 = vmatprep.subr.mxu0 0.0
    %3393 = vmatpush2.msra.mxu0 0.0
    %3394 = vmatprep.subr.mxu0 0.0
    %3395 = vmatpush2.msra.mxu0 0.0
    %3396 = vmatprep.subr.mxu0 0.0
    %3397 = vmatpush2.msra.mxu0 0.0
    %3398 = vmatprep.subr.mxu0 0.0
    %3399 = vmatpush2.msra.mxu0 0.0
    %3400 = vmatprep.subr.mxu0 0.0
    %3401 = vmatpush2.msra.mxu0 0.0
    %3402 = vmatprep.subr.mxu0 0.0
    %3403 = vmatpush2.msra.mxu0 0.0
    %3404 = vmatprep.subr.mxu0 0.0
    %3405 = vmatpush2.msra.mxu0 0.0
    %3406 = vmatprep.subr.mxu0 0.0
    %3407 = vmatpush2.msra.mxu0 0.0
    %3408 = vmatprep.subr.mxu0 0.0
    %3409 = vmatpush2.msra.mxu0 0.0
    %3410 = vmatprep.subr.mxu0 0.0
    %3411 = vmatpush2.msra.mxu0 0.0
    %3412 = vmatprep.subr.mxu0 0.0
    %3413 = vmatpush2.msra.mxu0 0.0
    %3414 = vmatprep.mubr.f32.mxu0 0.0
    %v3415 = vand.u32 %v3233, 4294901760
    %3416 = vmatmul.mubr.f32.gmra.mxu0 %v3415
    %v3417 = vpop.f32.mrf.mxu0
    %v3418 = vadd.f32 %v3317, %v3417
    %v3419 = vpop.f32.mrf.mxu0
    %3420 = vdwg.mxu0
    %3421 = vmatprep.subr.mxu0 0.0
    %3422 = vmatpush1.msra.mxu0 0.0
    %3423 = vmatprep.subr.mxu0 0.0
    %3424 = vmatpush1.msra.mxu0 0.0
    %3425 = vmatprep.subr.mxu0 0.0
    %3426 = vmatpush1.msra.mxu0 0.0
    %3427 = vmatprep.subr.mxu0 0.0
    %3428 = vmatpush1.msra.mxu0 0.0
    %3429 = vmatprep.subr.mxu0 0.0
    %3430 = vmatpush1.msra.mxu0 0.0
    %3431 = vmatprep.subr.mxu0 0.0
    %3432 = vmatpush1.msra.mxu0 0.0
    %3433 = vmatprep.subr.mxu0 0.0
    %3434 = vmatpush1.msra.mxu0 0.0
    %3435 = vmatprep.subr.mxu0 0.0
    %3436 = vmatpush1.msra.mxu0 0.0
    %3437 = vmatprep.subr.mxu0 0.0
    %3438 = vmatpush1.msra.mxu0 0.0
    %3439 = vmatprep.subr.mxu0 0.0
    %3440 = vmatpush1.msra.mxu0 0.0
    %3441 = vmatprep.subr.mxu0 0.0
    %v3442 = vand.u32 %v3237, 4294901760
    %v3443 = vsub.f32 %v3237, %v3442
    %3444 = vmatpush1.msra.mxu0 %v3443
    %3445 = vmatprep.subr.mxu0 0.0
    %v3446 = vand.u32 %v3222, 4294901760
    %v3447 = vsub.f32 %v3222, %v3446
    %3448 = vmatpush1.msra.mxu0 %v3447
    %3449 = vmatprep.subr.mxu0 0.0
    %v3450 = vand.u32 %v3221, 4294901760
    %v3451 = vsub.f32 %v3221, %v3450
    %3452 = vmatpush1.msra.mxu0 %v3451
    %3453 = vmatprep.subr.mxu0 0.0
    %v3454 = vand.u32 %v3220, 4294901760
    %v3455 = vsub.f32 %v3220, %v3454
    %3456 = vmatpush1.msra.mxu0 %v3455
    %3457 = vmatprep.subr.mxu0 0.0
    %v3458 = vand.u32 %v3219, 4294901760
    %v3459 = vsub.f32 %v3219, %v3458
    %3460 = vmatpush1.msra.mxu0 %v3459
    %3461 = vmatprep.subr.mxu0 0.0
    %v3462 = vand.u32 %v3218, 4294901760
    %v3463 = vsub.f32 %v3218, %v3462
    %3464 = vmatpush1.msra.mxu0 %v3463
    %3465 = vmatprep.subr.mxu0 0.0
    %3466 = vmatpush2.msra.mxu0 0.0
    %3467 = vmatprep.subr.mxu0 0.0
    %3468 = vmatpush2.msra.mxu0 0.0
    %3469 = vmatprep.subr.mxu0 0.0
    %3470 = vmatpush2.msra.mxu0 0.0
    %3471 = vmatprep.subr.mxu0 0.0
    %3472 = vmatpush2.msra.mxu0 0.0
    %3473 = vmatprep.subr.mxu0 0.0
    %3474 = vmatpush2.msra.mxu0 0.0
    %3475 = vmatprep.subr.mxu0 0.0
    %3476 = vmatpush2.msra.mxu0 0.0
    %3477 = vmatprep.subr.mxu0 0.0
    %3478 = vmatpush2.msra.mxu0 0.0
    %3479 = vmatprep.subr.mxu0 0.0
    %3480 = vmatpush2.msra.mxu0 0.0
    %3481 = vmatprep.subr.mxu0 0.0
    %3482 = vmatpush2.msra.mxu0 0.0
    %3483 = vmatprep.subr.mxu0 0.0
    %3484 = vmatpush2.msra.mxu0 0.0
    %3485 = vmatprep.subr.mxu0 0.0
    %3486 = vmatpush2.msra.mxu0 0.0
    %3487 = vmatprep.subr.mxu0 0.0
    %3488 = vmatpush2.msra.mxu0 0.0
    %3489 = vmatprep.subr.mxu0 0.0
    %3490 = vmatpush2.msra.mxu0 0.0
    %3491 = vmatprep.subr.mxu0 0.0
    %3492 = vmatpush2.msra.mxu0 0.0
    %3493 = vmatprep.subr.mxu0 0.0
    %3494 = vmatpush2.msra.mxu0 0.0
    %3495 = vmatprep.subr.mxu0 0.0
    %3496 = vmatpush2.msra.mxu0 0.0
    %3497 = vmatprep.mubr.f32.mxu0 0.0
    %v3498 = vand.u32 %v3233, 4294901760
    %v3499 = vsub.f32 %v3233, %v3498
    %3500 = vmatmul.mubr.f32.gmra.mxu0 %v3499
    %v3501 = vpop.f32.mrf.mxu0
    %v3502 = vadd.f32 %v3418, %v3501
    %v3503 = vpop.f32.mrf.mxu0
    %3504 = vdwg.mxu0
    %3505 = vmatprep.subr.mxu0 0.0
    %3506 = vmatpush1.msra.mxu0 0.0
    %3507 = vmatprep.subr.mxu0 0.0
    %3508 = vmatpush1.msra.mxu0 0.0
    %3509 = vmatprep.subr.mxu0 0.0
    %3510 = vmatpush1.msra.mxu0 0.0
    %3511 = vmatprep.subr.mxu0 0.0
    %3512 = vmatpush1.msra.mxu0 0.0
    %3513 = vmatprep.subr.mxu0 0.0
    %3514 = vmatpush1.msra.mxu0 0.0
    %3515 = vmatprep.subr.mxu0 0.0
    %3516 = vmatpush1.msra.mxu0 0.0
    %3517 = vmatprep.subr.mxu0 0.0
    %3518 = vmatpush1.msra.mxu0 0.0
    %3519 = vmatprep.subr.mxu0 0.0
    %3520 = vmatpush1.msra.mxu0 0.0
    %3521 = vmatprep.subr.mxu0 0.0
    %3522 = vmatpush1.msra.mxu0 0.0
    %3523 = vmatprep.subr.mxu0 0.0
    %3524 = vmatpush1.msra.mxu0 0.0
    %3525 = vmatprep.subr.mxu0 0.0
    %v3526 = vand.u32 %v3237, 4294901760
    %3527 = vmatpush1.msra.mxu0 %v3526
    %3528 = vmatprep.subr.mxu0 0.0
    %v3529 = vand.u32 %v3222, 4294901760
    %3530 = vmatpush1.msra.mxu0 %v3529
    %3531 = vmatprep.subr.mxu0 0.0
    %v3532 = vand.u32 %v3221, 4294901760
    %3533 = vmatpush1.msra.mxu0 %v3532
    %3534 = vmatprep.subr.mxu0 0.0
    %v3535 = vand.u32 %v3220, 4294901760
    %3536 = vmatpush1.msra.mxu0 %v3535
    %3537 = vmatprep.subr.mxu0 0.0
    %v3538 = vand.u32 %v3219, 4294901760
    %3539 = vmatpush1.msra.mxu0 %v3538
    %3540 = vmatprep.subr.mxu0 0.0
    %v3541 = vand.u32 %v3218, 4294901760
    %3542 = vmatpush1.msra.mxu0 %v3541
    %3543 = vmatprep.subr.mxu0 0.0
    %3544 = vmatpush2.msra.mxu0 0.0
    %3545 = vmatprep.subr.mxu0 0.0
    %3546 = vmatpush2.msra.mxu0 0.0
    %3547 = vmatprep.subr.mxu0 0.0
    %3548 = vmatpush2.msra.mxu0 0.0
    %3549 = vmatprep.subr.mxu0 0.0
    %3550 = vmatpush2.msra.mxu0 0.0
    %3551 = vmatprep.subr.mxu0 0.0
    %3552 = vmatpush2.msra.mxu0 0.0
    %3553 = vmatprep.subr.mxu0 0.0
    %3554 = vmatpush2.msra.mxu0 0.0
    %3555 = vmatprep.subr.mxu0 0.0
    %3556 = vmatpush2.msra.mxu0 0.0
    %3557 = vmatprep.subr.mxu0 0.0
    %3558 = vmatpush2.msra.mxu0 0.0
    %3559 = vmatprep.subr.mxu0 0.0
    %3560 = vmatpush2.msra.mxu0 0.0
    %3561 = vmatprep.subr.mxu0 0.0
    %3562 = vmatpush2.msra.mxu0 0.0
    %3563 = vmatprep.subr.mxu0 0.0
    %3564 = vmatpush2.msra.mxu0 0.0
    %3565 = vmatprep.subr.mxu0 0.0
    %3566 = vmatpush2.msra.mxu0 0.0
    %3567 = vmatprep.subr.mxu0 0.0
    %3568 = vmatpush2.msra.mxu0 0.0
    %3569 = vmatprep.subr.mxu0 0.0
    %3570 = vmatpush2.msra.mxu0 0.0
    %3571 = vmatprep.subr.mxu0 0.0
    %3572 = vmatpush2.msra.mxu0 0.0
    %3573 = vmatprep.subr.mxu0 0.0
    %3574 = vmatpush2.msra.mxu0 0.0
    %3575 = vmatprep.mubr.f32.mxu0 0.0
    %v3576 = vand.u32 %v3233, 4294901760
    %v3577 = vsub.f32 %v3233, %v3576
    %v3578 = vand.u32 %v3577, 4294901760
    %3579 = vmatmul.mubr.f32.gmra.mxu0 %v3578
    %v3580 = vpop.f32.mrf.mxu0
    %v3581 = vadd.f32 %v3502, %v3580
    %v3582 = vpop.f32.mrf.mxu0
    %3583 = vdwg.mxu0
    %3584 = vmatprep.subr.mxu0 0.0
    %3585 = vmatpush1.msra.mxu0 0.0
    %3586 = vmatprep.subr.mxu0 0.0
    %3587 = vmatpush1.msra.mxu0 0.0
    %3588 = vmatprep.subr.mxu0 0.0
    %3589 = vmatpush1.msra.mxu0 0.0
    %3590 = vmatprep.subr.mxu0 0.0
    %3591 = vmatpush1.msra.mxu0 0.0
    %3592 = vmatprep.subr.mxu0 0.0
    %3593 = vmatpush1.msra.mxu0 0.0
    %3594 = vmatprep.subr.mxu0 0.0
    %3595 = vmatpush1.msra.mxu0 0.0
    %3596 = vmatprep.subr.mxu0 0.0
    %3597 = vmatpush1.msra.mxu0 0.0
    %3598 = vmatprep.subr.mxu0 0.0
    %3599 = vmatpush1.msra.mxu0 0.0
    %3600 = vmatprep.subr.mxu0 0.0
    %3601 = vmatpush1.msra.mxu0 0.0
    %3602 = vmatprep.subr.mxu0 0.0
    %3603 = vmatpush1.msra.mxu0 0.0
    %3604 = vmatprep.subr.mxu0 0.0
    %v3605 = vand.u32 %v3237, 4294901760
    %v3606 = vsub.f32 %v3237, %v3605
    %v3607 = vand.u32 %v3606, 4294901760
    %3608 = vmatpush1.msra.mxu0 %v3607
    %3609 = vmatprep.subr.mxu0 0.0
    %v3610 = vand.u32 %v3222, 4294901760
    %v3611 = vsub.f32 %v3222, %v3610
    %v3612 = vand.u32 %v3611, 4294901760
    %3613 = vmatpush1.msra.mxu0 %v3612
    %3614 = vmatprep.subr.mxu0 0.0
    %v3615 = vand.u32 %v3221, 4294901760
    %v3616 = vsub.f32 %v3221, %v3615
    %v3617 = vand.u32 %v3616, 4294901760
    %3618 = vmatpush1.msra.mxu0 %v3617
    %3619 = vmatprep.subr.mxu0 0.0
    %v3620 = vand.u32 %v3220, 4294901760
    %v3621 = vsub.f32 %v3220, %v3620
    %v3622 = vand.u32 %v3621, 4294901760
    %3623 = vmatpush1.msra.mxu0 %v3622
    %3624 = vmatprep.subr.mxu0 0.0
    %v3625 = vand.u32 %v3219, 4294901760
    %v3626 = vsub.f32 %v3219, %v3625
    %v3627 = vand.u32 %v3626, 4294901760
    %3628 = vmatpush1.msra.mxu0 %v3627
    %3629 = vmatprep.subr.mxu0 0.0
    %v3630 = vand.u32 %v3218, 4294901760
    %v3631 = vsub.f32 %v3218, %v3630
    %v3632 = vand.u32 %v3631, 4294901760
    %3633 = vmatpush1.msra.mxu0 %v3632
    %3634 = vmatprep.subr.mxu0 0.0
    %3635 = vmatpush2.msra.mxu0 0.0
    %3636 = vmatprep.subr.mxu0 0.0
    %3637 = vmatpush2.msra.mxu0 0.0
    %3638 = vmatprep.subr.mxu0 0.0
    %3639 = vmatpush2.msra.mxu0 0.0
    %3640 = vmatprep.subr.mxu0 0.0
    %3641 = vmatpush2.msra.mxu0 0.0
    %3642 = vmatprep.subr.mxu0 0.0
    %3643 = vmatpush2.msra.mxu0 0.0
    %3644 = vmatprep.subr.mxu0 0.0
    %3645 = vmatpush2.msra.mxu0 0.0
    %3646 = vmatprep.subr.mxu0 0.0
    %3647 = vmatpush2.msra.mxu0 0.0
    %3648 = vmatprep.subr.mxu0 0.0
    %3649 = vmatpush2.msra.mxu0 0.0
    %3650 = vmatprep.subr.mxu0 0.0
    %3651 = vmatpush2.msra.mxu0 0.0
    %3652 = vmatprep.subr.mxu0 0.0
    %3653 = vmatpush2.msra.mxu0 0.0
    %3654 = vmatprep.subr.mxu0 0.0
    %3655 = vmatpush2.msra.mxu0 0.0
    %3656 = vmatprep.subr.mxu0 0.0
    %3657 = vmatpush2.msra.mxu0 0.0
    %3658 = vmatprep.subr.mxu0 0.0
    %3659 = vmatpush2.msra.mxu0 0.0
    %3660 = vmatprep.subr.mxu0 0.0
    %3661 = vmatpush2.msra.mxu0 0.0
    %3662 = vmatprep.subr.mxu0 0.0
    %3663 = vmatpush2.msra.mxu0 0.0
    %3664 = vmatprep.subr.mxu0 0.0
    %3665 = vmatpush2.msra.mxu0 0.0
    %3666 = vmatprep.mubr.f32.mxu0 0.0
    %v3667 = vand.u32 %v3233, 4294901760
    %3668 = vmatmul.mubr.f32.gmra.mxu0 %v3667
    %v3669 = vpop.f32.mrf.mxu0
    %v3670 = vadd.f32 %v3581, %v3669
    %v3671 = vpop.f32.mrf.mxu0
    %3672 = vdwg.mxu0
    %3673 = vmatprep.subr.mxu0 0.0
    %3674 = vmatpush1.msra.mxu0 0.0
    %3675 = vmatprep.subr.mxu0 0.0
    %3676 = vmatpush1.msra.mxu0 0.0
    %3677 = vmatprep.subr.mxu0 0.0
    %3678 = vmatpush1.msra.mxu0 0.0
    %3679 = vmatprep.subr.mxu0 0.0
    %3680 = vmatpush1.msra.mxu0 0.0
    %3681 = vmatprep.subr.mxu0 0.0
    %3682 = vmatpush1.msra.mxu0 0.0
    %3683 = vmatprep.subr.mxu0 0.0
    %3684 = vmatpush1.msra.mxu0 0.0
    %3685 = vmatprep.subr.mxu0 0.0
    %3686 = vmatpush1.msra.mxu0 0.0
    %3687 = vmatprep.subr.mxu0 0.0
    %3688 = vmatpush1.msra.mxu0 0.0
    %3689 = vmatprep.subr.mxu0 0.0
    %3690 = vmatpush1.msra.mxu0 0.0
    %3691 = vmatprep.subr.mxu0 0.0
    %3692 = vmatpush1.msra.mxu0 0.0
    %3693 = vmatprep.subr.mxu0 0.0
    %v3694 = vand.u32 %v3237, 4294901760
    %3695 = vmatpush1.msra.mxu0 %v3694
    %3696 = vmatprep.subr.mxu0 0.0
    %v3697 = vand.u32 %v3222, 4294901760
    %3698 = vmatpush1.msra.mxu0 %v3697
    %3699 = vmatprep.subr.mxu0 0.0
    %v3700 = vand.u32 %v3221, 4294901760
    %3701 = vmatpush1.msra.mxu0 %v3700
    %3702 = vmatprep.subr.mxu0 0.0
    %v3703 = vand.u32 %v3220, 4294901760
    %3704 = vmatpush1.msra.mxu0 %v3703
    %3705 = vmatprep.subr.mxu0 0.0
    %v3706 = vand.u32 %v3219, 4294901760
    %3707 = vmatpush1.msra.mxu0 %v3706
    %3708 = vmatprep.subr.mxu0 0.0
    %v3709 = vand.u32 %v3218, 4294901760
    %3710 = vmatpush1.msra.mxu0 %v3709
    %3711 = vmatprep.subr.mxu0 0.0
    %3712 = vmatpush2.msra.mxu0 0.0
    %3713 = vmatprep.subr.mxu0 0.0
    %3714 = vmatpush2.msra.mxu0 0.0
    %3715 = vmatprep.subr.mxu0 0.0
    %3716 = vmatpush2.msra.mxu0 0.0
    %3717 = vmatprep.subr.mxu0 0.0
    %3718 = vmatpush2.msra.mxu0 0.0
    %3719 = vmatprep.subr.mxu0 0.0
    %3720 = vmatpush2.msra.mxu0 0.0
    %3721 = vmatprep.subr.mxu0 0.0
    %3722 = vmatpush2.msra.mxu0 0.0
    %3723 = vmatprep.subr.mxu0 0.0
    %3724 = vmatpush2.msra.mxu0 0.0
    %3725 = vmatprep.subr.mxu0 0.0
    %3726 = vmatpush2.msra.mxu0 0.0
    %3727 = vmatprep.subr.mxu0 0.0
    %3728 = vmatpush2.msra.mxu0 0.0
    %3729 = vmatprep.subr.mxu0 0.0
    %3730 = vmatpush2.msra.mxu0 0.0
    %3731 = vmatprep.subr.mxu0 0.0
    %3732 = vmatpush2.msra.mxu0 0.0
    %3733 = vmatprep.subr.mxu0 0.0
    %3734 = vmatpush2.msra.mxu0 0.0
    %3735 = vmatprep.subr.mxu0 0.0
    %3736 = vmatpush2.msra.mxu0 0.0
    %3737 = vmatprep.subr.mxu0 0.0
    %3738 = vmatpush2.msra.mxu0 0.0
    %3739 = vmatprep.subr.mxu0 0.0
    %3740 = vmatpush2.msra.mxu0 0.0
    %3741 = vmatprep.subr.mxu0 0.0
    %3742 = vmatpush2.msra.mxu0 0.0
    %3743 = vmatprep.mubr.f32.mxu0 0.0
    %v3744 = vand.u32 %v3233, 4294901760
    %3745 = vmatmul.mubr.f32.gmra.mxu0 %v3744
    %v3746 = vpop.f32.mrf.mxu0
    %v3747 = vadd.f32 %v3670, %v3746
    %v3748 = vpop.f32.mrf.mxu0
    %3749 = vdwg.mxu0
    %vm3750 = vcmp.gt.f32.partialorder %v3747, 0.0
    %v3751 = vmin.f32 %v3747, 0.0
    %v3752 = vmul.f32 %v3751, 1.442695
    %v3753 = vpow.pop %v3752
    %v3754 = vsub.f32 %v3753, 1.0
    %v3755 = vmul.f32 %v3754, 1.6732632
    %v3756 = vsel %vm3750, %v3747, %v3755
    %v3757 = vmul.f32 %v3756, 1.050701
    %v3758 = vld [vmem:[%s4] sm:$0xff]
    %v3759 = vld [vmem:[%s4 + $0x8] sm:$0xff]
    %v3760 = vld [vmem:[%s4 + $0x10] sm:$0x3f]
    %vm3761 = vcmask 179200
    %v3763 = vsel %vm3761, %v3757, 0
    %vm3765 = vcmask 1045504
    %v3767 = vsel %vm3765, %v3760, 0
    %3769 = vmatprep.subr.mxu0 0.0
    %3770 = vmatpush1.msra.mxu0 0.0
    %3771 = vmatprep.subr.mxu0 0.0
    %3772 = vmatpush1.msra.mxu0 0.0
    %3773 = vmatprep.subr.mxu0 0.0
    %3774 = vmatpush1.msra.mxu0 0.0
    %3775 = vmatprep.subr.mxu0 0.0
    %3776 = vmatpush1.msra.mxu0 0.0
    %3777 = vmatprep.subr.mxu0 0.0
    %3778 = vmatpush1.msra.mxu0 0.0
    %3779 = vmatprep.subr.mxu0 0.0
    %3780 = vmatpush1.msra.mxu0 0.0
    %3781 = vmatprep.subr.mxu0 0.0
    %3782 = vmatpush1.msra.mxu0 0.0
    %3783 = vmatprep.subr.mxu0 0.0
    %3784 = vmatpush1.msra.mxu0 0.0
    %3785 = vmatprep.subr.mxu0 0.0
    %3786 = vmatpush1.msra.mxu0 0.0
    %3787 = vmatprep.subr.mxu0 0.0
    %3788 = vmatpush1.msra.mxu0 0.0
    %3789 = vmatprep.subr.mxu0 0.0
    %3790 = vmatpush1.msra.mxu0 0.0
    %3791 = vmatprep.subr.mxu0 0.0
    %3792 = vmatpush1.msra.mxu0 0.0
    %3793 = vmatprep.subr.mxu0 0.0
    %3794 = vmatpush1.msra.mxu0 0.0
    %3795 = vmatprep.subr.mxu0 0.0
    %v3796 = vand.u32 %v3767, 4294901760
    %3797 = vmatpush1.msra.mxu0 %v3796
    %3798 = vmatprep.subr.mxu0 0.0
    %v3799 = vand.u32 %v3759, 4294901760
    %3800 = vmatpush1.msra.mxu0 %v3799
    %3801 = vmatprep.subr.mxu0 0.0
    %v3802 = vand.u32 %v3758, 4294901760
    %3803 = vmatpush1.msra.mxu0 %v3802
    %3804 = vmatprep.subr.mxu0 0.0
    %3805 = vmatpush2.msra.mxu0 0.0
    %3806 = vmatprep.subr.mxu0 0.0
    %3807 = vmatpush2.msra.mxu0 0.0
    %3808 = vmatprep.subr.mxu0 0.0
    %3809 = vmatpush2.msra.mxu0 0.0
    %3810 = vmatprep.subr.mxu0 0.0
    %3811 = vmatpush2.msra.mxu0 0.0
    %3812 = vmatprep.subr.mxu0 0.0
    %3813 = vmatpush2.msra.mxu0 0.0
    %3814 = vmatprep.subr.mxu0 0.0
    %3815 = vmatpush2.msra.mxu0 0.0
    %3816 = vmatprep.subr.mxu0 0.0
    %3817 = vmatpush2.msra.mxu0 0.0
    %3818 = vmatprep.subr.mxu0 0.0
    %3819 = vmatpush2.msra.mxu0 0.0
    %3820 = vmatprep.subr.mxu0 0.0
    %3821 = vmatpush2.msra.mxu0 0.0
    %3822 = vmatprep.subr.mxu0 0.0
    %3823 = vmatpush2.msra.mxu0 0.0
    %3824 = vmatprep.subr.mxu0 0.0
    %3825 = vmatpush2.msra.mxu0 0.0
    %3826 = vmatprep.subr.mxu0 0.0
    %3827 = vmatpush2.msra.mxu0 0.0
    %3828 = vmatprep.subr.mxu0 0.0
    %3829 = vmatpush2.msra.mxu0 0.0
    %3830 = vmatprep.subr.mxu0 0.0
    %3831 = vmatpush2.msra.mxu0 0.0
    %3832 = vmatprep.subr.mxu0 0.0
    %3833 = vmatpush2.msra.mxu0 0.0
    %3834 = vmatprep.subr.mxu0 0.0
    %3835 = vmatpush2.msra.mxu0 0.0
    %3836 = vmatprep.mubr.f32.mxu0 0.0
    %v3837 = vand.u32 %v3763, 4294901760
    %v3838 = vsub.f32 %v3763, %v3837
    %v3839 = vand.u32 %v3838, 4294901760
    %v3840 = vsub.f32 %v3838, %v3839
    %v3841 = vand.u32 %v3840, 4294901760
    %3842 = vmatmul.mubr.f32.gmra.mxu0 %v3841
    %v3843 = vpop.f32.mrf.mxu0
    %v3844 = vadd.f32 0.0, %v3843
    %v3845 = vpop.f32.mrf.mxu0
    %3846 = vdwg.mxu0
    %3847 = vmatprep.subr.mxu0 0.0
    %3848 = vmatpush1.msra.mxu0 0.0
    %3849 = vmatprep.subr.mxu0 0.0
    %3850 = vmatpush1.msra.mxu0 0.0
    %3851 = vmatprep.subr.mxu0 0.0
    %3852 = vmatpush1.msra.mxu0 0.0
    %3853 = vmatprep.subr.mxu0 0.0
    %3854 = vmatpush1.msra.mxu0 0.0
    %3855 = vmatprep.subr.mxu0 0.0
    %3856 = vmatpush1.msra.mxu0 0.0
    %3857 = vmatprep.subr.mxu0 0.0
    %3858 = vmatpush1.msra.mxu0 0.0
    %3859 = vmatprep.subr.mxu0 0.0
    %3860 = vmatpush1.msra.mxu0 0.0
    %3861 = vmatprep.subr.mxu0 0.0
    %3862 = vmatpush1.msra.mxu0 0.0
    %3863 = vmatprep.subr.mxu0 0.0
    %3864 = vmatpush1.msra.mxu0 0.0
    %3865 = vmatprep.subr.mxu0 0.0
    %3866 = vmatpush1.msra.mxu0 0.0
    %3867 = vmatprep.subr.mxu0 0.0
    %3868 = vmatpush1.msra.mxu0 0.0
    %3869 = vmatprep.subr.mxu0 0.0
    %3870 = vmatpush1.msra.mxu0 0.0
    %3871 = vmatprep.subr.mxu0 0.0
    %3872 = vmatpush1.msra.mxu0 0.0
    %3873 = vmatprep.subr.mxu0 0.0
    %v3874 = vand.u32 %v3767, 4294901760
    %v3875 = vsub.f32 %v3767, %v3874
    %v3876 = vand.u32 %v3875, 4294901760
    %v3877 = vsub.f32 %v3875, %v3876
    %v3878 = vand.u32 %v3877, 4294901760
    %3879 = vmatpush1.msra.mxu0 %v3878
    %3880 = vmatprep.subr.mxu0 0.0
    %v3881 = vand.u32 %v3759, 4294901760
    %v3882 = vsub.f32 %v3759, %v3881
    %v3883 = vand.u32 %v3882, 4294901760
    %v3884 = vsub.f32 %v3882, %v3883
    %v3885 = vand.u32 %v3884, 4294901760
    %3886 = vmatpush1.msra.mxu0 %v3885
    %3887 = vmatprep.subr.mxu0 0.0
    %v3888 = vand.u32 %v3758, 4294901760
    %v3889 = vsub.f32 %v3758, %v3888
    %v3890 = vand.u32 %v3889, 4294901760
    %v3891 = vsub.f32 %v3889, %v3890
    %v3892 = vand.u32 %v3891, 4294901760
    %3893 = vmatpush1.msra.mxu0 %v3892
    %3894 = vmatprep.subr.mxu0 0.0
    %3895 = vmatpush2.msra.mxu0 0.0
    %3896 = vmatprep.subr.mxu0 0.0
    %3897 = vmatpush2.msra.mxu0 0.0
    %3898 = vmatprep.subr.mxu0 0.0
    %3899 = vmatpush2.msra.mxu0 0.0
    %3900 = vmatprep.subr.mxu0 0.0
    %3901 = vmatpush2.msra.mxu0 0.0
    %3902 = vmatprep.subr.mxu0 0.0
    %3903 = vmatpush2.msra.mxu0 0.0
    %3904 = vmatprep.subr.mxu0 0.0
    %3905 = vmatpush2.msra.mxu0 0.0
    %3906 = vmatprep.subr.mxu0 0.0
    %3907 = vmatpush2.msra.mxu0 0.0
    %3908 = vmatprep.subr.mxu0 0.0
    %3909 = vmatpush2.msra.mxu0 0.0
    %3910 = vmatprep.subr.mxu0 0.0
    %3911 = vmatpush2.msra.mxu0 0.0
    %3912 = vmatprep.subr.mxu0 0.0
    %3913 = vmatpush2.msra.mxu0 0.0
    %3914 = vmatprep.subr.mxu0 0.0
    %3915 = vmatpush2.msra.mxu0 0.0
    %3916 = vmatprep.subr.mxu0 0.0
    %3917 = vmatpush2.msra.mxu0 0.0
    %3918 = vmatprep.subr.mxu0 0.0
    %3919 = vmatpush2.msra.mxu0 0.0
    %3920 = vmatprep.subr.mxu0 0.0
    %3921 = vmatpush2.msra.mxu0 0.0
    %3922 = vmatprep.subr.mxu0 0.0
    %3923 = vmatpush2.msra.mxu0 0.0
    %3924 = vmatprep.subr.mxu0 0.0
    %3925 = vmatpush2.msra.mxu0 0.0
    %3926 = vmatprep.mubr.f32.mxu0 0.0
    %v3927 = vand.u32 %v3763, 4294901760
    %3928 = vmatmul.mubr.f32.gmra.mxu0 %v3927
    %v3929 = vpop.f32.mrf.mxu0
    %v3930 = vadd.f32 %v3844, %v3929
    %v3931 = vpop.f32.mrf.mxu0
    %3932 = vdwg.mxu0
    %3933 = vmatprep.subr.mxu0 0.0
    %3934 = vmatpush1.msra.mxu0 0.0
    %3935 = vmatprep.subr.mxu0 0.0
    %3936 = vmatpush1.msra.mxu0 0.0
    %3937 = vmatprep.subr.mxu0 0.0
    %3938 = vmatpush1.msra.mxu0 0.0
    %3939 = vmatprep.subr.mxu0 0.0
    %3940 = vmatpush1.msra.mxu0 0.0
    %3941 = vmatprep.subr.mxu0 0.0
    %3942 = vmatpush1.msra.mxu0 0.0
    %3943 = vmatprep.subr.mxu0 0.0
    %3944 = vmatpush1.msra.mxu0 0.0
    %3945 = vmatprep.subr.mxu0 0.0
    %3946 = vmatpush1.msra.mxu0 0.0
    %3947 = vmatprep.subr.mxu0 0.0
    %3948 = vmatpush1.msra.mxu0 0.0
    %3949 = vmatprep.subr.mxu0 0.0
    %3950 = vmatpush1.msra.mxu0 0.0
    %3951 = vmatprep.subr.mxu0 0.0
    %3952 = vmatpush1.msra.mxu0 0.0
    %3953 = vmatprep.subr.mxu0 0.0
    %3954 = vmatpush1.msra.mxu0 0.0
    %3955 = vmatprep.subr.mxu0 0.0
    %3956 = vmatpush1.msra.mxu0 0.0
    %3957 = vmatprep.subr.mxu0 0.0
    %3958 = vmatpush1.msra.mxu0 0.0
    %3959 = vmatprep.subr.mxu0 0.0
    %v3960 = vand.u32 %v3767, 4294901760
    %v3961 = vsub.f32 %v3767, %v3960
    %3962 = vmatpush1.msra.mxu0 %v3961
    %3963 = vmatprep.subr.mxu0 0.0
    %v3964 = vand.u32 %v3759, 4294901760
    %v3965 = vsub.f32 %v3759, %v3964
    %3966 = vmatpush1.msra.mxu0 %v3965
    %3967 = vmatprep.subr.mxu0 0.0
    %v3968 = vand.u32 %v3758, 4294901760
    %v3969 = vsub.f32 %v3758, %v3968
    %3970 = vmatpush1.msra.mxu0 %v3969
    %3971 = vmatprep.subr.mxu0 0.0
    %3972 = vmatpush2.msra.mxu0 0.0
    %3973 = vmatprep.subr.mxu0 0.0
    %3974 = vmatpush2.msra.mxu0 0.0
    %3975 = vmatprep.subr.mxu0 0.0
    %3976 = vmatpush2.msra.mxu0 0.0
    %3977 = vmatprep.subr.mxu0 0.0
    %3978 = vmatpush2.msra.mxu0 0.0
    %3979 = vmatprep.subr.mxu0 0.0
    %3980 = vmatpush2.msra.mxu0 0.0
    %3981 = vmatprep.subr.mxu0 0.0
    %3982 = vmatpush2.msra.mxu0 0.0
    %3983 = vmatprep.subr.mxu0 0.0
    %3984 = vmatpush2.msra.mxu0 0.0
    %3985 = vmatprep.subr.mxu0 0.0
    %3986 = vmatpush2.msra.mxu0 0.0
    %3987 = vmatprep.subr.mxu0 0.0
    %3988 = vmatpush2.msra.mxu0 0.0
    %3989 = vmatprep.subr.mxu0 0.0
    %3990 = vmatpush2.msra.mxu0 0.0
    %3991 = vmatprep.subr.mxu0 0.0
    %3992 = vmatpush2.msra.mxu0 0.0
    %3993 = vmatprep.subr.mxu0 0.0
    %3994 = vmatpush2.msra.mxu0 0.0
    %3995 = vmatprep.subr.mxu0 0.0
    %3996 = vmatpush2.msra.mxu0 0.0
    %3997 = vmatprep.subr.mxu0 0.0
    %3998 = vmatpush2.msra.mxu0 0.0
    %3999 = vmatprep.subr.mxu0 0.0
    %4000 = vmatpush2.msra.mxu0 0.0
    %4001 = vmatprep.subr.mxu0 0.0
    %4002 = vmatpush2.msra.mxu0 0.0
    %4003 = vmatprep.mubr.f32.mxu0 0.0
    %v4004 = vand.u32 %v3763, 4294901760
    %v4005 = vsub.f32 %v3763, %v4004
    %4006 = vmatmul.mubr.f32.gmra.mxu0 %v4005
    %v4007 = vpop.f32.mrf.mxu0
    %v4008 = vadd.f32 %v3930, %v4007
    %v4009 = vpop.f32.mrf.mxu0
    %4010 = vdwg.mxu0
    %4011 = vmatprep.subr.mxu0 0.0
    %4012 = vmatpush1.msra.mxu0 0.0
    %4013 = vmatprep.subr.mxu0 0.0
    %4014 = vmatpush1.msra.mxu0 0.0
    %4015 = vmatprep.subr.mxu0 0.0
    %4016 = vmatpush1.msra.mxu0 0.0
    %4017 = vmatprep.subr.mxu0 0.0
    %4018 = vmatpush1.msra.mxu0 0.0
    %4019 = vmatprep.subr.mxu0 0.0
    %4020 = vmatpush1.msra.mxu0 0.0
    %4021 = vmatprep.subr.mxu0 0.0
    %4022 = vmatpush1.msra.mxu0 0.0
    %4023 = vmatprep.subr.mxu0 0.0
    %4024 = vmatpush1.msra.mxu0 0.0
    %4025 = vmatprep.subr.mxu0 0.0
    %4026 = vmatpush1.msra.mxu0 0.0
    %4027 = vmatprep.subr.mxu0 0.0
    %4028 = vmatpush1.msra.mxu0 0.0
    %4029 = vmatprep.subr.mxu0 0.0
    %4030 = vmatpush1.msra.mxu0 0.0
    %4031 = vmatprep.subr.mxu0 0.0
    %4032 = vmatpush1.msra.mxu0 0.0
    %4033 = vmatprep.subr.mxu0 0.0
    %4034 = vmatpush1.msra.mxu0 0.0
    %4035 = vmatprep.subr.mxu0 0.0
    %4036 = vmatpush1.msra.mxu0 0.0
    %4037 = vmatprep.subr.mxu0 0.0
    %v4038 = vand.u32 %v3767, 4294901760
    %4039 = vmatpush1.msra.mxu0 %v4038
    %4040 = vmatprep.subr.mxu0 0.0
    %v4041 = vand.u32 %v3759, 4294901760
    %4042 = vmatpush1.msra.mxu0 %v4041
    %4043 = vmatprep.subr.mxu0 0.0
    %v4044 = vand.u32 %v3758, 4294901760
    %4045 = vmatpush1.msra.mxu0 %v4044
    %4046 = vmatprep.subr.mxu0 0.0
    %4047 = vmatpush2.msra.mxu0 0.0
    %4048 = vmatprep.subr.mxu0 0.0
    %4049 = vmatpush2.msra.mxu0 0.0
    %4050 = vmatprep.subr.mxu0 0.0
    %4051 = vmatpush2.msra.mxu0 0.0
    %4052 = vmatprep.subr.mxu0 0.0
    %4053 = vmatpush2.msra.mxu0 0.0
    %4054 = vmatprep.subr.mxu0 0.0
    %4055 = vmatpush2.msra.mxu0 0.0
    %4056 = vmatprep.subr.mxu0 0.0
    %4057 = vmatpush2.msra.mxu0 0.0
    %4058 = vmatprep.subr.mxu0 0.0
    %4059 = vmatpush2.msra.mxu0 0.0
    %4060 = vmatprep.subr.mxu0 0.0
    %4061 = vmatpush2.msra.mxu0 0.0
    %4062 = vmatprep.subr.mxu0 0.0
    %4063 = vmatpush2.msra.mxu0 0.0
    %4064 = vmatprep.subr.mxu0 0.0
    %4065 = vmatpush2.msra.mxu0 0.0
    %4066 = vmatprep.subr.mxu0 0.0
    %4067 = vmatpush2.msra.mxu0 0.0
    %4068 = vmatprep.subr.mxu0 0.0
    %4069 = vmatpush2.msra.mxu0 0.0
    %4070 = vmatprep.subr.mxu0 0.0
    %4071 = vmatpush2.msra.mxu0 0.0
    %4072 = vmatprep.subr.mxu0 0.0
    %4073 = vmatpush2.msra.mxu0 0.0
    %4074 = vmatprep.subr.mxu0 0.0
    %4075 = vmatpush2.msra.mxu0 0.0
    %4076 = vmatprep.subr.mxu0 0.0
    %4077 = vmatpush2.msra.mxu0 0.0
    %4078 = vmatprep.mubr.f32.mxu0 0.0
    %v4079 = vand.u32 %v3763, 4294901760
    %v4080 = vsub.f32 %v3763, %v4079
    %v4081 = vand.u32 %v4080, 4294901760
    %4082 = vmatmul.mubr.f32.gmra.mxu0 %v4081
    %v4083 = vpop.f32.mrf.mxu0
    %v4084 = vadd.f32 %v4008, %v4083
    %v4085 = vpop.f32.mrf.mxu0
    %4086 = vdwg.mxu0
    %4087 = vmatprep.subr.mxu0 0.0
    %4088 = vmatpush1.msra.mxu0 0.0
    %4089 = vmatprep.subr.mxu0 0.0
    %4090 = vmatpush1.msra.mxu0 0.0
    %4091 = vmatprep.subr.mxu0 0.0
    %4092 = vmatpush1.msra.mxu0 0.0
    %4093 = vmatprep.subr.mxu0 0.0
    %4094 = vmatpush1.msra.mxu0 0.0
    %4095 = vmatprep.subr.mxu0 0.0
    %4096 = vmatpush1.msra.mxu0 0.0
    %4097 = vmatprep.subr.mxu0 0.0
    %4098 = vmatpush1.msra.mxu0 0.0
    %4099 = vmatprep.subr.mxu0 0.0
    %4100 = vmatpush1.msra.mxu0 0.0
    %4101 = vmatprep.subr.mxu0 0.0
    %4102 = vmatpush1.msra.mxu0 0.0
    %4103 = vmatprep.subr.mxu0 0.0
    %4104 = vmatpush1.msra.mxu0 0.0
    %4105 = vmatprep.subr.mxu0 0.0
    %4106 = vmatpush1.msra.mxu0 0.0
    %4107 = vmatprep.subr.mxu0 0.0
    %4108 = vmatpush1.msra.mxu0 0.0
    %4109 = vmatprep.subr.mxu0 0.0
    %4110 = vmatpush1.msra.mxu0 0.0
    %4111 = vmatprep.subr.mxu0 0.0
    %4112 = vmatpush1.msra.mxu0 0.0
    %4113 = vmatprep.subr.mxu0 0.0
    %v4114 = vand.u32 %v3767, 4294901760
    %v4115 = vsub.f32 %v3767, %v4114
    %v4116 = vand.u32 %v4115, 4294901760
    %4117 = vmatpush1.msra.mxu0 %v4116
    %4118 = vmatprep.subr.mxu0 0.0
    %v4119 = vand.u32 %v3759, 4294901760
    %v4120 = vsub.f32 %v3759, %v4119
    %v4121 = vand.u32 %v4120, 4294901760
    %4122 = vmatpush1.msra.mxu0 %v4121
    %4123 = vmatprep.subr.mxu0 0.0
    %v4124 = vand.u32 %v3758, 4294901760
    %v4125 = vsub.f32 %v3758, %v4124
    %v4126 = vand.u32 %v4125, 4294901760
    %4127 = vmatpush1.msra.mxu0 %v4126
    %4128 = vmatprep.subr.mxu0 0.0
    %4129 = vmatpush2.msra.mxu0 0.0
    %4130 = vmatprep.subr.mxu0 0.0
    %4131 = vmatpush2.msra.mxu0 0.0
    %4132 = vmatprep.subr.mxu0 0.0
    %4133 = vmatpush2.msra.mxu0 0.0
    %4134 = vmatprep.subr.mxu0 0.0
    %4135 = vmatpush2.msra.mxu0 0.0
    %4136 = vmatprep.subr.mxu0 0.0
    %4137 = vmatpush2.msra.mxu0 0.0
    %4138 = vmatprep.subr.mxu0 0.0
    %4139 = vmatpush2.msra.mxu0 0.0
    %4140 = vmatprep.subr.mxu0 0.0
    %4141 = vmatpush2.msra.mxu0 0.0
    %4142 = vmatprep.subr.mxu0 0.0
    %4143 = vmatpush2.msra.mxu0 0.0
    %4144 = vmatprep.subr.mxu0 0.0
    %4145 = vmatpush2.msra.mxu0 0.0
    %4146 = vmatprep.subr.mxu0 0.0
    %4147 = vmatpush2.msra.mxu0 0.0
    %4148 = vmatprep.subr.mxu0 0.0
    %4149 = vmatpush2.msra.mxu0 0.0
    %4150 = vmatprep.subr.mxu0 0.0
    %4151 = vmatpush2.msra.mxu0 0.0
    %4152 = vmatprep.subr.mxu0 0.0
    %4153 = vmatpush2.msra.mxu0 0.0
    %4154 = vmatprep.subr.mxu0 0.0
    %4155 = vmatpush2.msra.mxu0 0.0
    %4156 = vmatprep.subr.mxu0 0.0
    %4157 = vmatpush2.msra.mxu0 0.0
    %4158 = vmatprep.subr.mxu0 0.0
    %4159 = vmatpush2.msra.mxu0 0.0
    %4160 = vmatprep.mubr.f32.mxu0 0.0
    %v4161 = vand.u32 %v3763, 4294901760
    %4162 = vmatmul.mubr.f32.gmra.mxu0 %v4161
    %v4163 = vpop.f32.mrf.mxu0
    %v4164 = vadd.f32 %v4084, %v4163
    %v4165 = vpop.f32.mrf.mxu0
    %4166 = vdwg.mxu0
    %4167 = vmatprep.subr.mxu0 0.0
    %4168 = vmatpush1.msra.mxu0 0.0
    %4169 = vmatprep.subr.mxu0 0.0
    %4170 = vmatpush1.msra.mxu0 0.0
    %4171 = vmatprep.subr.mxu0 0.0
    %4172 = vmatpush1.msra.mxu0 0.0
    %4173 = vmatprep.subr.mxu0 0.0
    %4174 = vmatpush1.msra.mxu0 0.0
    %4175 = vmatprep.subr.mxu0 0.0
    %4176 = vmatpush1.msra.mxu0 0.0
    %4177 = vmatprep.subr.mxu0 0.0
    %4178 = vmatpush1.msra.mxu0 0.0
    %4179 = vmatprep.subr.mxu0 0.0
    %4180 = vmatpush1.msra.mxu0 0.0
    %4181 = vmatprep.subr.mxu0 0.0
    %4182 = vmatpush1.msra.mxu0 0.0
    %4183 = vmatprep.subr.mxu0 0.0
    %4184 = vmatpush1.msra.mxu0 0.0
    %4185 = vmatprep.subr.mxu0 0.0
    %4186 = vmatpush1.msra.mxu0 0.0
    %4187 = vmatprep.subr.mxu0 0.0
    %4188 = vmatpush1.msra.mxu0 0.0
    %4189 = vmatprep.subr.mxu0 0.0
    %4190 = vmatpush1.msra.mxu0 0.0
    %4191 = vmatprep.subr.mxu0 0.0
    %4192 = vmatpush1.msra.mxu0 0.0
    %4193 = vmatprep.subr.mxu0 0.0
    %v4194 = vand.u32 %v3767, 4294901760
    %4195 = vmatpush1.msra.mxu0 %v4194
    %4196 = vmatprep.subr.mxu0 0.0
    %v4197 = vand.u32 %v3759, 4294901760
    %4198 = vmatpush1.msra.mxu0 %v4197
    %4199 = vmatprep.subr.mxu0 0.0
    %v4200 = vand.u32 %v3758, 4294901760
    %4201 = vmatpush1.msra.mxu0 %v4200
    %4202 = vmatprep.subr.mxu0 0.0
    %4203 = vmatpush2.msra.mxu0 0.0
    %4204 = vmatprep.subr.mxu0 0.0
    %4205 = vmatpush2.msra.mxu0 0.0
    %4206 = vmatprep.subr.mxu0 0.0
    %4207 = vmatpush2.msra.mxu0 0.0
    %4208 = vmatprep.subr.mxu0 0.0
    %4209 = vmatpush2.msra.mxu0 0.0
    %4210 = vmatprep.subr.mxu0 0.0
    %4211 = vmatpush2.msra.mxu0 0.0
    %4212 = vmatprep.subr.mxu0 0.0
    %4213 = vmatpush2.msra.mxu0 0.0
    %4214 = vmatprep.subr.mxu0 0.0
    %4215 = vmatpush2.msra.mxu0 0.0
    %4216 = vmatprep.subr.mxu0 0.0
    %4217 = vmatpush2.msra.mxu0 0.0
    %4218 = vmatprep.subr.mxu0 0.0
    %4219 = vmatpush2.msra.mxu0 0.0
    %4220 = vmatprep.subr.mxu0 0.0
    %4221 = vmatpush2.msra.mxu0 0.0
    %4222 = vmatprep.subr.mxu0 0.0
    %4223 = vmatpush2.msra.mxu0 0.0
    %4224 = vmatprep.subr.mxu0 0.0
    %4225 = vmatpush2.msra.mxu0 0.0
    %4226 = vmatprep.subr.mxu0 0.0
    %4227 = vmatpush2.msra.mxu0 0.0
    %4228 = vmatprep.subr.mxu0 0.0
    %4229 = vmatpush2.msra.mxu0 0.0
    %4230 = vmatprep.subr.mxu0 0.0
    %4231 = vmatpush2.msra.mxu0 0.0
    %4232 = vmatprep.subr.mxu0 0.0
    %4233 = vmatpush2.msra.mxu0 0.0
    %4234 = vmatprep.mubr.f32.mxu0 0.0
    %v4235 = vand.u32 %v3763, 4294901760
    %4236 = vmatmul.mubr.f32.gmra.mxu0 %v4235
    %v4237 = vpop.f32.mrf.mxu0
    %v4238 = vadd.f32 %v4164, %v4237
    %v4239 = vpop.f32.mrf.mxu0
    %4240 = vdwg.mxu0
    %vm4241 = vcmask 74752
    %v4242 = vsel %vm4241, %v4238, -inf
    %4243 = vmax.xlane.f32.xlu0 %v4242
    %v4244 = vpop.xlane.xlu0 %4243
    %v4245 = vsub.f32 %v4238, %v4244
    %v4246 = vmul.f32 %v4245, 1.442695
    %v4247 = vpow.pop %v4246
    %v4248 = vsel %vm4241, %v4247, 0.0
    %4249 = vadd.xlane.f32.xlu0 %v4248
    %v4250 = vpop.xlane.xlu0 %4249
    %v4251 = vlog2.pop %v4250
    %v4252 = vmul.f32 %v4251, 0.6931472
    %v4253 = vsub.f32 %v4245, %v4252
    %4254 = vst.msk [vmem:[#allocation2] sm:$0x3] %vm4241, %v4253
    // Predicated region
    $region22: #{conv1dthenlinear_56_forward.1} parent=1 // pred_check
      _
    $region23: #{conv1dthenlinear_56_forward.1} parent=1 // pred_check_branch
      %4256 = sbr.rel (0) target = $region25
    $region24: #{conv1dthenlinear_56_forward.1} parent=1 // pred_region
      %s4258 = ssub.s32 32, 32
      %4259 = vsyncadd [#allocation3], %s4258
      %s4261 = sshll.u32 [#allocation2], 4
      %s4262 = int_to_ptr.vmem [resolvable:$true] %s4261
      %4264 = dma.vmem_to_hbm [thread:$0]  %s4262, 32, %s5, [#allocation3]
    $region25: #{conv1dthenlinear_56_forward.1} parent=1 // pred_fallthru
      _
    // Predicated region
    $region26: #{conv1dthenlinear_56_forward.1} parent=1 // pred_check
      _
    $region27: #{conv1dthenlinear_56_forward.1} parent=1 // pred_check_branch
      %4266 = sbr.rel (0) target = $region29
    $region28: #{conv1dthenlinear_56_forward.1} parent=1 // pred_region
      %4267 = dma.done [#allocation3], 32
    $region29: #{conv1dthenlinear_56_forward.1} parent=1 // pred_fallthru
      _
    %4268 = vsyncpa [#allocation3], 1

</llo_original>
